<compile_context>
chip_gen: v7x
topology: tpu7x:2x2x1
jax: 0.10.0
libtpu: 0.0.40
codegen_flags: <defaults>
</compile_context>

<pallas_src>
import functools

import jax
import jax.numpy as jnp
from jax import lax
from jax.experimental import pallas as pl
from jax.experimental.pallas import tpu as pltpu


def _round_up(n, m):
  return (n + m - 1) // m * m


def _make_rollout_kernel(n_steps):
  """n_steps of semi-implicit Euler; state carried in registers."""
  unroll = n_steps <= 8

  def kernel(dt_ref, x0_ref, v0_ref, a_ref, fg_ref,
             neg_k_ref, neg_c_ref, b_ref, minv_ref,
             x_out_ref, v_out_ref):
    dt = dt_ref[0]                                # scalar from SMEM
    pdt = neg_k_ref.dtype                         # parameter dtype
    neg_k = neg_k_ref[...]                        # (Dp, Dp)
    neg_c = neg_c_ref[...]                        # (Dp, Dp)

    # ---- step-invariant terms, hoisted out of the loop -------------------
    # dt * M^{-1}, broadcast once over the batch (JAX does not CSE
    # broadcast_in_dim, so do it outside the loop).
    dt_minv = jnp.broadcast_to(dt * minv_ref[...], fg_ref.shape)  # (Bp, Dp)
    # Actuation force B^T a is constant across steps -> fold into the
    # constant velocity kick together with f_ext + g.
    f_act = jnp.dot(a_ref[...].astype(pdt), b_ref[...],
                    preferred_element_type=jnp.float32)           # (Bp, Dp)
    cv = dt_minv * (fg_ref[...] + f_act)                          # (Bp, Dp)

    # ---- time-stepping loop (state lives in vregs) -----------------------
    def step(_, carry):
      x, v = carry
      f = (jnp.dot(x.astype(pdt), neg_k, preferred_element_type=jnp.float32)
           + jnp.dot(v.astype(pdt), neg_c, preferred_element_type=jnp.float32))
      v_next = v + dt_minv * f + cv
      x_next = x + dt * v_next
      return x_next, v_next

    x_fin, v_fin = lax.fori_loop(0, n_steps, step,
                                 (x0_ref[...], v0_ref[...]),
                                 unroll=unroll)

    x_out_ref[...] = x_fin.astype(x_out_ref.dtype)
    v_out_ref[...] = v_fin.astype(v_out_ref.dtype)

  return kernel


@functools.partial(jax.jit, static_argnames=("n_steps", "param_dtype"))
def pysim_mpmcloth_forward(x, v, a, f_ext, K, C, B_act, minv, g, dt=0.01, *,
                           n_steps=1, param_dtype=jnp.float32):
  """n_steps of cloth simulation (n_steps=1 == module forward).

  x, v, f_ext: (B, D) or (D,);  a: (B, A) or (A,)
  K, C: (D, D);  B_act: (A, D);  minv, g: (D,) or (1, D)
  Returns (x_next, v_next) with the same leading shape as x.
  """
  f32 = jnp.float32
  squeeze = (x.ndim == 1)
  if squeeze:
    x, v, a, f_ext = (u[None, :] for u in (x, v, a, f_ext))

  Bn, D = x.shape
  A = a.shape[-1]
  Dp = _round_up(D, 128)        # lane-dense padding
  Ap = _round_up(A, 128)
  Bp = _round_up(Bn, 8)         # sublane-aligned batch (MXU rows)

  def pad2(u, rows, cols):
    u = u.astype(f32)
    return jnp.pad(u, ((0, rows - u.shape[0]), (0, cols - u.shape[1])))

  g_row = jnp.reshape(g, (1, -1)).astype(f32)
  minv_row = jnp.reshape(minv, (1, -1)).astype(f32)

  xp = pad2(x, Bp, Dp)
  vp = pad2(v, Bp, Dp)
  ap = pad2(a, Bp, Ap)
  fgp = pad2(f_ext.astype(f32) + g_row, Bp, Dp)       # f_ext + g
  minvp = pad2(minv_row, 1, Dp)

  neg_k = pad2(-K, Dp, Dp).astype(param_dtype)
  neg_c = pad2(-C, Dp, Dp).astype(param_dtype)
  b_mat = pad2(B_act, Ap, Dp).astype(param_dtype)

  dt_arr = jnp.full((1,), dt, f32)                    # single dt source

  # VMEM budget = actual footprint + headroom (no grid -> single-buffered).
  itemsize = jnp.dtype(param_dtype).itemsize
  w_bytes = (2 * Dp * Dp + Ap * Dp) * itemsize
  vec_bytes = (7 * Bp * Dp + Bp * Ap + 2 * Dp) * 4
  vmem_limit = int(1.5 * (w_bytes + vec_bytes)) + (4 << 20)
  vmem_limit = max(16 << 20, min(vmem_limit, 100 << 20))

  def vspec():
    return pl.BlockSpec(memory_space=pltpu.MemorySpace.VMEM)

  x_out, v_out = pl.pallas_call(
      _make_rollout_kernel(n_steps),
      out_shape=(jax.ShapeDtypeStruct((Bp, Dp), f32),
                 jax.ShapeDtypeStruct((Bp, Dp), f32)),
      in_specs=[pl.BlockSpec(memory_space=pltpu.MemorySpace.SMEM),  # dt
                vspec(),  # x0
                vspec(),  # v0
                vspec(),  # a
                vspec(),  # f_ext + g
                vspec(),  # -K
                vspec(),  # -C
                vspec(),  # B
                vspec()],  # minv
      out_specs=(vspec(), vspec()),
      compiler_params=pltpu.CompilerParams(vmem_limit_bytes=vmem_limit),
  )(dt_arr, xp, vp, ap, fgp, neg_k, neg_c, b_mat, minvp)

  x_out = x_out[:Bn, :D].astype(x.dtype)
  v_out = v_out[:Bn, :D].astype(v.dtype)
  if squeeze:
    x_out, v_out = x_out[0], v_out[0]
  return x_out, v_out


def _reference_rollout(x, v, a, f_ext, K, C, B_act, minv, g, dt, n_steps,
                       param_dtype=jnp.float32):
  """Pure-JAX reference with the same parameter/state quantization."""
  f32 = jnp.float32
  hp = lax.Precision.HIGHEST
  neg_k = (-K).astype(param_dtype).astype(f32)
  neg_c = (-C).astype(param_dtype).astype(f32)
  b_mat = B_act.astype(param_dtype).astype(f32)
  minv = jnp.reshape(minv, (1, -1)).astype(f32)
  g = jnp.reshape(g, (1, -1)).astype(f32)
  dt_minv = dt * minv
  f_act = jnp.dot(a.astype(param_dtype).astype(f32), b_mat, precision=hp)
  cv = dt_minv * (f_ext.astype(f32) + g + f_act)
  x = x.astype(f32)
  v = v.astype(f32)
  for _ in range(n_steps):
    xs = x.astype(param_dtype).astype(f32)
    vs = v.astype(param_dtype).astype(f32)
    f = jnp.dot(xs, neg_k, precision=hp) + jnp.dot(vs, neg_c, precision=hp)
    v = v + dt_minv * f + cv
    x = x + dt * v
  return x, v


if __name__ == "__main__":
  # Small deterministic problem: 128 cloth particles (D = 384 DOFs),
  # 64-dim action, batch of 8 independent rollouts.
  n_particles = 128
  D = 3 * n_particles
  A = 64
  Bn = 8
  dt = 0.01

  key = jax.random.PRNGKey(0)
  kx, kv, ka, kf, kK, kC, kB = jax.random.split(key, 7)

  x = jax.random.normal(kx, (Bn, D), jnp.float32)
  v = 0.1 * jax.random.normal(kv, (Bn, D), jnp.float32)
  a = 0.1 * jax.random.normal(ka, (Bn, A), jnp.float32)
  f_ext = 0.01 * jax.random.normal(kf, (Bn, D), jnp.float32)

  # Deterministic synthetic parameters (no checkpoint load):
  Kr = jax.random.normal(kK, (D, D), jnp.float32) / D
  K = 0.5 * (Kr + Kr.T) + jnp.eye(D, dtype=jnp.float32)             # stiffness
  Cr = jax.random.normal(kC, (D, D), jnp.float32) / D
  C = 0.05 * 0.5 * (Cr + Cr.T) + 0.1 * jnp.eye(D, dtype=jnp.float32)  # damping
  B_act = jax.random.normal(kB, (A, D), jnp.float32) / A             # actuation
  minv = jnp.ones((D,), jnp.float32)                                  # unit mass
  g = jnp.tile(jnp.array([0.0, 0.0, -9.8], jnp.float32), n_particles)

  # --- single step: matches the module's forward(x, v, a, f_ext) ----------
  x1, v1 = pysim_mpmcloth_forward(x, v, a, f_ext, K, C, B_act, minv, g, dt,
                                  n_steps=1)
  jax.block_until_ready((x1, v1))
  x1_ref, v1_ref = _reference_rollout(x, v, a, f_ext, K, C, B_act, minv, g,
                                      dt, 1)
  assert x1.shape == x.shape and v1.shape == v.shape
  assert jnp.allclose(x1, x1_ref, atol=1e-3, rtol=1e-3)
  assert jnp.allclose(v1, v1_ref, atol=1e-3, rtol=1e-3)

  # --- unbatched (module-style flat DOF vectors) ---------------------------
  x1s, v1s = pysim_mpmcloth_forward(x[0], v[0], a[0], f_ext[0], K, C, B_act,
                                    minv, g, dt, n_steps=1)
  jax.block_until_ready((x1s, v1s))
  assert x1s.shape == (D,)
  assert jnp.allclose(x1s, x1[0], atol=1e-4, rtol=1e-4)
  assert jnp.allclose(v1s, v1[0], atol=1e-4, rtol=1e-4)

  # --- multi-step rollout: loop lives inside the kernel --------------------
  n_steps = 12
  xN, vN = pysim_mpmcloth_forward(x, v, a, f_ext, K, C, B_act, minv, g, dt,
                                  n_steps=n_steps)
  jax.block_until_ready((xN, vN))
  xN_ref, vN_ref = _reference_rollout(x, v, a, f_ext, K, C, B_act, minv, g,
                                      dt, n_steps)
  assert jnp.allclose(xN, xN_ref, atol=5e-3, rtol=5e-3)
  assert jnp.allclose(vN, vN_ref, atol=5e-3, rtol=5e-3)

  print("KERNEL_OK")
</pallas_src>

<mosaic_0001>
module attributes {stable_mosaic.version = 11 : i64} {
  func.func @kernel(%arg0: memref<1xf32, #tpu.memory_space<smem>>, %arg1: memref<8x384xf32, #tpu.memory_space<vmem>>, %arg2: memref<8x384xf32, #tpu.memory_space<vmem>>, %arg3: memref<8x128xf32, #tpu.memory_space<vmem>>, %arg4: memref<8x384xf32, #tpu.memory_space<vmem>>, %arg5: memref<384x384xf32, #tpu.memory_space<vmem>>, %arg6: memref<384x384xf32, #tpu.memory_space<vmem>>, %arg7: memref<128x384xf32, #tpu.memory_space<vmem>>, %arg8: memref<1x384xf32, #tpu.memory_space<vmem>>, %arg9: memref<8x384xf32, #tpu.memory_space<vmem>>, %arg10: memref<8x384xf32, #tpu.memory_space<vmem>>) attributes {dimension_semantics = [], scalar_prefetch = 0 : i64, scratch_operands = 0 : i64, tpu.core_type = #tpu.core_type<tc>} {
    %c0 = arith.constant 0 : index
    %0 = memref.load %arg0[%c0] : memref<1xf32, #tpu.memory_space<smem>>
    %c0_0 = arith.constant 0 : index
    %c0_1 = arith.constant 0 : index
    %1 = vector.load %arg5[%c0_0, %c0_1] : memref<384x384xf32, #tpu.memory_space<vmem>>, vector<384x384xf32>
    %c0_2 = arith.constant 0 : index
    %c0_3 = arith.constant 0 : index
    %2 = vector.load %arg6[%c0_2, %c0_3] : memref<384x384xf32, #tpu.memory_space<vmem>>, vector<384x384xf32>
    %c0_4 = arith.constant 0 : index
    %c0_5 = arith.constant 0 : index
    %3 = vector.load %arg8[%c0_4, %c0_5] : memref<1x384xf32, #tpu.memory_space<vmem>>, vector<1x384xf32>
    %4 = vector.broadcast %0 : f32 to vector<1x384xf32>
    %5 = arith.mulf %4, %3 : vector<1x384xf32>
    %6 = vector.shape_cast %5 : vector<1x384xf32> to vector<1x384xf32>
    %7 = vector.broadcast %6 : vector<1x384xf32> to vector<8x384xf32>
    %c0_6 = arith.constant 0 : index
    %c0_7 = arith.constant 0 : index
    %8 = vector.load %arg3[%c0_6, %c0_7] : memref<8x128xf32, #tpu.memory_space<vmem>>, vector<8x128xf32>
    %c0_8 = arith.constant 0 : index
    %c0_9 = arith.constant 0 : index
    %9 = vector.load %arg7[%c0_8, %c0_9] : memref<128x384xf32, #tpu.memory_space<vmem>>, vector<128x384xf32>
    %cst = arith.constant dense<0.000000e+00> : vector<8x384xf32>
    %10 = tpu.matmul %8, %9, %cst {dimension_numbers = #tpu.dot_dimension_numbers<[1], [0], [0], [1], [0, 0, 1, 1], [], []>} : vector<8x128xf32>, vector<128x384xf32>, vector<8x384xf32> -> vector<8x384xf32>
    %c0_10 = arith.constant 0 : index
    %c0_11 = arith.constant 0 : index
    %11 = vector.load %arg4[%c0_10, %c0_11] : memref<8x384xf32, #tpu.memory_space<vmem>>, vector<8x384xf32>
    %12 = arith.addf %11, %10 : vector<8x384xf32>
    %13 = arith.mulf %7, %12 : vector<8x384xf32>
    %c0_12 = arith.constant 0 : index
    %c0_13 = arith.constant 0 : index
    %14 = vector.load %arg1[%c0_12, %c0_13] : memref<8x384xf32, #tpu.memory_space<vmem>>, vector<8x384xf32>
    %c0_14 = arith.constant 0 : index
    %c0_15 = arith.constant 0 : index
    %15 = vector.load %arg2[%c0_14, %c0_15] : memref<8x384xf32, #tpu.memory_space<vmem>>, vector<8x384xf32>
    %c0_i32 = arith.constant 0 : i32
    %cst_16 = arith.constant dense<0.000000e+00> : vector<8x384xf32>
    %16 = tpu.matmul %14, %1, %cst_16 {dimension_numbers = #tpu.dot_dimension_numbers<[1], [0], [0], [1], [0, 0, 1, 1], [], []>} : vector<8x384xf32>, vector<384x384xf32>, vector<8x384xf32> -> vector<8x384xf32>
    %cst_17 = arith.constant dense<0.000000e+00> : vector<8x384xf32>
    %17 = tpu.matmul %15, %2, %cst_17 {dimension_numbers = #tpu.dot_dimension_numbers<[1], [0], [0], [1], [0, 0, 1, 1], [], []>} : vector<8x384xf32>, vector<384x384xf32>, vector<8x384xf32> -> vector<8x384xf32>
    %18 = arith.addf %16, %17 : vector<8x384xf32>
    %19 = arith.mulf %7, %18 : vector<8x384xf32>
    %20 = arith.addf %15, %19 : vector<8x384xf32>
    %21 = arith.addf %20, %13 : vector<8x384xf32>
    %22 = vector.broadcast %0 : f32 to vector<8x384xf32>
    %23 = arith.mulf %22, %21 : vector<8x384xf32>
    %24 = arith.addf %14, %23 : vector<8x384xf32>
    %c0_18 = arith.constant 0 : index
    %c0_19 = arith.constant 0 : index
    %25 = vector.load %arg9[%c0_18, %c0_19] : memref<8x384xf32, #tpu.memory_space<vmem>>, vector<8x384xf32>
    tpu.vector_store %arg9[%c0_18, %c0_19], %24 {strides = array<i32>} : memref<8x384xf32, #tpu.memory_space<vmem>>, vector<8x384xf32>,
    %c0_20 = arith.constant 0 : index
    %c0_21 = arith.constant 0 : index
    %26 = vector.load %arg10[%c0_20, %c0_21] : memref<8x384xf32, #tpu.memory_space<vmem>>, vector<8x384xf32>
    tpu.vector_store %arg10[%c0_20, %c0_21], %21 {strides = array<i32>} : memref<8x384xf32, #tpu.memory_space<vmem>>, vector<8x384xf32>,
    return
  }
}

</mosaic_0001>

<llo_original>
// kernel: neg.3
$region0: #{neg.3}
  #allocation0 [shape = 's32[1]{0}', space=sflag, size = 0x4, scoped, tag = 'scoped memory for neg.3']
  %s0 = inlined_call_operand.vmem [shape: f32[384,384], index: 0, kind: input, shape index: {}]
  %s1 = inlined_call_operand.vmem [shape: f32[384,384], index: 1, kind: output, shape index: {}]
  %v2 = vld [vmem:[%s0] sm:$0xff]
  %3 = xla_tuple %v2
  %4 = xla_tuple %3
  %v5 = vxor.u32 %v2, 2147483648
  %6 = xla_tuple %v5
  %7 = vst [vmem:[%s1] sm:$0xff] %v5
  %s8 = scalar_lea.vmem %s0, 24
  %v9 = vld [vmem:[%s8] sm:$0xff]
  %10 = xla_tuple %v9
  %11 = xla_tuple %10
  %v12 = vxor.u32 %v9, 2147483648
  %13 = xla_tuple %v12
  %s14 = scalar_lea.vmem %s1, 24
  %15 = vst [vmem:[%s14] sm:$0xff] %v12
  %s16 = scalar_lea.vmem %s0, 48
  %v17 = vld [vmem:[%s16] sm:$0xff]
  %18 = xla_tuple %v17
  %19 = xla_tuple %18
  %v20 = vxor.u32 %v17, 2147483648
  %21 = xla_tuple %v20
  %s22 = scalar_lea.vmem %s1, 48
  %23 = vst [vmem:[%s22] sm:$0xff] %v20
  %s24 = scalar_lea.vmem %s0, 72
  %v25 = vld [vmem:[%s24] sm:$0xff]
  %26 = xla_tuple %v25
  %27 = xla_tuple %26
  %v28 = vxor.u32 %v25, 2147483648
  %29 = xla_tuple %v28
  %s30 = scalar_lea.vmem %s1, 72
  %31 = vst [vmem:[%s30] sm:$0xff] %v28
  %s32 = scalar_lea.vmem %s0, 96
  %v33 = vld [vmem:[%s32] sm:$0xff]
  %34 = xla_tuple %v33
  %35 = xla_tuple %34
  %v36 = vxor.u32 %v33, 2147483648
  %37 = xla_tuple %v36
  %s38 = scalar_lea.vmem %s1, 96
  %39 = vst [vmem:[%s38] sm:$0xff] %v36
  %s40 = scalar_lea.vmem %s0, 120
  %v41 = vld [vmem:[%s40] sm:$0xff]
  %42 = xla_tuple %v41
  %43 = xla_tuple %42
  %v44 = vxor.u32 %v41, 2147483648
  %45 = xla_tuple %v44
  %s46 = scalar_lea.vmem %s1, 120
  %47 = vst [vmem:[%s46] sm:$0xff] %v44
  %s48 = scalar_lea.vmem %s0, 144
  %v49 = vld [vmem:[%s48] sm:$0xff]
  %50 = xla_tuple %v49
  %51 = xla_tuple %50
  %v52 = vxor.u32 %v49, 2147483648
  %53 = xla_tuple %v52
  %s54 = scalar_lea.vmem %s1, 144
  %55 = vst [vmem:[%s54] sm:$0xff] %v52
  %s56 = scalar_lea.vmem %s0, 168
  %v57 = vld [vmem:[%s56] sm:$0xff]
  %58 = xla_tuple %v57
  %59 = xla_tuple %58
  %v60 = vxor.u32 %v57, 2147483648
  %61 = xla_tuple %v60
  %s62 = scalar_lea.vmem %s1, 168
  %63 = vst [vmem:[%s62] sm:$0xff] %v60
  %s64 = scalar_lea.vmem %s0, 192
  %v65 = vld [vmem:[%s64] sm:$0xff]
  %66 = xla_tuple %v65
  %67 = xla_tuple %66
  %v68 = vxor.u32 %v65, 2147483648
  %69 = xla_tuple %v68
  %s70 = scalar_lea.vmem %s1, 192
  %71 = vst [vmem:[%s70] sm:$0xff] %v68
  %s72 = scalar_lea.vmem %s0, 216
  %v73 = vld [vmem:[%s72] sm:$0xff]
  %74 = xla_tuple %v73
  %75 = xla_tuple %74
  %v76 = vxor.u32 %v73, 2147483648
  %77 = xla_tuple %v76
  %s78 = scalar_lea.vmem %s1, 216
  %79 = vst [vmem:[%s78] sm:$0xff] %v76
  %s80 = scalar_lea.vmem %s0, 240
  %v81 = vld [vmem:[%s80] sm:$0xff]
  %82 = xla_tuple %v81
  %83 = xla_tuple %82
  %v84 = vxor.u32 %v81, 2147483648
  %85 = xla_tuple %v84
  %s86 = scalar_lea.vmem %s1, 240
  %87 = vst [vmem:[%s86] sm:$0xff] %v84
  %s88 = scalar_lea.vmem %s0, 264
  %v89 = vld [vmem:[%s88] sm:$0xff]
  %90 = xla_tuple %v89
  %91 = xla_tuple %90
  %v92 = vxor.u32 %v89, 2147483648
  %93 = xla_tuple %v92
  %s94 = scalar_lea.vmem %s1, 264
  %95 = vst [vmem:[%s94] sm:$0xff] %v92
  %s96 = scalar_lea.vmem %s0, 288
  %v97 = vld [vmem:[%s96] sm:$0xff]
  %98 = xla_tuple %v97
  %99 = xla_tuple %98
  %v100 = vxor.u32 %v97, 2147483648
  %101 = xla_tuple %v100
  %s102 = scalar_lea.vmem %s1, 288
  %103 = vst [vmem:[%s102] sm:$0xff] %v100
  %s104 = scalar_lea.vmem %s0, 312
  %v105 = vld [vmem:[%s104] sm:$0xff]
  %106 = xla_tuple %v105
  %107 = xla_tuple %106
  %v108 = vxor.u32 %v105, 2147483648
  %109 = xla_tuple %v108
  %s110 = scalar_lea.vmem %s1, 312
  %111 = vst [vmem:[%s110] sm:$0xff] %v108
  %s112 = scalar_lea.vmem %s0, 336
  %v113 = vld [vmem:[%s112] sm:$0xff]
  %114 = xla_tuple %v113
  %115 = xla_tuple %114
  %v116 = vxor.u32 %v113, 2147483648
  %117 = xla_tuple %v116
  %s118 = scalar_lea.vmem %s1, 336
  %119 = vst [vmem:[%s118] sm:$0xff] %v116
  %s120 = scalar_lea.vmem %s0, 360
  %v121 = vld [vmem:[%s120] sm:$0xff]
  %122 = xla_tuple %v121
  %123 = xla_tuple %122
  %v124 = vxor.u32 %v121, 2147483648
  %125 = xla_tuple %v124
  %s126 = scalar_lea.vmem %s1, 360
  %127 = vst [vmem:[%s126] sm:$0xff] %v124
  %s128 = scalar_lea.vmem %s0, 384
  %v129 = vld [vmem:[%s128] sm:$0xff]
  %130 = xla_tuple %v129
  %131 = xla_tuple %130
  %v132 = vxor.u32 %v129, 2147483648
  %133 = xla_tuple %v132
  %s134 = scalar_lea.vmem %s1, 384
  %135 = vst [vmem:[%s134] sm:$0xff] %v132
  %s136 = scalar_lea.vmem %s0, 408
  %v137 = vld [vmem:[%s136] sm:$0xff]
  %138 = xla_tuple %v137
  %139 = xla_tuple %138
  %v140 = vxor.u32 %v137, 2147483648
  %141 = xla_tuple %v140
  %s142 = scalar_lea.vmem %s1, 408
  %143 = vst [vmem:[%s142] sm:$0xff] %v140
  %s144 = scalar_lea.vmem %s0, 432
  %v145 = vld [vmem:[%s144] sm:$0xff]
  %146 = xla_tuple %v145
  %147 = xla_tuple %146
  %v148 = vxor.u32 %v145, 2147483648
  %149 = xla_tuple %v148
  %s150 = scalar_lea.vmem %s1, 432
  %151 = vst [vmem:[%s150] sm:$0xff] %v148
  %s152 = scalar_lea.vmem %s0, 456
  %v153 = vld [vmem:[%s152] sm:$0xff]
  %154 = xla_tuple %v153
  %155 = xla_tuple %154
  %v156 = vxor.u32 %v153, 2147483648
  %157 = xla_tuple %v156
  %s158 = scalar_lea.vmem %s1, 456
  %159 = vst [vmem:[%s158] sm:$0xff] %v156
  %s160 = scalar_lea.vmem %s0, 480
  %v161 = vld [vmem:[%s160] sm:$0xff]
  %162 = xla_tuple %v161
  %163 = xla_tuple %162
  %v164 = vxor.u32 %v161, 2147483648
  %165 = xla_tuple %v164
  %s166 = scalar_lea.vmem %s1, 480
  %167 = vst [vmem:[%s166] sm:$0xff] %v164
  %s168 = scalar_lea.vmem %s0, 504
  %v169 = vld [vmem:[%s168] sm:$0xff]
  %170 = xla_tuple %v169
  %171 = xla_tuple %170
  %v172 = vxor.u32 %v169, 2147483648
  %173 = xla_tuple %v172
  %s174 = scalar_lea.vmem %s1, 504
  %175 = vst [vmem:[%s174] sm:$0xff] %v172
  %s176 = scalar_lea.vmem %s0, 528
  %v177 = vld [vmem:[%s176] sm:$0xff]
  %178 = xla_tuple %v177
  %179 = xla_tuple %178
  %v180 = vxor.u32 %v177, 2147483648
  %181 = xla_tuple %v180
  %s182 = scalar_lea.vmem %s1, 528
  %183 = vst [vmem:[%s182] sm:$0xff] %v180
  %s184 = scalar_lea.vmem %s0, 552
  %v185 = vld [vmem:[%s184] sm:$0xff]
  %186 = xla_tuple %v185
  %187 = xla_tuple %186
  %v188 = vxor.u32 %v185, 2147483648
  %189 = xla_tuple %v188
  %s190 = scalar_lea.vmem %s1, 552
  %191 = vst [vmem:[%s190] sm:$0xff] %v188
  %s192 = scalar_lea.vmem %s0, 576
  %v193 = vld [vmem:[%s192] sm:$0xff]
  %194 = xla_tuple %v193
  %195 = xla_tuple %194
  %v196 = vxor.u32 %v193, 2147483648
  %197 = xla_tuple %v196
  %s198 = scalar_lea.vmem %s1, 576
  %199 = vst [vmem:[%s198] sm:$0xff] %v196
  %s200 = scalar_lea.vmem %s0, 600
  %v201 = vld [vmem:[%s200] sm:$0xff]
  %202 = xla_tuple %v201
  %203 = xla_tuple %202
  %v204 = vxor.u32 %v201, 2147483648
  %205 = xla_tuple %v204
  %s206 = scalar_lea.vmem %s1, 600
  %207 = vst [vmem:[%s206] sm:$0xff] %v204
  %s208 = scalar_lea.vmem %s0, 624
  %v209 = vld [vmem:[%s208] sm:$0xff]
  %210 = xla_tuple %v209
  %211 = xla_tuple %210
  %v212 = vxor.u32 %v209, 2147483648
  %213 = xla_tuple %v212
  %s214 = scalar_lea.vmem %s1, 624
  %215 = vst [vmem:[%s214] sm:$0xff] %v212
  %s216 = scalar_lea.vmem %s0, 648
  %v217 = vld [vmem:[%s216] sm:$0xff]
  %218 = xla_tuple %v217
  %219 = xla_tuple %218
  %v220 = vxor.u32 %v217, 2147483648
  %221 = xla_tuple %v220
  %s222 = scalar_lea.vmem %s1, 648
  %223 = vst [vmem:[%s222] sm:$0xff] %v220
  %s224 = scalar_lea.vmem %s0, 672
  %v225 = vld [vmem:[%s224] sm:$0xff]
  %226 = xla_tuple %v225
  %227 = xla_tuple %226
  %v228 = vxor.u32 %v225, 2147483648
  %229 = xla_tuple %v228
  %s230 = scalar_lea.vmem %s1, 672
  %231 = vst [vmem:[%s230] sm:$0xff] %v228
  %s232 = scalar_lea.vmem %s0, 696
  %v233 = vld [vmem:[%s232] sm:$0xff]
  %234 = xla_tuple %v233
  %235 = xla_tuple %234
  %v236 = vxor.u32 %v233, 2147483648
  %237 = xla_tuple %v236
  %s238 = scalar_lea.vmem %s1, 696
  %239 = vst [vmem:[%s238] sm:$0xff] %v236
  %s240 = scalar_lea.vmem %s0, 720
  %v241 = vld [vmem:[%s240] sm:$0xff]
  %242 = xla_tuple %v241
  %243 = xla_tuple %242
  %v244 = vxor.u32 %v241, 2147483648
  %245 = xla_tuple %v244
  %s246 = scalar_lea.vmem %s1, 720
  %247 = vst [vmem:[%s246] sm:$0xff] %v244
  %s248 = scalar_lea.vmem %s0, 744
  %v249 = vld [vmem:[%s248] sm:$0xff]
  %250 = xla_tuple %v249
  %251 = xla_tuple %250
  %v252 = vxor.u32 %v249, 2147483648
  %253 = xla_tuple %v252
  %s254 = scalar_lea.vmem %s1, 744
  %255 = vst [vmem:[%s254] sm:$0xff] %v252
  %s256 = scalar_lea.vmem %s0, 768
  %v257 = vld [vmem:[%s256] sm:$0xff]
  %258 = xla_tuple %v257
  %259 = xla_tuple %258
  %v260 = vxor.u32 %v257, 2147483648
  %261 = xla_tuple %v260
  %s262 = scalar_lea.vmem %s1, 768
  %263 = vst [vmem:[%s262] sm:$0xff] %v260
  %s264 = scalar_lea.vmem %s0, 792
  %v265 = vld [vmem:[%s264] sm:$0xff]
  %266 = xla_tuple %v265
  %267 = xla_tuple %266
  %v268 = vxor.u32 %v265, 2147483648
  %269 = xla_tuple %v268
  %s270 = scalar_lea.vmem %s1, 792
  %271 = vst [vmem:[%s270] sm:$0xff] %v268
  %s272 = scalar_lea.vmem %s0, 816
  %v273 = vld [vmem:[%s272] sm:$0xff]
  %274 = xla_tuple %v273
  %275 = xla_tuple %274
  %v276 = vxor.u32 %v273, 2147483648
  %277 = xla_tuple %v276
  %s278 = scalar_lea.vmem %s1, 816
  %279 = vst [vmem:[%s278] sm:$0xff] %v276
  %s280 = scalar_lea.vmem %s0, 840
  %v281 = vld [vmem:[%s280] sm:$0xff]
  %282 = xla_tuple %v281
  %283 = xla_tuple %282
  %v284 = vxor.u32 %v281, 2147483648
  %285 = xla_tuple %v284
  %s286 = scalar_lea.vmem %s1, 840
  %287 = vst [vmem:[%s286] sm:$0xff] %v284
  %s288 = scalar_lea.vmem %s0, 864
  %v289 = vld [vmem:[%s288] sm:$0xff]
  %290 = xla_tuple %v289
  %291 = xla_tuple %290
  %v292 = vxor.u32 %v289, 2147483648
  %293 = xla_tuple %v292
  %s294 = scalar_lea.vmem %s1, 864
  %295 = vst [vmem:[%s294] sm:$0xff] %v292
  %s296 = scalar_lea.vmem %s0, 888
  %v297 = vld [vmem:[%s296] sm:$0xff]
  %298 = xla_tuple %v297
  %299 = xla_tuple %298
  %v300 = vxor.u32 %v297, 2147483648
  %301 = xla_tuple %v300
  %s302 = scalar_lea.vmem %s1, 888
  %303 = vst [vmem:[%s302] sm:$0xff] %v300
  %s304 = scalar_lea.vmem %s0, 912
  %v305 = vld [vmem:[%s304] sm:$0xff]
  %306 = xla_tuple %v305
  %307 = xla_tuple %306
  %v308 = vxor.u32 %v305, 2147483648
  %309 = xla_tuple %v308
  %s310 = scalar_lea.vmem %s1, 912
  %311 = vst [vmem:[%s310] sm:$0xff] %v308
  %s312 = scalar_lea.vmem %s0, 936
  %v313 = vld [vmem:[%s312] sm:$0xff]
  %314 = xla_tuple %v313
  %315 = xla_tuple %314
  %v316 = vxor.u32 %v313, 2147483648
  %317 = xla_tuple %v316
  %s318 = scalar_lea.vmem %s1, 936
  %319 = vst [vmem:[%s318] sm:$0xff] %v316
  %s320 = scalar_lea.vmem %s0, 960
  %v321 = vld [vmem:[%s320] sm:$0xff]
  %322 = xla_tuple %v321
  %323 = xla_tuple %322
  %v324 = vxor.u32 %v321, 2147483648
  %325 = xla_tuple %v324
  %s326 = scalar_lea.vmem %s1, 960
  %327 = vst [vmem:[%s326] sm:$0xff] %v324
  %s328 = scalar_lea.vmem %s0, 984
  %v329 = vld [vmem:[%s328] sm:$0xff]
  %330 = xla_tuple %v329
  %331 = xla_tuple %330
  %v332 = vxor.u32 %v329, 2147483648
  %333 = xla_tuple %v332
  %s334 = scalar_lea.vmem %s1, 984
  %335 = vst [vmem:[%s334] sm:$0xff] %v332
  %s336 = scalar_lea.vmem %s0, 1008
  %v337 = vld [vmem:[%s336] sm:$0xff]
  %338 = xla_tuple %v337
  %339 = xla_tuple %338
  %v340 = vxor.u32 %v337, 2147483648
  %341 = xla_tuple %v340
  %s342 = scalar_lea.vmem %s1, 1008
  %343 = vst [vmem:[%s342] sm:$0xff] %v340
  %s344 = scalar_lea.vmem %s0, 1032
  %v345 = vld [vmem:[%s344] sm:$0xff]
  %346 = xla_tuple %v345
  %347 = xla_tuple %346
  %v348 = vxor.u32 %v345, 2147483648
  %349 = xla_tuple %v348
  %s350 = scalar_lea.vmem %s1, 1032
  %351 = vst [vmem:[%s350] sm:$0xff] %v348
  %s352 = scalar_lea.vmem %s0, 1056
  %v353 = vld [vmem:[%s352] sm:$0xff]
  %354 = xla_tuple %v353
  %355 = xla_tuple %354
  %v356 = vxor.u32 %v353, 2147483648
  %357 = xla_tuple %v356
  %s358 = scalar_lea.vmem %s1, 1056
  %359 = vst [vmem:[%s358] sm:$0xff] %v356
  %s360 = scalar_lea.vmem %s0, 1080
  %v361 = vld [vmem:[%s360] sm:$0xff]
  %362 = xla_tuple %v361
  %363 = xla_tuple %362
  %v364 = vxor.u32 %v361, 2147483648
  %365 = xla_tuple %v364
  %s366 = scalar_lea.vmem %s1, 1080
  %367 = vst [vmem:[%s366] sm:$0xff] %v364
  %s368 = scalar_lea.vmem %s0, 1104
  %v369 = vld [vmem:[%s368] sm:$0xff]
  %370 = xla_tuple %v369
  %371 = xla_tuple %370
  %v372 = vxor.u32 %v369, 2147483648
  %373 = xla_tuple %v372
  %s374 = scalar_lea.vmem %s1, 1104
  %375 = vst [vmem:[%s374] sm:$0xff] %v372
  %s376 = scalar_lea.vmem %s0, 1128
  %v377 = vld [vmem:[%s376] sm:$0xff]
  %378 = xla_tuple %v377
  %379 = xla_tuple %378
  %v380 = vxor.u32 %v377, 2147483648
  %381 = xla_tuple %v380
  %s382 = scalar_lea.vmem %s1, 1128
  %383 = vst [vmem:[%s382] sm:$0xff] %v380
  %s384 = scalar_lea.vmem %s0, 8
  %v385 = vld [vmem:[%s384] sm:$0xff]
  %386 = xla_tuple %v385
  %387 = xla_tuple %386
  %v388 = vxor.u32 %v385, 2147483648
  %389 = xla_tuple %v388
  %s390 = scalar_lea.vmem %s1, 8
  %391 = vst [vmem:[%s390] sm:$0xff] %v388
  %s392 = scalar_lea.vmem %s0, 32
  %v393 = vld [vmem:[%s392] sm:$0xff]
  %394 = xla_tuple %v393
  %395 = xla_tuple %394
  %v396 = vxor.u32 %v393, 2147483648
  %397 = xla_tuple %v396
  %s398 = scalar_lea.vmem %s1, 32
  %399 = vst [vmem:[%s398] sm:$0xff] %v396
  %s400 = scalar_lea.vmem %s0, 56
  %v401 = vld [vmem:[%s400] sm:$0xff]
  %402 = xla_tuple %v401
  %403 = xla_tuple %402
  %v404 = vxor.u32 %v401, 2147483648
  %405 = xla_tuple %v404
  %s406 = scalar_lea.vmem %s1, 56
  %407 = vst [vmem:[%s406] sm:$0xff] %v404
  %s408 = scalar_lea.vmem %s0, 80
  %v409 = vld [vmem:[%s408] sm:$0xff]
  %410 = xla_tuple %v409
  %411 = xla_tuple %410
  %v412 = vxor.u32 %v409, 2147483648
  %413 = xla_tuple %v412
  %s414 = scalar_lea.vmem %s1, 80
  %415 = vst [vmem:[%s414] sm:$0xff] %v412
  %s416 = scalar_lea.vmem %s0, 104
  %v417 = vld [vmem:[%s416] sm:$0xff]
  %418 = xla_tuple %v417
  %419 = xla_tuple %418
  %v420 = vxor.u32 %v417, 2147483648
  %421 = xla_tuple %v420
  %s422 = scalar_lea.vmem %s1, 104
  %423 = vst [vmem:[%s422] sm:$0xff] %v420
  %s424 = scalar_lea.vmem %s0, 128
  %v425 = vld [vmem:[%s424] sm:$0xff]
  %426 = xla_tuple %v425
  %427 = xla_tuple %426
  %v428 = vxor.u32 %v425, 2147483648
  %429 = xla_tuple %v428
  %s430 = scalar_lea.vmem %s1, 128
  %431 = vst [vmem:[%s430] sm:$0xff] %v428
  %s432 = scalar_lea.vmem %s0, 152
  %v433 = vld [vmem:[%s432] sm:$0xff]
  %434 = xla_tuple %v433
  %435 = xla_tuple %434
  %v436 = vxor.u32 %v433, 2147483648
  %437 = xla_tuple %v436
  %s438 = scalar_lea.vmem %s1, 152
  %439 = vst [vmem:[%s438] sm:$0xff] %v436
  %s440 = scalar_lea.vmem %s0, 176
  %v441 = vld [vmem:[%s440] sm:$0xff]
  %442 = xla_tuple %v441
  %443 = xla_tuple %442
  %v444 = vxor.u32 %v441, 2147483648
  %445 = xla_tuple %v444
  %s446 = scalar_lea.vmem %s1, 176
  %447 = vst [vmem:[%s446] sm:$0xff] %v444
  %s448 = scalar_lea.vmem %s0, 200
  %v449 = vld [vmem:[%s448] sm:$0xff]
  %450 = xla_tuple %v449
  %451 = xla_tuple %450
  %v452 = vxor.u32 %v449, 2147483648
  %453 = xla_tuple %v452
  %s454 = scalar_lea.vmem %s1, 200
  %455 = vst [vmem:[%s454] sm:$0xff] %v452
  %s456 = scalar_lea.vmem %s0, 224
  %v457 = vld [vmem:[%s456] sm:$0xff]
  %458 = xla_tuple %v457
  %459 = xla_tuple %458
  %v460 = vxor.u32 %v457, 2147483648
  %461 = xla_tuple %v460
  %s462 = scalar_lea.vmem %s1, 224
  %463 = vst [vmem:[%s462] sm:$0xff] %v460
  %s464 = scalar_lea.vmem %s0, 248
  %v465 = vld [vmem:[%s464] sm:$0xff]
  %466 = xla_tuple %v465
  %467 = xla_tuple %466
  %v468 = vxor.u32 %v465, 2147483648
  %469 = xla_tuple %v468
  %s470 = scalar_lea.vmem %s1, 248
  %471 = vst [vmem:[%s470] sm:$0xff] %v468
  %s472 = scalar_lea.vmem %s0, 272
  %v473 = vld [vmem:[%s472] sm:$0xff]
  %474 = xla_tuple %v473
  %475 = xla_tuple %474
  %v476 = vxor.u32 %v473, 2147483648
  %477 = xla_tuple %v476
  %s478 = scalar_lea.vmem %s1, 272
  %479 = vst [vmem:[%s478] sm:$0xff] %v476
  %s480 = scalar_lea.vmem %s0, 296
  %v481 = vld [vmem:[%s480] sm:$0xff]
  %482 = xla_tuple %v481
  %483 = xla_tuple %482
  %v484 = vxor.u32 %v481, 2147483648
  %485 = xla_tuple %v484
  %s486 = scalar_lea.vmem %s1, 296
  %487 = vst [vmem:[%s486] sm:$0xff] %v484
  %s488 = scalar_lea.vmem %s0, 320
  %v489 = vld [vmem:[%s488] sm:$0xff]
  %490 = xla_tuple %v489
  %491 = xla_tuple %490
  %v492 = vxor.u32 %v489, 2147483648
  %493 = xla_tuple %v492
  %s494 = scalar_lea.vmem %s1, 320
  %495 = vst [vmem:[%s494] sm:$0xff] %v492
  %s496 = scalar_lea.vmem %s0, 344
  %v497 = vld [vmem:[%s496] sm:$0xff]
  %498 = xla_tuple %v497
  %499 = xla_tuple %498
  %v500 = vxor.u32 %v497, 2147483648
  %501 = xla_tuple %v500
  %s502 = scalar_lea.vmem %s1, 344
  %503 = vst [vmem:[%s502] sm:$0xff] %v500
  %s504 = scalar_lea.vmem %s0, 368
  %v505 = vld [vmem:[%s504] sm:$0xff]
  %506 = xla_tuple %v505
  %507 = xla_tuple %506
  %v508 = vxor.u32 %v505, 2147483648
  %509 = xla_tuple %v508
  %s510 = scalar_lea.vmem %s1, 368
  %511 = vst [vmem:[%s510] sm:$0xff] %v508
  %s512 = scalar_lea.vmem %s0, 392
  %v513 = vld [vmem:[%s512] sm:$0xff]
  %514 = xla_tuple %v513
  %515 = xla_tuple %514
  %v516 = vxor.u32 %v513, 2147483648
  %517 = xla_tuple %v516
  %s518 = scalar_lea.vmem %s1, 392
  %519 = vst [vmem:[%s518] sm:$0xff] %v516
  %s520 = scalar_lea.vmem %s0, 416
  %v521 = vld [vmem:[%s520] sm:$0xff]
  %522 = xla_tuple %v521
  %523 = xla_tuple %522
  %v524 = vxor.u32 %v521, 2147483648
  %525 = xla_tuple %v524
  %s526 = scalar_lea.vmem %s1, 416
  %527 = vst [vmem:[%s526] sm:$0xff] %v524
  %s528 = scalar_lea.vmem %s0, 440
  %v529 = vld [vmem:[%s528] sm:$0xff]
  %530 = xla_tuple %v529
  %531 = xla_tuple %530
  %v532 = vxor.u32 %v529, 2147483648
  %533 = xla_tuple %v532
  %s534 = scalar_lea.vmem %s1, 440
  %535 = vst [vmem:[%s534] sm:$0xff] %v532
  %s536 = scalar_lea.vmem %s0, 464
  %v537 = vld [vmem:[%s536] sm:$0xff]
  %538 = xla_tuple %v537
  %539 = xla_tuple %538
  %v540 = vxor.u32 %v537, 2147483648
  %541 = xla_tuple %v540
  %s542 = scalar_lea.vmem %s1, 464
  %543 = vst [vmem:[%s542] sm:$0xff] %v540
  %s544 = scalar_lea.vmem %s0, 488
  %v545 = vld [vmem:[%s544] sm:$0xff]
  %546 = xla_tuple %v545
  %547 = xla_tuple %546
  %v548 = vxor.u32 %v545, 2147483648
  %549 = xla_tuple %v548
  %s550 = scalar_lea.vmem %s1, 488
  %551 = vst [vmem:[%s550] sm:$0xff] %v548
  %s552 = scalar_lea.vmem %s0, 512
  %v553 = vld [vmem:[%s552] sm:$0xff]
  %554 = xla_tuple %v553
  %555 = xla_tuple %554
  %v556 = vxor.u32 %v553, 2147483648
  %557 = xla_tuple %v556
  %s558 = scalar_lea.vmem %s1, 512
  %559 = vst [vmem:[%s558] sm:$0xff] %v556
  %s560 = scalar_lea.vmem %s0, 536
  %v561 = vld [vmem:[%s560] sm:$0xff]
  %562 = xla_tuple %v561
  %563 = xla_tuple %562
  %v564 = vxor.u32 %v561, 2147483648
  %565 = xla_tuple %v564
  %s566 = scalar_lea.vmem %s1, 536
  %567 = vst [vmem:[%s566] sm:$0xff] %v564
  %s568 = scalar_lea.vmem %s0, 560
  %v569 = vld [vmem:[%s568] sm:$0xff]
  %570 = xla_tuple %v569
  %571 = xla_tuple %570
  %v572 = vxor.u32 %v569, 2147483648
  %573 = xla_tuple %v572
  %s574 = scalar_lea.vmem %s1, 560
  %575 = vst [vmem:[%s574] sm:$0xff] %v572
  %s576 = scalar_lea.vmem %s0, 584
  %v577 = vld [vmem:[%s576] sm:$0xff]
  %578 = xla_tuple %v577
  %579 = xla_tuple %578
  %v580 = vxor.u32 %v577, 2147483648
  %581 = xla_tuple %v580
  %s582 = scalar_lea.vmem %s1, 584
  %583 = vst [vmem:[%s582] sm:$0xff] %v580
  %s584 = scalar_lea.vmem %s0, 608
  %v585 = vld [vmem:[%s584] sm:$0xff]
  %586 = xla_tuple %v585
  %587 = xla_tuple %586
  %v588 = vxor.u32 %v585, 2147483648
  %589 = xla_tuple %v588
  %s590 = scalar_lea.vmem %s1, 608
  %591 = vst [vmem:[%s590] sm:$0xff] %v588
  %s592 = scalar_lea.vmem %s0, 632
  %v593 = vld [vmem:[%s592] sm:$0xff]
  %594 = xla_tuple %v593
  %595 = xla_tuple %594
  %v596 = vxor.u32 %v593, 2147483648
  %597 = xla_tuple %v596
  %s598 = scalar_lea.vmem %s1, 632
  %599 = vst [vmem:[%s598] sm:$0xff] %v596
  %s600 = scalar_lea.vmem %s0, 656
  %v601 = vld [vmem:[%s600] sm:$0xff]
  %602 = xla_tuple %v601
  %603 = xla_tuple %602
  %v604 = vxor.u32 %v601, 2147483648
  %605 = xla_tuple %v604
  %s606 = scalar_lea.vmem %s1, 656
  %607 = vst [vmem:[%s606] sm:$0xff] %v604
  %s608 = scalar_lea.vmem %s0, 680
  %v609 = vld [vmem:[%s608] sm:$0xff]
  %610 = xla_tuple %v609
  %611 = xla_tuple %610
  %v612 = vxor.u32 %v609, 2147483648
  %613 = xla_tuple %v612
  %s614 = scalar_lea.vmem %s1, 680
  %615 = vst [vmem:[%s614] sm:$0xff] %v612
  %s616 = scalar_lea.vmem %s0, 704
  %v617 = vld [vmem:[%s616] sm:$0xff]
  %618 = xla_tuple %v617
  %619 = xla_tuple %618
  %v620 = vxor.u32 %v617, 2147483648
  %621 = xla_tuple %v620
  %s622 = scalar_lea.vmem %s1, 704
  %623 = vst [vmem:[%s622] sm:$0xff] %v620
  %s624 = scalar_lea.vmem %s0, 728
  %v625 = vld [vmem:[%s624] sm:$0xff]
  %626 = xla_tuple %v625
  %627 = xla_tuple %626
  %v628 = vxor.u32 %v625, 2147483648
  %629 = xla_tuple %v628
  %s630 = scalar_lea.vmem %s1, 728
  %631 = vst [vmem:[%s630] sm:$0xff] %v628
  %s632 = scalar_lea.vmem %s0, 752
  %v633 = vld [vmem:[%s632] sm:$0xff]
  %634 = xla_tuple %v633
  %635 = xla_tuple %634
  %v636 = vxor.u32 %v633, 2147483648
  %637 = xla_tuple %v636
  %s638 = scalar_lea.vmem %s1, 752
  %639 = vst [vmem:[%s638] sm:$0xff] %v636
  %s640 = scalar_lea.vmem %s0, 776
  %v641 = vld [vmem:[%s640] sm:$0xff]
  %642 = xla_tuple %v641
  %643 = xla_tuple %642
  %v644 = vxor.u32 %v641, 2147483648
  %645 = xla_tuple %v644
  %s646 = scalar_lea.vmem %s1, 776
  %647 = vst [vmem:[%s646] sm:$0xff] %v644
  %s648 = scalar_lea.vmem %s0, 800
  %v649 = vld [vmem:[%s648] sm:$0xff]
  %650 = xla_tuple %v649
  %651 = xla_tuple %650
  %v652 = vxor.u32 %v649, 2147483648
  %653 = xla_tuple %v652
  %s654 = scalar_lea.vmem %s1, 800
  %655 = vst [vmem:[%s654] sm:$0xff] %v652
  %s656 = scalar_lea.vmem %s0, 824
  %v657 = vld [vmem:[%s656] sm:$0xff]
  %658 = xla_tuple %v657
  %659 = xla_tuple %658
  %v660 = vxor.u32 %v657, 2147483648
  %661 = xla_tuple %v660
  %s662 = scalar_lea.vmem %s1, 824
  %663 = vst [vmem:[%s662] sm:$0xff] %v660
  %s664 = scalar_lea.vmem %s0, 848
  %v665 = vld [vmem:[%s664] sm:$0xff]
  %666 = xla_tuple %v665
  %667 = xla_tuple %666
  %v668 = vxor.u32 %v665, 2147483648
  %669 = xla_tuple %v668
  %s670 = scalar_lea.vmem %s1, 848
  %671 = vst [vmem:[%s670] sm:$0xff] %v668
  %s672 = scalar_lea.vmem %s0, 872
  %v673 = vld [vmem:[%s672] sm:$0xff]
  %674 = xla_tuple %v673
  %675 = xla_tuple %674
  %v676 = vxor.u32 %v673, 2147483648
  %677 = xla_tuple %v676
  %s678 = scalar_lea.vmem %s1, 872
  %679 = vst [vmem:[%s678] sm:$0xff] %v676
  %s680 = scalar_lea.vmem %s0, 896
  %v681 = vld [vmem:[%s680] sm:$0xff]
  %682 = xla_tuple %v681
  %683 = xla_tuple %682
  %v684 = vxor.u32 %v681, 2147483648
  %685 = xla_tuple %v684
  %s686 = scalar_lea.vmem %s1, 896
  %687 = vst [vmem:[%s686] sm:$0xff] %v684
  %s688 = scalar_lea.vmem %s0, 920
  %v689 = vld [vmem:[%s688] sm:$0xff]
  %690 = xla_tuple %v689
  %691 = xla_tuple %690
  %v692 = vxor.u32 %v689, 2147483648
  %693 = xla_tuple %v692
  %s694 = scalar_lea.vmem %s1, 920
  %695 = vst [vmem:[%s694] sm:$0xff] %v692
  %s696 = scalar_lea.vmem %s0, 944
  %v697 = vld [vmem:[%s696] sm:$0xff]
  %698 = xla_tuple %v697
  %699 = xla_tuple %698
  %v700 = vxor.u32 %v697, 2147483648
  %701 = xla_tuple %v700
  %s702 = scalar_lea.vmem %s1, 944
  %703 = vst [vmem:[%s702] sm:$0xff] %v700
  %s704 = scalar_lea.vmem %s0, 968
  %v705 = vld [vmem:[%s704] sm:$0xff]
  %706 = xla_tuple %v705
  %707 = xla_tuple %706
  %v708 = vxor.u32 %v705, 2147483648
  %709 = xla_tuple %v708
  %s710 = scalar_lea.vmem %s1, 968
  %711 = vst [vmem:[%s710] sm:$0xff] %v708
  %s712 = scalar_lea.vmem %s0, 992
  %v713 = vld [vmem:[%s712] sm:$0xff]
  %714 = xla_tuple %v713
  %715 = xla_tuple %714
  %v716 = vxor.u32 %v713, 2147483648
  %717 = xla_tuple %v716
  %s718 = scalar_lea.vmem %s1, 992
  %719 = vst [vmem:[%s718] sm:$0xff] %v716
  %s720 = scalar_lea.vmem %s0, 1016
  %v721 = vld [vmem:[%s720] sm:$0xff]
  %722 = xla_tuple %v721
  %723 = xla_tuple %722
  %v724 = vxor.u32 %v721, 2147483648
  %725 = xla_tuple %v724
  %s726 = scalar_lea.vmem %s1, 1016
  %727 = vst [vmem:[%s726] sm:$0xff] %v724
  %s728 = scalar_lea.vmem %s0, 1040
  %v729 = vld [vmem:[%s728] sm:$0xff]
  %730 = xla_tuple %v729
  %731 = xla_tuple %730
  %v732 = vxor.u32 %v729, 2147483648
  %733 = xla_tuple %v732
  %s734 = scalar_lea.vmem %s1, 1040
  %735 = vst [vmem:[%s734] sm:$0xff] %v732
  %s736 = scalar_lea.vmem %s0, 1064
  %v737 = vld [vmem:[%s736] sm:$0xff]
  %738 = xla_tuple %v737
  %739 = xla_tuple %738
  %v740 = vxor.u32 %v737, 2147483648
  %741 = xla_tuple %v740
  %s742 = scalar_lea.vmem %s1, 1064
  %743 = vst [vmem:[%s742] sm:$0xff] %v740
  %s744 = scalar_lea.vmem %s0, 1088
  %v745 = vld [vmem:[%s744] sm:$0xff]
  %746 = xla_tuple %v745
  %747 = xla_tuple %746
  %v748 = vxor.u32 %v745, 2147483648
  %749 = xla_tuple %v748
  %s750 = scalar_lea.vmem %s1, 1088
  %751 = vst [vmem:[%s750] sm:$0xff] %v748
  %s752 = scalar_lea.vmem %s0, 1112
  %v753 = vld [vmem:[%s752] sm:$0xff]
  %754 = xla_tuple %v753
  %755 = xla_tuple %754
  %v756 = vxor.u32 %v753, 2147483648
  %757 = xla_tuple %v756
  %s758 = scalar_lea.vmem %s1, 1112
  %759 = vst [vmem:[%s758] sm:$0xff] %v756
  %s760 = scalar_lea.vmem %s0, 1136
  %v761 = vld [vmem:[%s760] sm:$0xff]
  %762 = xla_tuple %v761
  %763 = xla_tuple %762
  %v764 = vxor.u32 %v761, 2147483648
  %765 = xla_tuple %v764
  %s766 = scalar_lea.vmem %s1, 1136
  %767 = vst [vmem:[%s766] sm:$0xff] %v764
  %s768 = scalar_lea.vmem %s0, 16
  %v769 = vld [vmem:[%s768] sm:$0xff]
  %770 = xla_tuple %v769
  %771 = xla_tuple %770
  %v772 = vxor.u32 %v769, 2147483648
  %773 = xla_tuple %v772
  %s774 = scalar_lea.vmem %s1, 16
  %775 = vst [vmem:[%s774] sm:$0xff] %v772
  %s776 = scalar_lea.vmem %s0, 40
  %v777 = vld [vmem:[%s776] sm:$0xff]
  %778 = xla_tuple %v777
  %779 = xla_tuple %778
  %v780 = vxor.u32 %v777, 2147483648
  %781 = xla_tuple %v780
  %s782 = scalar_lea.vmem %s1, 40
  %783 = vst [vmem:[%s782] sm:$0xff] %v780
  %s784 = scalar_lea.vmem %s0, 64
  %v785 = vld [vmem:[%s784] sm:$0xff]
  %786 = xla_tuple %v785
  %787 = xla_tuple %786
  %v788 = vxor.u32 %v785, 2147483648
  %789 = xla_tuple %v788
  %s790 = scalar_lea.vmem %s1, 64
  %791 = vst [vmem:[%s790] sm:$0xff] %v788
  %s792 = scalar_lea.vmem %s0, 88
  %v793 = vld [vmem:[%s792] sm:$0xff]
  %794 = xla_tuple %v793
  %795 = xla_tuple %794
  %v796 = vxor.u32 %v793, 2147483648
  %797 = xla_tuple %v796
  %s798 = scalar_lea.vmem %s1, 88
  %799 = vst [vmem:[%s798] sm:$0xff] %v796
  %s800 = scalar_lea.vmem %s0, 112
  %v801 = vld [vmem:[%s800] sm:$0xff]
  %802 = xla_tuple %v801
  %803 = xla_tuple %802
  %v804 = vxor.u32 %v801, 2147483648
  %805 = xla_tuple %v804
  %s806 = scalar_lea.vmem %s1, 112
  %807 = vst [vmem:[%s806] sm:$0xff] %v804
  %s808 = scalar_lea.vmem %s0, 136
  %v809 = vld [vmem:[%s808] sm:$0xff]
  %810 = xla_tuple %v809
  %811 = xla_tuple %810
  %v812 = vxor.u32 %v809, 2147483648
  %813 = xla_tuple %v812
  %s814 = scalar_lea.vmem %s1, 136
  %815 = vst [vmem:[%s814] sm:$0xff] %v812
  %s816 = scalar_lea.vmem %s0, 160
  %v817 = vld [vmem:[%s816] sm:$0xff]
  %818 = xla_tuple %v817
  %819 = xla_tuple %818
  %v820 = vxor.u32 %v817, 2147483648
  %821 = xla_tuple %v820
  %s822 = scalar_lea.vmem %s1, 160
  %823 = vst [vmem:[%s822] sm:$0xff] %v820
  %s824 = scalar_lea.vmem %s0, 184
  %v825 = vld [vmem:[%s824] sm:$0xff]
  %826 = xla_tuple %v825
  %827 = xla_tuple %826
  %v828 = vxor.u32 %v825, 2147483648
  %829 = xla_tuple %v828
  %s830 = scalar_lea.vmem %s1, 184
  %831 = vst [vmem:[%s830] sm:$0xff] %v828
  %s832 = scalar_lea.vmem %s0, 208
  %v833 = vld [vmem:[%s832] sm:$0xff]
  %834 = xla_tuple %v833
  %835 = xla_tuple %834
  %v836 = vxor.u32 %v833, 2147483648
  %837 = xla_tuple %v836
  %s838 = scalar_lea.vmem %s1, 208
  %839 = vst [vmem:[%s838] sm:$0xff] %v836
  %s840 = scalar_lea.vmem %s0, 232
  %v841 = vld [vmem:[%s840] sm:$0xff]
  %842 = xla_tuple %v841
  %843 = xla_tuple %842
  %v844 = vxor.u32 %v841, 2147483648
  %845 = xla_tuple %v844
  %s846 = scalar_lea.vmem %s1, 232
  %847 = vst [vmem:[%s846] sm:$0xff] %v844
  %s848 = scalar_lea.vmem %s0, 256
  %v849 = vld [vmem:[%s848] sm:$0xff]
  %850 = xla_tuple %v849
  %851 = xla_tuple %850
  %v852 = vxor.u32 %v849, 2147483648
  %853 = xla_tuple %v852
  %s854 = scalar_lea.vmem %s1, 256
  %855 = vst [vmem:[%s854] sm:$0xff] %v852
  %s856 = scalar_lea.vmem %s0, 280
  %v857 = vld [vmem:[%s856] sm:$0xff]
  %858 = xla_tuple %v857
  %859 = xla_tuple %858
  %v860 = vxor.u32 %v857, 2147483648
  %861 = xla_tuple %v860
  %s862 = scalar_lea.vmem %s1, 280
  %863 = vst [vmem:[%s862] sm:$0xff] %v860
  %s864 = scalar_lea.vmem %s0, 304
  %v865 = vld [vmem:[%s864] sm:$0xff]
  %866 = xla_tuple %v865
  %867 = xla_tuple %866
  %v868 = vxor.u32 %v865, 2147483648
  %869 = xla_tuple %v868
  %s870 = scalar_lea.vmem %s1, 304
  %871 = vst [vmem:[%s870] sm:$0xff] %v868
  %s872 = scalar_lea.vmem %s0, 328
  %v873 = vld [vmem:[%s872] sm:$0xff]
  %874 = xla_tuple %v873
  %875 = xla_tuple %874
  %v876 = vxor.u32 %v873, 2147483648
  %877 = xla_tuple %v876
  %s878 = scalar_lea.vmem %s1, 328
  %879 = vst [vmem:[%s878] sm:$0xff] %v876
  %s880 = scalar_lea.vmem %s0, 352
  %v881 = vld [vmem:[%s880] sm:$0xff]
  %882 = xla_tuple %v881
  %883 = xla_tuple %882
  %v884 = vxor.u32 %v881, 2147483648
  %885 = xla_tuple %v884
  %s886 = scalar_lea.vmem %s1, 352
  %887 = vst [vmem:[%s886] sm:$0xff] %v884
  %s888 = scalar_lea.vmem %s0, 376
  %v889 = vld [vmem:[%s888] sm:$0xff]
  %890 = xla_tuple %v889
  %891 = xla_tuple %890
  %v892 = vxor.u32 %v889, 2147483648
  %893 = xla_tuple %v892
  %s894 = scalar_lea.vmem %s1, 376
  %895 = vst [vmem:[%s894] sm:$0xff] %v892
  %s896 = scalar_lea.vmem %s0, 400
  %v897 = vld [vmem:[%s896] sm:$0xff]
  %898 = xla_tuple %v897
  %899 = xla_tuple %898
  %v900 = vxor.u32 %v897, 2147483648
  %901 = xla_tuple %v900
  %s902 = scalar_lea.vmem %s1, 400
  %903 = vst [vmem:[%s902] sm:$0xff] %v900
  %s904 = scalar_lea.vmem %s0, 424
  %v905 = vld [vmem:[%s904] sm:$0xff]
  %906 = xla_tuple %v905
  %907 = xla_tuple %906
  %v908 = vxor.u32 %v905, 2147483648
  %909 = xla_tuple %v908
  %s910 = scalar_lea.vmem %s1, 424
  %911 = vst [vmem:[%s910] sm:$0xff] %v908
  %s912 = scalar_lea.vmem %s0, 448
  %v913 = vld [vmem:[%s912] sm:$0xff]
  %914 = xla_tuple %v913
  %915 = xla_tuple %914
  %v916 = vxor.u32 %v913, 2147483648
  %917 = xla_tuple %v916
  %s918 = scalar_lea.vmem %s1, 448
  %919 = vst [vmem:[%s918] sm:$0xff] %v916
  %s920 = scalar_lea.vmem %s0, 472
  %v921 = vld [vmem:[%s920] sm:$0xff]
  %922 = xla_tuple %v921
  %923 = xla_tuple %922
  %v924 = vxor.u32 %v921, 2147483648
  %925 = xla_tuple %v924
  %s926 = scalar_lea.vmem %s1, 472
  %927 = vst [vmem:[%s926] sm:$0xff] %v924
  %s928 = scalar_lea.vmem %s0, 496
  %v929 = vld [vmem:[%s928] sm:$0xff]
  %930 = xla_tuple %v929
  %931 = xla_tuple %930
  %v932 = vxor.u32 %v929, 2147483648
  %933 = xla_tuple %v932
  %s934 = scalar_lea.vmem %s1, 496
  %935 = vst [vmem:[%s934] sm:$0xff] %v932
  %s936 = scalar_lea.vmem %s0, 520
  %v937 = vld [vmem:[%s936] sm:$0xff]
  %938 = xla_tuple %v937
  %939 = xla_tuple %938
  %v940 = vxor.u32 %v937, 2147483648
  %941 = xla_tuple %v940
  %s942 = scalar_lea.vmem %s1, 520
  %943 = vst [vmem:[%s942] sm:$0xff] %v940
  %s944 = scalar_lea.vmem %s0, 544
  %v945 = vld [vmem:[%s944] sm:$0xff]
  %946 = xla_tuple %v945
  %947 = xla_tuple %946
  %v948 = vxor.u32 %v945, 2147483648
  %949 = xla_tuple %v948
  %s950 = scalar_lea.vmem %s1, 544
  %951 = vst [vmem:[%s950] sm:$0xff] %v948
  %s952 = scalar_lea.vmem %s0, 568
  %v953 = vld [vmem:[%s952] sm:$0xff]
  %954 = xla_tuple %v953
  %955 = xla_tuple %954
  %v956 = vxor.u32 %v953, 2147483648
  %957 = xla_tuple %v956
  %s958 = scalar_lea.vmem %s1, 568
  %959 = vst [vmem:[%s958] sm:$0xff] %v956
  %s960 = scalar_lea.vmem %s0, 592
  %v961 = vld [vmem:[%s960] sm:$0xff]
  %962 = xla_tuple %v961
  %963 = xla_tuple %962
  %v964 = vxor.u32 %v961, 2147483648
  %965 = xla_tuple %v964
  %s966 = scalar_lea.vmem %s1, 592
  %967 = vst [vmem:[%s966] sm:$0xff] %v964
  %s968 = scalar_lea.vmem %s0, 616
  %v969 = vld [vmem:[%s968] sm:$0xff]
  %970 = xla_tuple %v969
  %971 = xla_tuple %970
  %v972 = vxor.u32 %v969, 2147483648
  %973 = xla_tuple %v972
  %s974 = scalar_lea.vmem %s1, 616
  %975 = vst [vmem:[%s974] sm:$0xff] %v972
  %s976 = scalar_lea.vmem %s0, 640
  %v977 = vld [vmem:[%s976] sm:$0xff]
  %978 = xla_tuple %v977
  %979 = xla_tuple %978
  %v980 = vxor.u32 %v977, 2147483648
  %981 = xla_tuple %v980
  %s982 = scalar_lea.vmem %s1, 640
  %983 = vst [vmem:[%s982] sm:$0xff] %v980
  %s984 = scalar_lea.vmem %s0, 664
  %v985 = vld [vmem:[%s984] sm:$0xff]
  %986 = xla_tuple %v985
  %987 = xla_tuple %986
  %v988 = vxor.u32 %v985, 2147483648
  %989 = xla_tuple %v988
  %s990 = scalar_lea.vmem %s1, 664
  %991 = vst [vmem:[%s990] sm:$0xff] %v988
  %s992 = scalar_lea.vmem %s0, 688
  %v993 = vld [vmem:[%s992] sm:$0xff]
  %994 = xla_tuple %v993
  %995 = xla_tuple %994
  %v996 = vxor.u32 %v993, 2147483648
  %997 = xla_tuple %v996
  %s998 = scalar_lea.vmem %s1, 688
  %999 = vst [vmem:[%s998] sm:$0xff] %v996
  %s1000 = scalar_lea.vmem %s0, 712
  %v1001 = vld [vmem:[%s1000] sm:$0xff]
  %1002 = xla_tuple %v1001
  %1003 = xla_tuple %1002
  %v1004 = vxor.u32 %v1001, 2147483648
  %1005 = xla_tuple %v1004
  %s1006 = scalar_lea.vmem %s1, 712
  %1007 = vst [vmem:[%s1006] sm:$0xff] %v1004
  %s1008 = scalar_lea.vmem %s0, 736
  %v1009 = vld [vmem:[%s1008] sm:$0xff]
  %1010 = xla_tuple %v1009
  %1011 = xla_tuple %1010
  %v1012 = vxor.u32 %v1009, 2147483648
  %1013 = xla_tuple %v1012
  %s1014 = scalar_lea.vmem %s1, 736
  %1015 = vst [vmem:[%s1014] sm:$0xff] %v1012
  %s1016 = scalar_lea.vmem %s0, 760
  %v1017 = vld [vmem:[%s1016] sm:$0xff]
  %1018 = xla_tuple %v1017
  %1019 = xla_tuple %1018
  %v1020 = vxor.u32 %v1017, 2147483648
  %1021 = xla_tuple %v1020
  %s1022 = scalar_lea.vmem %s1, 760
  %1023 = vst [vmem:[%s1022] sm:$0xff] %v1020
  %s1024 = scalar_lea.vmem %s0, 784
  %v1025 = vld [vmem:[%s1024] sm:$0xff]
  %1026 = xla_tuple %v1025
  %1027 = xla_tuple %1026
  %v1028 = vxor.u32 %v1025, 2147483648
  %1029 = xla_tuple %v1028
  %s1030 = scalar_lea.vmem %s1, 784
  %1031 = vst [vmem:[%s1030] sm:$0xff] %v1028
  %s1032 = scalar_lea.vmem %s0, 808
  %v1033 = vld [vmem:[%s1032] sm:$0xff]
  %1034 = xla_tuple %v1033
  %1035 = xla_tuple %1034
  %v1036 = vxor.u32 %v1033, 2147483648
  %1037 = xla_tuple %v1036
  %s1038 = scalar_lea.vmem %s1, 808
  %1039 = vst [vmem:[%s1038] sm:$0xff] %v1036
  %s1040 = scalar_lea.vmem %s0, 832
  %v1041 = vld [vmem:[%s1040] sm:$0xff]
  %1042 = xla_tuple %v1041
  %1043 = xla_tuple %1042
  %v1044 = vxor.u32 %v1041, 2147483648
  %1045 = xla_tuple %v1044
  %s1046 = scalar_lea.vmem %s1, 832
  %1047 = vst [vmem:[%s1046] sm:$0xff] %v1044
  %s1048 = scalar_lea.vmem %s0, 856
  %v1049 = vld [vmem:[%s1048] sm:$0xff]
  %1050 = xla_tuple %v1049
  %1051 = xla_tuple %1050
  %v1052 = vxor.u32 %v1049, 2147483648
  %1053 = xla_tuple %v1052
  %s1054 = scalar_lea.vmem %s1, 856
  %1055 = vst [vmem:[%s1054] sm:$0xff] %v1052
  %s1056 = scalar_lea.vmem %s0, 880
  %v1057 = vld [vmem:[%s1056] sm:$0xff]
  %1058 = xla_tuple %v1057
  %1059 = xla_tuple %1058
  %v1060 = vxor.u32 %v1057, 2147483648
  %1061 = xla_tuple %v1060
  %s1062 = scalar_lea.vmem %s1, 880
  %1063 = vst [vmem:[%s1062] sm:$0xff] %v1060
  %s1064 = scalar_lea.vmem %s0, 904
  %v1065 = vld [vmem:[%s1064] sm:$0xff]
  %1066 = xla_tuple %v1065
  %1067 = xla_tuple %1066
  %v1068 = vxor.u32 %v1065, 2147483648
  %1069 = xla_tuple %v1068
  %s1070 = scalar_lea.vmem %s1, 904
  %1071 = vst [vmem:[%s1070] sm:$0xff] %v1068
  %s1072 = scalar_lea.vmem %s0, 928
  %v1073 = vld [vmem:[%s1072] sm:$0xff]
  %1074 = xla_tuple %v1073
  %1075 = xla_tuple %1074
  %v1076 = vxor.u32 %v1073, 2147483648
  %1077 = xla_tuple %v1076
  %s1078 = scalar_lea.vmem %s1, 928
  %1079 = vst [vmem:[%s1078] sm:$0xff] %v1076
  %s1080 = scalar_lea.vmem %s0, 952
  %v1081 = vld [vmem:[%s1080] sm:$0xff]
  %1082 = xla_tuple %v1081
  %1083 = xla_tuple %1082
  %v1084 = vxor.u32 %v1081, 2147483648
  %1085 = xla_tuple %v1084
  %s1086 = scalar_lea.vmem %s1, 952
  %1087 = vst [vmem:[%s1086] sm:$0xff] %v1084
  %s1088 = scalar_lea.vmem %s0, 976
  %v1089 = vld [vmem:[%s1088] sm:$0xff]
  %1090 = xla_tuple %v1089
  %1091 = xla_tuple %1090
  %v1092 = vxor.u32 %v1089, 2147483648
  %1093 = xla_tuple %v1092
  %s1094 = scalar_lea.vmem %s1, 976
  %1095 = vst [vmem:[%s1094] sm:$0xff] %v1092
  %s1096 = scalar_lea.vmem %s0, 1000
  %v1097 = vld [vmem:[%s1096] sm:$0xff]
  %1098 = xla_tuple %v1097
  %1099 = xla_tuple %1098
  %v1100 = vxor.u32 %v1097, 2147483648
  %1101 = xla_tuple %v1100
  %s1102 = scalar_lea.vmem %s1, 1000
  %1103 = vst [vmem:[%s1102] sm:$0xff] %v1100
  %s1104 = scalar_lea.vmem %s0, 1024
  %v1105 = vld [vmem:[%s1104] sm:$0xff]
  %1106 = xla_tuple %v1105
  %1107 = xla_tuple %1106
  %v1108 = vxor.u32 %v1105, 2147483648
  %1109 = xla_tuple %v1108
  %s1110 = scalar_lea.vmem %s1, 1024
  %1111 = vst [vmem:[%s1110] sm:$0xff] %v1108
  %s1112 = scalar_lea.vmem %s0, 1048
  %v1113 = vld [vmem:[%s1112] sm:$0xff]
  %1114 = xla_tuple %v1113
  %1115 = xla_tuple %1114
  %v1116 = vxor.u32 %v1113, 2147483648
  %1117 = xla_tuple %v1116
  %s1118 = scalar_lea.vmem %s1, 1048
  %1119 = vst [vmem:[%s1118] sm:$0xff] %v1116
  %s1120 = scalar_lea.vmem %s0, 1072
  %v1121 = vld [vmem:[%s1120] sm:$0xff]
  %1122 = xla_tuple %v1121
  %1123 = xla_tuple %1122
  %v1124 = vxor.u32 %v1121, 2147483648
  %1125 = xla_tuple %v1124
  %s1126 = scalar_lea.vmem %s1, 1072
  %1127 = vst [vmem:[%s1126] sm:$0xff] %v1124
  %s1128 = scalar_lea.vmem %s0, 1096
  %v1129 = vld [vmem:[%s1128] sm:$0xff]
  %1130 = xla_tuple %v1129
  %1131 = xla_tuple %1130
  %v1132 = vxor.u32 %v1129, 2147483648
  %1133 = xla_tuple %v1132
  %s1134 = scalar_lea.vmem %s1, 1096
  %1135 = vst [vmem:[%s1134] sm:$0xff] %v1132
  %s1136 = scalar_lea.vmem %s0, 1120
  %v1137 = vld [vmem:[%s1136] sm:$0xff]
  %1138 = xla_tuple %v1137
  %1139 = xla_tuple %1138
  %v1140 = vxor.u32 %v1137, 2147483648
  %1141 = xla_tuple %v1140
  %s1142 = scalar_lea.vmem %s1, 1120
  %1143 = vst [vmem:[%s1142] sm:$0xff] %v1140
  %s1144 = scalar_lea.vmem %s0, 1144
  %v1145 = vld [vmem:[%s1144] sm:$0xff]
  %1146 = xla_tuple %v1145
  %1147 = xla_tuple %1146
  %v1148 = vxor.u32 %v1145, 2147483648
  %1149 = xla_tuple %v1148
  %s1150 = scalar_lea.vmem %s1, 1144
  %1151 = vst [vmem:[%s1150] sm:$0xff] %v1148

// kernel: neg.2
$region0: #{neg.2}
  #allocation2 [shape = 's32[1]{0}', space=sflag, size = 0x4, scoped, tag = 'scoped memory for neg.2']
  %s0 = inlined_call_operand.hbm [shape: f32[384,384], index: 0, kind: input, shape index: {}]
  %s1 = inlined_call_operand.vmem [shape: f32[384,384], index: 1, kind: output, shape index: {}]
  $region1: #{neg.2} parent=0
    #allocation0 [shape = 'u8[589824]{0}', space=vmem, size = 0x90000, scoped, tag = 'operand span for operand 0']
    #allocation1 [shape = 's32[1]{0}', space=sflag, size = 0x4, scoped, tag = 'scoped memory for neg.2']
    %2 = vsyncpa [#allocation1], 0
    %s4 = ssub.s32 18432, 18432
    %5 = vsyncadd [#allocation1], %s4
    %s6 = sshll.u32 [#allocation0], 4
    %s7 = int_to_ptr.vmem [resolvable:$true] %s6
    %12 = dma.hbm_to_vmem [thread:$0]  %s0, 18432, %s7, [#allocation1], 384, 384, 24
    %13 = dma.done [#allocation1], 18432
    %v14 = vld [vmem:[#allocation0] sm:$0xff]
    %15 = xla_tuple %v14
    %16 = xla_tuple %15
    %v17 = vxor.u32 %v14, 2147483648
    %18 = xla_tuple %v17
    %19 = vst [vmem:[%s1] sm:$0xff] %v17
    %s20 = scalar_lea.vmem [#allocation0], 24
    %v21 = vld [vmem:[%s20] sm:$0xff]
    %22 = xla_tuple %v21
    %23 = xla_tuple %22
    %v24 = vxor.u32 %v21, 2147483648
    %25 = xla_tuple %v24
    %s26 = scalar_lea.vmem %s1, 24
    %27 = vst [vmem:[%s26] sm:$0xff] %v24
    %s28 = scalar_lea.vmem [#allocation0], 48
    %v29 = vld [vmem:[%s28] sm:$0xff]
    %30 = xla_tuple %v29
    %31 = xla_tuple %30
    %v32 = vxor.u32 %v29, 2147483648
    %33 = xla_tuple %v32
    %s34 = scalar_lea.vmem %s1, 48
    %35 = vst [vmem:[%s34] sm:$0xff] %v32
    %s36 = scalar_lea.vmem [#allocation0], 72
    %v37 = vld [vmem:[%s36] sm:$0xff]
    %38 = xla_tuple %v37
    %39 = xla_tuple %38
    %v40 = vxor.u32 %v37, 2147483648
    %41 = xla_tuple %v40
    %s42 = scalar_lea.vmem %s1, 72
    %43 = vst [vmem:[%s42] sm:$0xff] %v40
    %s44 = scalar_lea.vmem [#allocation0], 96
    %v45 = vld [vmem:[%s44] sm:$0xff]
    %46 = xla_tuple %v45
    %47 = xla_tuple %46
    %v48 = vxor.u32 %v45, 2147483648
    %49 = xla_tuple %v48
    %s50 = scalar_lea.vmem %s1, 96
    %51 = vst [vmem:[%s50] sm:$0xff] %v48
    %s52 = scalar_lea.vmem [#allocation0], 120
    %v53 = vld [vmem:[%s52] sm:$0xff]
    %54 = xla_tuple %v53
    %55 = xla_tuple %54
    %v56 = vxor.u32 %v53, 2147483648
    %57 = xla_tuple %v56
    %s58 = scalar_lea.vmem %s1, 120
    %59 = vst [vmem:[%s58] sm:$0xff] %v56
    %s60 = scalar_lea.vmem [#allocation0], 144
    %v61 = vld [vmem:[%s60] sm:$0xff]
    %62 = xla_tuple %v61
    %63 = xla_tuple %62
    %v64 = vxor.u32 %v61, 2147483648
    %65 = xla_tuple %v64
    %s66 = scalar_lea.vmem %s1, 144
    %67 = vst [vmem:[%s66] sm:$0xff] %v64
    %s68 = scalar_lea.vmem [#allocation0], 168
    %v69 = vld [vmem:[%s68] sm:$0xff]
    %70 = xla_tuple %v69
    %71 = xla_tuple %70
    %v72 = vxor.u32 %v69, 2147483648
    %73 = xla_tuple %v72
    %s74 = scalar_lea.vmem %s1, 168
    %75 = vst [vmem:[%s74] sm:$0xff] %v72
    %s76 = scalar_lea.vmem [#allocation0], 192
    %v77 = vld [vmem:[%s76] sm:$0xff]
    %78 = xla_tuple %v77
    %79 = xla_tuple %78
    %v80 = vxor.u32 %v77, 2147483648
    %81 = xla_tuple %v80
    %s82 = scalar_lea.vmem %s1, 192
    %83 = vst [vmem:[%s82] sm:$0xff] %v80
    %s84 = scalar_lea.vmem [#allocation0], 216
    %v85 = vld [vmem:[%s84] sm:$0xff]
    %86 = xla_tuple %v85
    %87 = xla_tuple %86
    %v88 = vxor.u32 %v85, 2147483648
    %89 = xla_tuple %v88
    %s90 = scalar_lea.vmem %s1, 216
    %91 = vst [vmem:[%s90] sm:$0xff] %v88
    %s92 = scalar_lea.vmem [#allocation0], 240
    %v93 = vld [vmem:[%s92] sm:$0xff]
    %94 = xla_tuple %v93
    %95 = xla_tuple %94
    %v96 = vxor.u32 %v93, 2147483648
    %97 = xla_tuple %v96
    %s98 = scalar_lea.vmem %s1, 240
    %99 = vst [vmem:[%s98] sm:$0xff] %v96
    %s100 = scalar_lea.vmem [#allocation0], 264
    %v101 = vld [vmem:[%s100] sm:$0xff]
    %102 = xla_tuple %v101
    %103 = xla_tuple %102
    %v104 = vxor.u32 %v101, 2147483648
    %105 = xla_tuple %v104
    %s106 = scalar_lea.vmem %s1, 264
    %107 = vst [vmem:[%s106] sm:$0xff] %v104
    %s108 = scalar_lea.vmem [#allocation0], 288
    %v109 = vld [vmem:[%s108] sm:$0xff]
    %110 = xla_tuple %v109
    %111 = xla_tuple %110
    %v112 = vxor.u32 %v109, 2147483648
    %113 = xla_tuple %v112
    %s114 = scalar_lea.vmem %s1, 288
    %115 = vst [vmem:[%s114] sm:$0xff] %v112
    %s116 = scalar_lea.vmem [#allocation0], 312
    %v117 = vld [vmem:[%s116] sm:$0xff]
    %118 = xla_tuple %v117
    %119 = xla_tuple %118
    %v120 = vxor.u32 %v117, 2147483648
    %121 = xla_tuple %v120
    %s122 = scalar_lea.vmem %s1, 312
    %123 = vst [vmem:[%s122] sm:$0xff] %v120
    %s124 = scalar_lea.vmem [#allocation0], 336
    %v125 = vld [vmem:[%s124] sm:$0xff]
    %126 = xla_tuple %v125
    %127 = xla_tuple %126
    %v128 = vxor.u32 %v125, 2147483648
    %129 = xla_tuple %v128
    %s130 = scalar_lea.vmem %s1, 336
    %131 = vst [vmem:[%s130] sm:$0xff] %v128
    %s132 = scalar_lea.vmem [#allocation0], 360
    %v133 = vld [vmem:[%s132] sm:$0xff]
    %134 = xla_tuple %v133
    %135 = xla_tuple %134
    %v136 = vxor.u32 %v133, 2147483648
    %137 = xla_tuple %v136
    %s138 = scalar_lea.vmem %s1, 360
    %139 = vst [vmem:[%s138] sm:$0xff] %v136
    %s140 = scalar_lea.vmem [#allocation0], 384
    %v141 = vld [vmem:[%s140] sm:$0xff]
    %142 = xla_tuple %v141
    %143 = xla_tuple %142
    %v144 = vxor.u32 %v141, 2147483648
    %145 = xla_tuple %v144
    %s146 = scalar_lea.vmem %s1, 384
    %147 = vst [vmem:[%s146] sm:$0xff] %v144
    %s148 = scalar_lea.vmem [#allocation0], 408
    %v149 = vld [vmem:[%s148] sm:$0xff]
    %150 = xla_tuple %v149
    %151 = xla_tuple %150
    %v152 = vxor.u32 %v149, 2147483648
    %153 = xla_tuple %v152
    %s154 = scalar_lea.vmem %s1, 408
    %155 = vst [vmem:[%s154] sm:$0xff] %v152
    %s156 = scalar_lea.vmem [#allocation0], 432
    %v157 = vld [vmem:[%s156] sm:$0xff]
    %158 = xla_tuple %v157
    %159 = xla_tuple %158
    %v160 = vxor.u32 %v157, 2147483648
    %161 = xla_tuple %v160
    %s162 = scalar_lea.vmem %s1, 432
    %163 = vst [vmem:[%s162] sm:$0xff] %v160
    %s164 = scalar_lea.vmem [#allocation0], 456
    %v165 = vld [vmem:[%s164] sm:$0xff]
    %166 = xla_tuple %v165
    %167 = xla_tuple %166
    %v168 = vxor.u32 %v165, 2147483648
    %169 = xla_tuple %v168
    %s170 = scalar_lea.vmem %s1, 456
    %171 = vst [vmem:[%s170] sm:$0xff] %v168
    %s172 = scalar_lea.vmem [#allocation0], 480
    %v173 = vld [vmem:[%s172] sm:$0xff]
    %174 = xla_tuple %v173
    %175 = xla_tuple %174
    %v176 = vxor.u32 %v173, 2147483648
    %177 = xla_tuple %v176
    %s178 = scalar_lea.vmem %s1, 480
    %179 = vst [vmem:[%s178] sm:$0xff] %v176
    %s180 = scalar_lea.vmem [#allocation0], 504
    %v181 = vld [vmem:[%s180] sm:$0xff]
    %182 = xla_tuple %v181
    %183 = xla_tuple %182
    %v184 = vxor.u32 %v181, 2147483648
    %185 = xla_tuple %v184
    %s186 = scalar_lea.vmem %s1, 504
    %187 = vst [vmem:[%s186] sm:$0xff] %v184
    %s188 = scalar_lea.vmem [#allocation0], 528
    %v189 = vld [vmem:[%s188] sm:$0xff]
    %190 = xla_tuple %v189
    %191 = xla_tuple %190
    %v192 = vxor.u32 %v189, 2147483648
    %193 = xla_tuple %v192
    %s194 = scalar_lea.vmem %s1, 528
    %195 = vst [vmem:[%s194] sm:$0xff] %v192
    %s196 = scalar_lea.vmem [#allocation0], 552
    %v197 = vld [vmem:[%s196] sm:$0xff]
    %198 = xla_tuple %v197
    %199 = xla_tuple %198
    %v200 = vxor.u32 %v197, 2147483648
    %201 = xla_tuple %v200
    %s202 = scalar_lea.vmem %s1, 552
    %203 = vst [vmem:[%s202] sm:$0xff] %v200
    %s204 = scalar_lea.vmem [#allocation0], 576
    %v205 = vld [vmem:[%s204] sm:$0xff]
    %206 = xla_tuple %v205
    %207 = xla_tuple %206
    %v208 = vxor.u32 %v205, 2147483648
    %209 = xla_tuple %v208
    %s210 = scalar_lea.vmem %s1, 576
    %211 = vst [vmem:[%s210] sm:$0xff] %v208
    %s212 = scalar_lea.vmem [#allocation0], 600
    %v213 = vld [vmem:[%s212] sm:$0xff]
    %214 = xla_tuple %v213
    %215 = xla_tuple %214
    %v216 = vxor.u32 %v213, 2147483648
    %217 = xla_tuple %v216
    %s218 = scalar_lea.vmem %s1, 600
    %219 = vst [vmem:[%s218] sm:$0xff] %v216
    %s220 = scalar_lea.vmem [#allocation0], 624
    %v221 = vld [vmem:[%s220] sm:$0xff]
    %222 = xla_tuple %v221
    %223 = xla_tuple %222
    %v224 = vxor.u32 %v221, 2147483648
    %225 = xla_tuple %v224
    %s226 = scalar_lea.vmem %s1, 624
    %227 = vst [vmem:[%s226] sm:$0xff] %v224
    %s228 = scalar_lea.vmem [#allocation0], 648
    %v229 = vld [vmem:[%s228] sm:$0xff]
    %230 = xla_tuple %v229
    %231 = xla_tuple %230
    %v232 = vxor.u32 %v229, 2147483648
    %233 = xla_tuple %v232
    %s234 = scalar_lea.vmem %s1, 648
    %235 = vst [vmem:[%s234] sm:$0xff] %v232
    %s236 = scalar_lea.vmem [#allocation0], 672
    %v237 = vld [vmem:[%s236] sm:$0xff]
    %238 = xla_tuple %v237
    %239 = xla_tuple %238
    %v240 = vxor.u32 %v237, 2147483648
    %241 = xla_tuple %v240
    %s242 = scalar_lea.vmem %s1, 672
    %243 = vst [vmem:[%s242] sm:$0xff] %v240
    %s244 = scalar_lea.vmem [#allocation0], 696
    %v245 = vld [vmem:[%s244] sm:$0xff]
    %246 = xla_tuple %v245
    %247 = xla_tuple %246
    %v248 = vxor.u32 %v245, 2147483648
    %249 = xla_tuple %v248
    %s250 = scalar_lea.vmem %s1, 696
    %251 = vst [vmem:[%s250] sm:$0xff] %v248
    %s252 = scalar_lea.vmem [#allocation0], 720
    %v253 = vld [vmem:[%s252] sm:$0xff]
    %254 = xla_tuple %v253
    %255 = xla_tuple %254
    %v256 = vxor.u32 %v253, 2147483648
    %257 = xla_tuple %v256
    %s258 = scalar_lea.vmem %s1, 720
    %259 = vst [vmem:[%s258] sm:$0xff] %v256
    %s260 = scalar_lea.vmem [#allocation0], 744
    %v261 = vld [vmem:[%s260] sm:$0xff]
    %262 = xla_tuple %v261
    %263 = xla_tuple %262
    %v264 = vxor.u32 %v261, 2147483648
    %265 = xla_tuple %v264
    %s266 = scalar_lea.vmem %s1, 744
    %267 = vst [vmem:[%s266] sm:$0xff] %v264
    %s268 = scalar_lea.vmem [#allocation0], 768
    %v269 = vld [vmem:[%s268] sm:$0xff]
    %270 = xla_tuple %v269
    %271 = xla_tuple %270
    %v272 = vxor.u32 %v269, 2147483648
    %273 = xla_tuple %v272
    %s274 = scalar_lea.vmem %s1, 768
    %275 = vst [vmem:[%s274] sm:$0xff] %v272
    %s276 = scalar_lea.vmem [#allocation0], 792
    %v277 = vld [vmem:[%s276] sm:$0xff]
    %278 = xla_tuple %v277
    %279 = xla_tuple %278
    %v280 = vxor.u32 %v277, 2147483648
    %281 = xla_tuple %v280
    %s282 = scalar_lea.vmem %s1, 792
    %283 = vst [vmem:[%s282] sm:$0xff] %v280
    %s284 = scalar_lea.vmem [#allocation0], 816
    %v285 = vld [vmem:[%s284] sm:$0xff]
    %286 = xla_tuple %v285
    %287 = xla_tuple %286
    %v288 = vxor.u32 %v285, 2147483648
    %289 = xla_tuple %v288
    %s290 = scalar_lea.vmem %s1, 816
    %291 = vst [vmem:[%s290] sm:$0xff] %v288
    %s292 = scalar_lea.vmem [#allocation0], 840
    %v293 = vld [vmem:[%s292] sm:$0xff]
    %294 = xla_tuple %v293
    %295 = xla_tuple %294
    %v296 = vxor.u32 %v293, 2147483648
    %297 = xla_tuple %v296
    %s298 = scalar_lea.vmem %s1, 840
    %299 = vst [vmem:[%s298] sm:$0xff] %v296
    %s300 = scalar_lea.vmem [#allocation0], 864
    %v301 = vld [vmem:[%s300] sm:$0xff]
    %302 = xla_tuple %v301
    %303 = xla_tuple %302
    %v304 = vxor.u32 %v301, 2147483648
    %305 = xla_tuple %v304
    %s306 = scalar_lea.vmem %s1, 864
    %307 = vst [vmem:[%s306] sm:$0xff] %v304
    %s308 = scalar_lea.vmem [#allocation0], 888
    %v309 = vld [vmem:[%s308] sm:$0xff]
    %310 = xla_tuple %v309
    %311 = xla_tuple %310
    %v312 = vxor.u32 %v309, 2147483648
    %313 = xla_tuple %v312
    %s314 = scalar_lea.vmem %s1, 888
    %315 = vst [vmem:[%s314] sm:$0xff] %v312
    %s316 = scalar_lea.vmem [#allocation0], 912
    %v317 = vld [vmem:[%s316] sm:$0xff]
    %318 = xla_tuple %v317
    %319 = xla_tuple %318
    %v320 = vxor.u32 %v317, 2147483648
    %321 = xla_tuple %v320
    %s322 = scalar_lea.vmem %s1, 912
    %323 = vst [vmem:[%s322] sm:$0xff] %v320
    %s324 = scalar_lea.vmem [#allocation0], 936
    %v325 = vld [vmem:[%s324] sm:$0xff]
    %326 = xla_tuple %v325
    %327 = xla_tuple %326
    %v328 = vxor.u32 %v325, 2147483648
    %329 = xla_tuple %v328
    %s330 = scalar_lea.vmem %s1, 936
    %331 = vst [vmem:[%s330] sm:$0xff] %v328
    %s332 = scalar_lea.vmem [#allocation0], 960
    %v333 = vld [vmem:[%s332] sm:$0xff]
    %334 = xla_tuple %v333
    %335 = xla_tuple %334
    %v336 = vxor.u32 %v333, 2147483648
    %337 = xla_tuple %v336
    %s338 = scalar_lea.vmem %s1, 960
    %339 = vst [vmem:[%s338] sm:$0xff] %v336
    %s340 = scalar_lea.vmem [#allocation0], 984
    %v341 = vld [vmem:[%s340] sm:$0xff]
    %342 = xla_tuple %v341
    %343 = xla_tuple %342
    %v344 = vxor.u32 %v341, 2147483648
    %345 = xla_tuple %v344
    %s346 = scalar_lea.vmem %s1, 984
    %347 = vst [vmem:[%s346] sm:$0xff] %v344
    %s348 = scalar_lea.vmem [#allocation0], 1008
    %v349 = vld [vmem:[%s348] sm:$0xff]
    %350 = xla_tuple %v349
    %351 = xla_tuple %350
    %v352 = vxor.u32 %v349, 2147483648
    %353 = xla_tuple %v352
    %s354 = scalar_lea.vmem %s1, 1008
    %355 = vst [vmem:[%s354] sm:$0xff] %v352
    %s356 = scalar_lea.vmem [#allocation0], 1032
    %v357 = vld [vmem:[%s356] sm:$0xff]
    %358 = xla_tuple %v357
    %359 = xla_tuple %358
    %v360 = vxor.u32 %v357, 2147483648
    %361 = xla_tuple %v360
    %s362 = scalar_lea.vmem %s1, 1032
    %363 = vst [vmem:[%s362] sm:$0xff] %v360
    %s364 = scalar_lea.vmem [#allocation0], 1056
    %v365 = vld [vmem:[%s364] sm:$0xff]
    %366 = xla_tuple %v365
    %367 = xla_tuple %366
    %v368 = vxor.u32 %v365, 2147483648
    %369 = xla_tuple %v368
    %s370 = scalar_lea.vmem %s1, 1056
    %371 = vst [vmem:[%s370] sm:$0xff] %v368
    %s372 = scalar_lea.vmem [#allocation0], 1080
    %v373 = vld [vmem:[%s372] sm:$0xff]
    %374 = xla_tuple %v373
    %375 = xla_tuple %374
    %v376 = vxor.u32 %v373, 2147483648
    %377 = xla_tuple %v376
    %s378 = scalar_lea.vmem %s1, 1080
    %379 = vst [vmem:[%s378] sm:$0xff] %v376
    %s380 = scalar_lea.vmem [#allocation0], 1104
    %v381 = vld [vmem:[%s380] sm:$0xff]
    %382 = xla_tuple %v381
    %383 = xla_tuple %382
    %v384 = vxor.u32 %v381, 2147483648
    %385 = xla_tuple %v384
    %s386 = scalar_lea.vmem %s1, 1104
    %387 = vst [vmem:[%s386] sm:$0xff] %v384
    %s388 = scalar_lea.vmem [#allocation0], 1128
    %v389 = vld [vmem:[%s388] sm:$0xff]
    %390 = xla_tuple %v389
    %391 = xla_tuple %390
    %v392 = vxor.u32 %v389, 2147483648
    %393 = xla_tuple %v392
    %s394 = scalar_lea.vmem %s1, 1128
    %395 = vst [vmem:[%s394] sm:$0xff] %v392
    %s396 = scalar_lea.vmem [#allocation0], 8
    %v397 = vld [vmem:[%s396] sm:$0xff]
    %398 = xla_tuple %v397
    %399 = xla_tuple %398
    %v400 = vxor.u32 %v397, 2147483648
    %401 = xla_tuple %v400
    %s402 = scalar_lea.vmem %s1, 8
    %403 = vst [vmem:[%s402] sm:$0xff] %v400
    %s404 = scalar_lea.vmem [#allocation0], 32
    %v405 = vld [vmem:[%s404] sm:$0xff]
    %406 = xla_tuple %v405
    %407 = xla_tuple %406
    %v408 = vxor.u32 %v405, 2147483648
    %409 = xla_tuple %v408
    %s410 = scalar_lea.vmem %s1, 32
    %411 = vst [vmem:[%s410] sm:$0xff] %v408
    %s412 = scalar_lea.vmem [#allocation0], 56
    %v413 = vld [vmem:[%s412] sm:$0xff]
    %414 = xla_tuple %v413
    %415 = xla_tuple %414
    %v416 = vxor.u32 %v413, 2147483648
    %417 = xla_tuple %v416
    %s418 = scalar_lea.vmem %s1, 56
    %419 = vst [vmem:[%s418] sm:$0xff] %v416
    %s420 = scalar_lea.vmem [#allocation0], 80
    %v421 = vld [vmem:[%s420] sm:$0xff]
    %422 = xla_tuple %v421
    %423 = xla_tuple %422
    %v424 = vxor.u32 %v421, 2147483648
    %425 = xla_tuple %v424
    %s426 = scalar_lea.vmem %s1, 80
    %427 = vst [vmem:[%s426] sm:$0xff] %v424
    %s428 = scalar_lea.vmem [#allocation0], 104
    %v429 = vld [vmem:[%s428] sm:$0xff]
    %430 = xla_tuple %v429
    %431 = xla_tuple %430
    %v432 = vxor.u32 %v429, 2147483648
    %433 = xla_tuple %v432
    %s434 = scalar_lea.vmem %s1, 104
    %435 = vst [vmem:[%s434] sm:$0xff] %v432
    %s436 = scalar_lea.vmem [#allocation0], 128
    %v437 = vld [vmem:[%s436] sm:$0xff]
    %438 = xla_tuple %v437
    %439 = xla_tuple %438
    %v440 = vxor.u32 %v437, 2147483648
    %441 = xla_tuple %v440
    %s442 = scalar_lea.vmem %s1, 128
    %443 = vst [vmem:[%s442] sm:$0xff] %v440
    %s444 = scalar_lea.vmem [#allocation0], 152
    %v445 = vld [vmem:[%s444] sm:$0xff]
    %446 = xla_tuple %v445
    %447 = xla_tuple %446
    %v448 = vxor.u32 %v445, 2147483648
    %449 = xla_tuple %v448
    %s450 = scalar_lea.vmem %s1, 152
    %451 = vst [vmem:[%s450] sm:$0xff] %v448
    %s452 = scalar_lea.vmem [#allocation0], 176
    %v453 = vld [vmem:[%s452] sm:$0xff]
    %454 = xla_tuple %v453
    %455 = xla_tuple %454
    %v456 = vxor.u32 %v453, 2147483648
    %457 = xla_tuple %v456
    %s458 = scalar_lea.vmem %s1, 176
    %459 = vst [vmem:[%s458] sm:$0xff] %v456
    %s460 = scalar_lea.vmem [#allocation0], 200
    %v461 = vld [vmem:[%s460] sm:$0xff]
    %462 = xla_tuple %v461
    %463 = xla_tuple %462
    %v464 = vxor.u32 %v461, 2147483648
    %465 = xla_tuple %v464
    %s466 = scalar_lea.vmem %s1, 200
    %467 = vst [vmem:[%s466] sm:$0xff] %v464
    %s468 = scalar_lea.vmem [#allocation0], 224
    %v469 = vld [vmem:[%s468] sm:$0xff]
    %470 = xla_tuple %v469
    %471 = xla_tuple %470
    %v472 = vxor.u32 %v469, 2147483648
    %473 = xla_tuple %v472
    %s474 = scalar_lea.vmem %s1, 224
    %475 = vst [vmem:[%s474] sm:$0xff] %v472
    %s476 = scalar_lea.vmem [#allocation0], 248
    %v477 = vld [vmem:[%s476] sm:$0xff]
    %478 = xla_tuple %v477
    %479 = xla_tuple %478
    %v480 = vxor.u32 %v477, 2147483648
    %481 = xla_tuple %v480
    %s482 = scalar_lea.vmem %s1, 248
    %483 = vst [vmem:[%s482] sm:$0xff] %v480
    %s484 = scalar_lea.vmem [#allocation0], 272
    %v485 = vld [vmem:[%s484] sm:$0xff]
    %486 = xla_tuple %v485
    %487 = xla_tuple %486
    %v488 = vxor.u32 %v485, 2147483648
    %489 = xla_tuple %v488
    %s490 = scalar_lea.vmem %s1, 272
    %491 = vst [vmem:[%s490] sm:$0xff] %v488
    %s492 = scalar_lea.vmem [#allocation0], 296
    %v493 = vld [vmem:[%s492] sm:$0xff]
    %494 = xla_tuple %v493
    %495 = xla_tuple %494
    %v496 = vxor.u32 %v493, 2147483648
    %497 = xla_tuple %v496
    %s498 = scalar_lea.vmem %s1, 296
    %499 = vst [vmem:[%s498] sm:$0xff] %v496
    %s500 = scalar_lea.vmem [#allocation0], 320
    %v501 = vld [vmem:[%s500] sm:$0xff]
    %502 = xla_tuple %v501
    %503 = xla_tuple %502
    %v504 = vxor.u32 %v501, 2147483648
    %505 = xla_tuple %v504
    %s506 = scalar_lea.vmem %s1, 320
    %507 = vst [vmem:[%s506] sm:$0xff] %v504
    %s508 = scalar_lea.vmem [#allocation0], 344
    %v509 = vld [vmem:[%s508] sm:$0xff]
    %510 = xla_tuple %v509
    %511 = xla_tuple %510
    %v512 = vxor.u32 %v509, 2147483648
    %513 = xla_tuple %v512
    %s514 = scalar_lea.vmem %s1, 344
    %515 = vst [vmem:[%s514] sm:$0xff] %v512
    %s516 = scalar_lea.vmem [#allocation0], 368
    %v517 = vld [vmem:[%s516] sm:$0xff]
    %518 = xla_tuple %v517
    %519 = xla_tuple %518
    %v520 = vxor.u32 %v517, 2147483648
    %521 = xla_tuple %v520
    %s522 = scalar_lea.vmem %s1, 368
    %523 = vst [vmem:[%s522] sm:$0xff] %v520
    %s524 = scalar_lea.vmem [#allocation0], 392
    %v525 = vld [vmem:[%s524] sm:$0xff]
    %526 = xla_tuple %v525
    %527 = xla_tuple %526
    %v528 = vxor.u32 %v525, 2147483648
    %529 = xla_tuple %v528
    %s530 = scalar_lea.vmem %s1, 392
    %531 = vst [vmem:[%s530] sm:$0xff] %v528
    %s532 = scalar_lea.vmem [#allocation0], 416
    %v533 = vld [vmem:[%s532] sm:$0xff]
    %534 = xla_tuple %v533
    %535 = xla_tuple %534
    %v536 = vxor.u32 %v533, 2147483648
    %537 = xla_tuple %v536
    %s538 = scalar_lea.vmem %s1, 416
    %539 = vst [vmem:[%s538] sm:$0xff] %v536
    %s540 = scalar_lea.vmem [#allocation0], 440
    %v541 = vld [vmem:[%s540] sm:$0xff]
    %542 = xla_tuple %v541
    %543 = xla_tuple %542
    %v544 = vxor.u32 %v541, 2147483648
    %545 = xla_tuple %v544
    %s546 = scalar_lea.vmem %s1, 440
    %547 = vst [vmem:[%s546] sm:$0xff] %v544
    %s548 = scalar_lea.vmem [#allocation0], 464
    %v549 = vld [vmem:[%s548] sm:$0xff]
    %550 = xla_tuple %v549
    %551 = xla_tuple %550
    %v552 = vxor.u32 %v549, 2147483648
    %553 = xla_tuple %v552
    %s554 = scalar_lea.vmem %s1, 464
    %555 = vst [vmem:[%s554] sm:$0xff] %v552
    %s556 = scalar_lea.vmem [#allocation0], 488
    %v557 = vld [vmem:[%s556] sm:$0xff]
    %558 = xla_tuple %v557
    %559 = xla_tuple %558
    %v560 = vxor.u32 %v557, 2147483648
    %561 = xla_tuple %v560
    %s562 = scalar_lea.vmem %s1, 488
    %563 = vst [vmem:[%s562] sm:$0xff] %v560
    %s564 = scalar_lea.vmem [#allocation0], 512
    %v565 = vld [vmem:[%s564] sm:$0xff]
    %566 = xla_tuple %v565
    %567 = xla_tuple %566
    %v568 = vxor.u32 %v565, 2147483648
    %569 = xla_tuple %v568
    %s570 = scalar_lea.vmem %s1, 512
    %571 = vst [vmem:[%s570] sm:$0xff] %v568
    %s572 = scalar_lea.vmem [#allocation0], 536
    %v573 = vld [vmem:[%s572] sm:$0xff]
    %574 = xla_tuple %v573
    %575 = xla_tuple %574
    %v576 = vxor.u32 %v573, 2147483648
    %577 = xla_tuple %v576
    %s578 = scalar_lea.vmem %s1, 536
    %579 = vst [vmem:[%s578] sm:$0xff] %v576
    %s580 = scalar_lea.vmem [#allocation0], 560
    %v581 = vld [vmem:[%s580] sm:$0xff]
    %582 = xla_tuple %v581
    %583 = xla_tuple %582
    %v584 = vxor.u32 %v581, 2147483648
    %585 = xla_tuple %v584
    %s586 = scalar_lea.vmem %s1, 560
    %587 = vst [vmem:[%s586] sm:$0xff] %v584
    %s588 = scalar_lea.vmem [#allocation0], 584
    %v589 = vld [vmem:[%s588] sm:$0xff]
    %590 = xla_tuple %v589
    %591 = xla_tuple %590
    %v592 = vxor.u32 %v589, 2147483648
    %593 = xla_tuple %v592
    %s594 = scalar_lea.vmem %s1, 584
    %595 = vst [vmem:[%s594] sm:$0xff] %v592
    %s596 = scalar_lea.vmem [#allocation0], 608
    %v597 = vld [vmem:[%s596] sm:$0xff]
    %598 = xla_tuple %v597
    %599 = xla_tuple %598
    %v600 = vxor.u32 %v597, 2147483648
    %601 = xla_tuple %v600
    %s602 = scalar_lea.vmem %s1, 608
    %603 = vst [vmem:[%s602] sm:$0xff] %v600
    %s604 = scalar_lea.vmem [#allocation0], 632
    %v605 = vld [vmem:[%s604] sm:$0xff]
    %606 = xla_tuple %v605
    %607 = xla_tuple %606
    %v608 = vxor.u32 %v605, 2147483648
    %609 = xla_tuple %v608
    %s610 = scalar_lea.vmem %s1, 632
    %611 = vst [vmem:[%s610] sm:$0xff] %v608
    %s612 = scalar_lea.vmem [#allocation0], 656
    %v613 = vld [vmem:[%s612] sm:$0xff]
    %614 = xla_tuple %v613
    %615 = xla_tuple %614
    %v616 = vxor.u32 %v613, 2147483648
    %617 = xla_tuple %v616
    %s618 = scalar_lea.vmem %s1, 656
    %619 = vst [vmem:[%s618] sm:$0xff] %v616
    %s620 = scalar_lea.vmem [#allocation0], 680
    %v621 = vld [vmem:[%s620] sm:$0xff]
    %622 = xla_tuple %v621
    %623 = xla_tuple %622
    %v624 = vxor.u32 %v621, 2147483648
    %625 = xla_tuple %v624
    %s626 = scalar_lea.vmem %s1, 680
    %627 = vst [vmem:[%s626] sm:$0xff] %v624
    %s628 = scalar_lea.vmem [#allocation0], 704
    %v629 = vld [vmem:[%s628] sm:$0xff]
    %630 = xla_tuple %v629
    %631 = xla_tuple %630
    %v632 = vxor.u32 %v629, 2147483648
    %633 = xla_tuple %v632
    %s634 = scalar_lea.vmem %s1, 704
    %635 = vst [vmem:[%s634] sm:$0xff] %v632
    %s636 = scalar_lea.vmem [#allocation0], 728
    %v637 = vld [vmem:[%s636] sm:$0xff]
    %638 = xla_tuple %v637
    %639 = xla_tuple %638
    %v640 = vxor.u32 %v637, 2147483648
    %641 = xla_tuple %v640
    %s642 = scalar_lea.vmem %s1, 728
    %643 = vst [vmem:[%s642] sm:$0xff] %v640
    %s644 = scalar_lea.vmem [#allocation0], 752
    %v645 = vld [vmem:[%s644] sm:$0xff]
    %646 = xla_tuple %v645
    %647 = xla_tuple %646
    %v648 = vxor.u32 %v645, 2147483648
    %649 = xla_tuple %v648
    %s650 = scalar_lea.vmem %s1, 752
    %651 = vst [vmem:[%s650] sm:$0xff] %v648
    %s652 = scalar_lea.vmem [#allocation0], 776
    %v653 = vld [vmem:[%s652] sm:$0xff]
    %654 = xla_tuple %v653
    %655 = xla_tuple %654
    %v656 = vxor.u32 %v653, 2147483648
    %657 = xla_tuple %v656
    %s658 = scalar_lea.vmem %s1, 776
    %659 = vst [vmem:[%s658] sm:$0xff] %v656
    %s660 = scalar_lea.vmem [#allocation0], 800
    %v661 = vld [vmem:[%s660] sm:$0xff]
    %662 = xla_tuple %v661
    %663 = xla_tuple %662
    %v664 = vxor.u32 %v661, 2147483648
    %665 = xla_tuple %v664
    %s666 = scalar_lea.vmem %s1, 800
    %667 = vst [vmem:[%s666] sm:$0xff] %v664
    %s668 = scalar_lea.vmem [#allocation0], 824
    %v669 = vld [vmem:[%s668] sm:$0xff]
    %670 = xla_tuple %v669
    %671 = xla_tuple %670
    %v672 = vxor.u32 %v669, 2147483648
    %673 = xla_tuple %v672
    %s674 = scalar_lea.vmem %s1, 824
    %675 = vst [vmem:[%s674] sm:$0xff] %v672
    %s676 = scalar_lea.vmem [#allocation0], 848
    %v677 = vld [vmem:[%s676] sm:$0xff]
    %678 = xla_tuple %v677
    %679 = xla_tuple %678
    %v680 = vxor.u32 %v677, 2147483648
    %681 = xla_tuple %v680
    %s682 = scalar_lea.vmem %s1, 848
    %683 = vst [vmem:[%s682] sm:$0xff] %v680
    %s684 = scalar_lea.vmem [#allocation0], 872
    %v685 = vld [vmem:[%s684] sm:$0xff]
    %686 = xla_tuple %v685
    %687 = xla_tuple %686
    %v688 = vxor.u32 %v685, 2147483648
    %689 = xla_tuple %v688
    %s690 = scalar_lea.vmem %s1, 872
    %691 = vst [vmem:[%s690] sm:$0xff] %v688
    %s692 = scalar_lea.vmem [#allocation0], 896
    %v693 = vld [vmem:[%s692] sm:$0xff]
    %694 = xla_tuple %v693
    %695 = xla_tuple %694
    %v696 = vxor.u32 %v693, 2147483648
    %697 = xla_tuple %v696
    %s698 = scalar_lea.vmem %s1, 896
    %699 = vst [vmem:[%s698] sm:$0xff] %v696
    %s700 = scalar_lea.vmem [#allocation0], 920
    %v701 = vld [vmem:[%s700] sm:$0xff]
    %702 = xla_tuple %v701
    %703 = xla_tuple %702
    %v704 = vxor.u32 %v701, 2147483648
    %705 = xla_tuple %v704
    %s706 = scalar_lea.vmem %s1, 920
    %707 = vst [vmem:[%s706] sm:$0xff] %v704
    %s708 = scalar_lea.vmem [#allocation0], 944
    %v709 = vld [vmem:[%s708] sm:$0xff]
    %710 = xla_tuple %v709
    %711 = xla_tuple %710
    %v712 = vxor.u32 %v709, 2147483648
    %713 = xla_tuple %v712
    %s714 = scalar_lea.vmem %s1, 944
    %715 = vst [vmem:[%s714] sm:$0xff] %v712
    %s716 = scalar_lea.vmem [#allocation0], 968
    %v717 = vld [vmem:[%s716] sm:$0xff]
    %718 = xla_tuple %v717
    %719 = xla_tuple %718
    %v720 = vxor.u32 %v717, 2147483648
    %721 = xla_tuple %v720
    %s722 = scalar_lea.vmem %s1, 968
    %723 = vst [vmem:[%s722] sm:$0xff] %v720
    %s724 = scalar_lea.vmem [#allocation0], 992
    %v725 = vld [vmem:[%s724] sm:$0xff]
    %726 = xla_tuple %v725
    %727 = xla_tuple %726
    %v728 = vxor.u32 %v725, 2147483648
    %729 = xla_tuple %v728
    %s730 = scalar_lea.vmem %s1, 992
    %731 = vst [vmem:[%s730] sm:$0xff] %v728
    %s732 = scalar_lea.vmem [#allocation0], 1016
    %v733 = vld [vmem:[%s732] sm:$0xff]
    %734 = xla_tuple %v733
    %735 = xla_tuple %734
    %v736 = vxor.u32 %v733, 2147483648
    %737 = xla_tuple %v736
    %s738 = scalar_lea.vmem %s1, 1016
    %739 = vst [vmem:[%s738] sm:$0xff] %v736
    %s740 = scalar_lea.vmem [#allocation0], 1040
    %v741 = vld [vmem:[%s740] sm:$0xff]
    %742 = xla_tuple %v741
    %743 = xla_tuple %742
    %v744 = vxor.u32 %v741, 2147483648
    %745 = xla_tuple %v744
    %s746 = scalar_lea.vmem %s1, 1040
    %747 = vst [vmem:[%s746] sm:$0xff] %v744
    %s748 = scalar_lea.vmem [#allocation0], 1064
    %v749 = vld [vmem:[%s748] sm:$0xff]
    %750 = xla_tuple %v749
    %751 = xla_tuple %750
    %v752 = vxor.u32 %v749, 2147483648
    %753 = xla_tuple %v752
    %s754 = scalar_lea.vmem %s1, 1064
    %755 = vst [vmem:[%s754] sm:$0xff] %v752
    %s756 = scalar_lea.vmem [#allocation0], 1088
    %v757 = vld [vmem:[%s756] sm:$0xff]
    %758 = xla_tuple %v757
    %759 = xla_tuple %758
    %v760 = vxor.u32 %v757, 2147483648
    %761 = xla_tuple %v760
    %s762 = scalar_lea.vmem %s1, 1088
    %763 = vst [vmem:[%s762] sm:$0xff] %v760
    %s764 = scalar_lea.vmem [#allocation0], 1112
    %v765 = vld [vmem:[%s764] sm:$0xff]
    %766 = xla_tuple %v765
    %767 = xla_tuple %766
    %v768 = vxor.u32 %v765, 2147483648
    %769 = xla_tuple %v768
    %s770 = scalar_lea.vmem %s1, 1112
    %771 = vst [vmem:[%s770] sm:$0xff] %v768
    %s772 = scalar_lea.vmem [#allocation0], 1136
    %v773 = vld [vmem:[%s772] sm:$0xff]
    %774 = xla_tuple %v773
    %775 = xla_tuple %774
    %v776 = vxor.u32 %v773, 2147483648
    %777 = xla_tuple %v776
    %s778 = scalar_lea.vmem %s1, 1136
    %779 = vst [vmem:[%s778] sm:$0xff] %v776
    %s780 = scalar_lea.vmem [#allocation0], 16
    %v781 = vld [vmem:[%s780] sm:$0xff]
    %782 = xla_tuple %v781
    %783 = xla_tuple %782
    %v784 = vxor.u32 %v781, 2147483648
    %785 = xla_tuple %v784
    %s786 = scalar_lea.vmem %s1, 16
    %787 = vst [vmem:[%s786] sm:$0xff] %v784
    %s788 = scalar_lea.vmem [#allocation0], 40
    %v789 = vld [vmem:[%s788] sm:$0xff]
    %790 = xla_tuple %v789
    %791 = xla_tuple %790
    %v792 = vxor.u32 %v789, 2147483648
    %793 = xla_tuple %v792
    %s794 = scalar_lea.vmem %s1, 40
    %795 = vst [vmem:[%s794] sm:$0xff] %v792
    %s796 = scalar_lea.vmem [#allocation0], 64
    %v797 = vld [vmem:[%s796] sm:$0xff]
    %798 = xla_tuple %v797
    %799 = xla_tuple %798
    %v800 = vxor.u32 %v797, 2147483648
    %801 = xla_tuple %v800
    %s802 = scalar_lea.vmem %s1, 64
    %803 = vst [vmem:[%s802] sm:$0xff] %v800
    %s804 = scalar_lea.vmem [#allocation0], 88
    %v805 = vld [vmem:[%s804] sm:$0xff]
    %806 = xla_tuple %v805
    %807 = xla_tuple %806
    %v808 = vxor.u32 %v805, 2147483648
    %809 = xla_tuple %v808
    %s810 = scalar_lea.vmem %s1, 88
    %811 = vst [vmem:[%s810] sm:$0xff] %v808
    %s812 = scalar_lea.vmem [#allocation0], 112
    %v813 = vld [vmem:[%s812] sm:$0xff]
    %814 = xla_tuple %v813
    %815 = xla_tuple %814
    %v816 = vxor.u32 %v813, 2147483648
    %817 = xla_tuple %v816
    %s818 = scalar_lea.vmem %s1, 112
    %819 = vst [vmem:[%s818] sm:$0xff] %v816
    %s820 = scalar_lea.vmem [#allocation0], 136
    %v821 = vld [vmem:[%s820] sm:$0xff]
    %822 = xla_tuple %v821
    %823 = xla_tuple %822
    %v824 = vxor.u32 %v821, 2147483648
    %825 = xla_tuple %v824
    %s826 = scalar_lea.vmem %s1, 136
    %827 = vst [vmem:[%s826] sm:$0xff] %v824
    %s828 = scalar_lea.vmem [#allocation0], 160
    %v829 = vld [vmem:[%s828] sm:$0xff]
    %830 = xla_tuple %v829
    %831 = xla_tuple %830
    %v832 = vxor.u32 %v829, 2147483648
    %833 = xla_tuple %v832
    %s834 = scalar_lea.vmem %s1, 160
    %835 = vst [vmem:[%s834] sm:$0xff] %v832
    %s836 = scalar_lea.vmem [#allocation0], 184
    %v837 = vld [vmem:[%s836] sm:$0xff]
    %838 = xla_tuple %v837
    %839 = xla_tuple %838
    %v840 = vxor.u32 %v837, 2147483648
    %841 = xla_tuple %v840
    %s842 = scalar_lea.vmem %s1, 184
    %843 = vst [vmem:[%s842] sm:$0xff] %v840
    %s844 = scalar_lea.vmem [#allocation0], 208
    %v845 = vld [vmem:[%s844] sm:$0xff]
    %846 = xla_tuple %v845
    %847 = xla_tuple %846
    %v848 = vxor.u32 %v845, 2147483648
    %849 = xla_tuple %v848
    %s850 = scalar_lea.vmem %s1, 208
    %851 = vst [vmem:[%s850] sm:$0xff] %v848
    %s852 = scalar_lea.vmem [#allocation0], 232
    %v853 = vld [vmem:[%s852] sm:$0xff]
    %854 = xla_tuple %v853
    %855 = xla_tuple %854
    %v856 = vxor.u32 %v853, 2147483648
    %857 = xla_tuple %v856
    %s858 = scalar_lea.vmem %s1, 232
    %859 = vst [vmem:[%s858] sm:$0xff] %v856
    %s860 = scalar_lea.vmem [#allocation0], 256
    %v861 = vld [vmem:[%s860] sm:$0xff]
    %862 = xla_tuple %v861
    %863 = xla_tuple %862
    %v864 = vxor.u32 %v861, 2147483648
    %865 = xla_tuple %v864
    %s866 = scalar_lea.vmem %s1, 256
    %867 = vst [vmem:[%s866] sm:$0xff] %v864
    %s868 = scalar_lea.vmem [#allocation0], 280
    %v869 = vld [vmem:[%s868] sm:$0xff]
    %870 = xla_tuple %v869
    %871 = xla_tuple %870
    %v872 = vxor.u32 %v869, 2147483648
    %873 = xla_tuple %v872
    %s874 = scalar_lea.vmem %s1, 280
    %875 = vst [vmem:[%s874] sm:$0xff] %v872
    %s876 = scalar_lea.vmem [#allocation0], 304
    %v877 = vld [vmem:[%s876] sm:$0xff]
    %878 = xla_tuple %v877
    %879 = xla_tuple %878
    %v880 = vxor.u32 %v877, 2147483648
    %881 = xla_tuple %v880
    %s882 = scalar_lea.vmem %s1, 304
    %883 = vst [vmem:[%s882] sm:$0xff] %v880
    %s884 = scalar_lea.vmem [#allocation0], 328
    %v885 = vld [vmem:[%s884] sm:$0xff]
    %886 = xla_tuple %v885
    %887 = xla_tuple %886
    %v888 = vxor.u32 %v885, 2147483648
    %889 = xla_tuple %v888
    %s890 = scalar_lea.vmem %s1, 328
    %891 = vst [vmem:[%s890] sm:$0xff] %v888
    %s892 = scalar_lea.vmem [#allocation0], 352
    %v893 = vld [vmem:[%s892] sm:$0xff]
    %894 = xla_tuple %v893
    %895 = xla_tuple %894
    %v896 = vxor.u32 %v893, 2147483648
    %897 = xla_tuple %v896
    %s898 = scalar_lea.vmem %s1, 352
    %899 = vst [vmem:[%s898] sm:$0xff] %v896
    %s900 = scalar_lea.vmem [#allocation0], 376
    %v901 = vld [vmem:[%s900] sm:$0xff]
    %902 = xla_tuple %v901
    %903 = xla_tuple %902
    %v904 = vxor.u32 %v901, 2147483648
    %905 = xla_tuple %v904
    %s906 = scalar_lea.vmem %s1, 376
    %907 = vst [vmem:[%s906] sm:$0xff] %v904
    %s908 = scalar_lea.vmem [#allocation0], 400
    %v909 = vld [vmem:[%s908] sm:$0xff]
    %910 = xla_tuple %v909
    %911 = xla_tuple %910
    %v912 = vxor.u32 %v909, 2147483648
    %913 = xla_tuple %v912
    %s914 = scalar_lea.vmem %s1, 400
    %915 = vst [vmem:[%s914] sm:$0xff] %v912
    %s916 = scalar_lea.vmem [#allocation0], 424
    %v917 = vld [vmem:[%s916] sm:$0xff]
    %918 = xla_tuple %v917
    %919 = xla_tuple %918
    %v920 = vxor.u32 %v917, 2147483648
    %921 = xla_tuple %v920
    %s922 = scalar_lea.vmem %s1, 424
    %923 = vst [vmem:[%s922] sm:$0xff] %v920
    %s924 = scalar_lea.vmem [#allocation0], 448
    %v925 = vld [vmem:[%s924] sm:$0xff]
    %926 = xla_tuple %v925
    %927 = xla_tuple %926
    %v928 = vxor.u32 %v925, 2147483648
    %929 = xla_tuple %v928
    %s930 = scalar_lea.vmem %s1, 448
    %931 = vst [vmem:[%s930] sm:$0xff] %v928
    %s932 = scalar_lea.vmem [#allocation0], 472
    %v933 = vld [vmem:[%s932] sm:$0xff]
    %934 = xla_tuple %v933
    %935 = xla_tuple %934
    %v936 = vxor.u32 %v933, 2147483648
    %937 = xla_tuple %v936
    %s938 = scalar_lea.vmem %s1, 472
    %939 = vst [vmem:[%s938] sm:$0xff] %v936
    %s940 = scalar_lea.vmem [#allocation0], 496
    %v941 = vld [vmem:[%s940] sm:$0xff]
    %942 = xla_tuple %v941
    %943 = xla_tuple %942
    %v944 = vxor.u32 %v941, 2147483648
    %945 = xla_tuple %v944
    %s946 = scalar_lea.vmem %s1, 496
    %947 = vst [vmem:[%s946] sm:$0xff] %v944
    %s948 = scalar_lea.vmem [#allocation0], 520
    %v949 = vld [vmem:[%s948] sm:$0xff]
    %950 = xla_tuple %v949
    %951 = xla_tuple %950
    %v952 = vxor.u32 %v949, 2147483648
    %953 = xla_tuple %v952
    %s954 = scalar_lea.vmem %s1, 520
    %955 = vst [vmem:[%s954] sm:$0xff] %v952
    %s956 = scalar_lea.vmem [#allocation0], 544
    %v957 = vld [vmem:[%s956] sm:$0xff]
    %958 = xla_tuple %v957
    %959 = xla_tuple %958
    %v960 = vxor.u32 %v957, 2147483648
    %961 = xla_tuple %v960
    %s962 = scalar_lea.vmem %s1, 544
    %963 = vst [vmem:[%s962] sm:$0xff] %v960
    %s964 = scalar_lea.vmem [#allocation0], 568
    %v965 = vld [vmem:[%s964] sm:$0xff]
    %966 = xla_tuple %v965
    %967 = xla_tuple %966
    %v968 = vxor.u32 %v965, 2147483648
    %969 = xla_tuple %v968
    %s970 = scalar_lea.vmem %s1, 568
    %971 = vst [vmem:[%s970] sm:$0xff] %v968
    %s972 = scalar_lea.vmem [#allocation0], 592
    %v973 = vld [vmem:[%s972] sm:$0xff]
    %974 = xla_tuple %v973
    %975 = xla_tuple %974
    %v976 = vxor.u32 %v973, 2147483648
    %977 = xla_tuple %v976
    %s978 = scalar_lea.vmem %s1, 592
    %979 = vst [vmem:[%s978] sm:$0xff] %v976
    %s980 = scalar_lea.vmem [#allocation0], 616
    %v981 = vld [vmem:[%s980] sm:$0xff]
    %982 = xla_tuple %v981
    %983 = xla_tuple %982
    %v984 = vxor.u32 %v981, 2147483648
    %985 = xla_tuple %v984
    %s986 = scalar_lea.vmem %s1, 616
    %987 = vst [vmem:[%s986] sm:$0xff] %v984
    %s988 = scalar_lea.vmem [#allocation0], 640
    %v989 = vld [vmem:[%s988] sm:$0xff]
    %990 = xla_tuple %v989
    %991 = xla_tuple %990
    %v992 = vxor.u32 %v989, 2147483648
    %993 = xla_tuple %v992
    %s994 = scalar_lea.vmem %s1, 640
    %995 = vst [vmem:[%s994] sm:$0xff] %v992
    %s996 = scalar_lea.vmem [#allocation0], 664
    %v997 = vld [vmem:[%s996] sm:$0xff]
    %998 = xla_tuple %v997
    %999 = xla_tuple %998
    %v1000 = vxor.u32 %v997, 2147483648
    %1001 = xla_tuple %v1000
    %s1002 = scalar_lea.vmem %s1, 664
    %1003 = vst [vmem:[%s1002] sm:$0xff] %v1000
    %s1004 = scalar_lea.vmem [#allocation0], 688
    %v1005 = vld [vmem:[%s1004] sm:$0xff]
    %1006 = xla_tuple %v1005
    %1007 = xla_tuple %1006
    %v1008 = vxor.u32 %v1005, 2147483648
    %1009 = xla_tuple %v1008
    %s1010 = scalar_lea.vmem %s1, 688
    %1011 = vst [vmem:[%s1010] sm:$0xff] %v1008
    %s1012 = scalar_lea.vmem [#allocation0], 712
    %v1013 = vld [vmem:[%s1012] sm:$0xff]
    %1014 = xla_tuple %v1013
    %1015 = xla_tuple %1014
    %v1016 = vxor.u32 %v1013, 2147483648
    %1017 = xla_tuple %v1016
    %s1018 = scalar_lea.vmem %s1, 712
    %1019 = vst [vmem:[%s1018] sm:$0xff] %v1016
    %s1020 = scalar_lea.vmem [#allocation0], 736
    %v1021 = vld [vmem:[%s1020] sm:$0xff]
    %1022 = xla_tuple %v1021
    %1023 = xla_tuple %1022
    %v1024 = vxor.u32 %v1021, 2147483648
    %1025 = xla_tuple %v1024
    %s1026 = scalar_lea.vmem %s1, 736
    %1027 = vst [vmem:[%s1026] sm:$0xff] %v1024
    %s1028 = scalar_lea.vmem [#allocation0], 760
    %v1029 = vld [vmem:[%s1028] sm:$0xff]
    %1030 = xla_tuple %v1029
    %1031 = xla_tuple %1030
    %v1032 = vxor.u32 %v1029, 2147483648
    %1033 = xla_tuple %v1032
    %s1034 = scalar_lea.vmem %s1, 760
    %1035 = vst [vmem:[%s1034] sm:$0xff] %v1032
    %s1036 = scalar_lea.vmem [#allocation0], 784
    %v1037 = vld [vmem:[%s1036] sm:$0xff]
    %1038 = xla_tuple %v1037
    %1039 = xla_tuple %1038
    %v1040 = vxor.u32 %v1037, 2147483648
    %1041 = xla_tuple %v1040
    %s1042 = scalar_lea.vmem %s1, 784
    %1043 = vst [vmem:[%s1042] sm:$0xff] %v1040
    %s1044 = scalar_lea.vmem [#allocation0], 808
    %v1045 = vld [vmem:[%s1044] sm:$0xff]
    %1046 = xla_tuple %v1045
    %1047 = xla_tuple %1046
    %v1048 = vxor.u32 %v1045, 2147483648
    %1049 = xla_tuple %v1048
    %s1050 = scalar_lea.vmem %s1, 808
    %1051 = vst [vmem:[%s1050] sm:$0xff] %v1048
    %s1052 = scalar_lea.vmem [#allocation0], 832
    %v1053 = vld [vmem:[%s1052] sm:$0xff]
    %1054 = xla_tuple %v1053
    %1055 = xla_tuple %1054
    %v1056 = vxor.u32 %v1053, 2147483648
    %1057 = xla_tuple %v1056
    %s1058 = scalar_lea.vmem %s1, 832
    %1059 = vst [vmem:[%s1058] sm:$0xff] %v1056
    %s1060 = scalar_lea.vmem [#allocation0], 856
    %v1061 = vld [vmem:[%s1060] sm:$0xff]
    %1062 = xla_tuple %v1061
    %1063 = xla_tuple %1062
    %v1064 = vxor.u32 %v1061, 2147483648
    %1065 = xla_tuple %v1064
    %s1066 = scalar_lea.vmem %s1, 856
    %1067 = vst [vmem:[%s1066] sm:$0xff] %v1064
    %s1068 = scalar_lea.vmem [#allocation0], 880
    %v1069 = vld [vmem:[%s1068] sm:$0xff]
    %1070 = xla_tuple %v1069
    %1071 = xla_tuple %1070
    %v1072 = vxor.u32 %v1069, 2147483648
    %1073 = xla_tuple %v1072
    %s1074 = scalar_lea.vmem %s1, 880
    %1075 = vst [vmem:[%s1074] sm:$0xff] %v1072
    %s1076 = scalar_lea.vmem [#allocation0], 904
    %v1077 = vld [vmem:[%s1076] sm:$0xff]
    %1078 = xla_tuple %v1077
    %1079 = xla_tuple %1078
    %v1080 = vxor.u32 %v1077, 2147483648
    %1081 = xla_tuple %v1080
    %s1082 = scalar_lea.vmem %s1, 904
    %1083 = vst [vmem:[%s1082] sm:$0xff] %v1080
    %s1084 = scalar_lea.vmem [#allocation0], 928
    %v1085 = vld [vmem:[%s1084] sm:$0xff]
    %1086 = xla_tuple %v1085
    %1087 = xla_tuple %1086
    %v1088 = vxor.u32 %v1085, 2147483648
    %1089 = xla_tuple %v1088
    %s1090 = scalar_lea.vmem %s1, 928
    %1091 = vst [vmem:[%s1090] sm:$0xff] %v1088
    %s1092 = scalar_lea.vmem [#allocation0], 952
    %v1093 = vld [vmem:[%s1092] sm:$0xff]
    %1094 = xla_tuple %v1093
    %1095 = xla_tuple %1094
    %v1096 = vxor.u32 %v1093, 2147483648
    %1097 = xla_tuple %v1096
    %s1098 = scalar_lea.vmem %s1, 952
    %1099 = vst [vmem:[%s1098] sm:$0xff] %v1096
    %s1100 = scalar_lea.vmem [#allocation0], 976
    %v1101 = vld [vmem:[%s1100] sm:$0xff]
    %1102 = xla_tuple %v1101
    %1103 = xla_tuple %1102
    %v1104 = vxor.u32 %v1101, 2147483648
    %1105 = xla_tuple %v1104
    %s1106 = scalar_lea.vmem %s1, 976
    %1107 = vst [vmem:[%s1106] sm:$0xff] %v1104
    %s1108 = scalar_lea.vmem [#allocation0], 1000
    %v1109 = vld [vmem:[%s1108] sm:$0xff]
    %1110 = xla_tuple %v1109
    %1111 = xla_tuple %1110
    %v1112 = vxor.u32 %v1109, 2147483648
    %1113 = xla_tuple %v1112
    %s1114 = scalar_lea.vmem %s1, 1000
    %1115 = vst [vmem:[%s1114] sm:$0xff] %v1112
    %s1116 = scalar_lea.vmem [#allocation0], 1024
    %v1117 = vld [vmem:[%s1116] sm:$0xff]
    %1118 = xla_tuple %v1117
    %1119 = xla_tuple %1118
    %v1120 = vxor.u32 %v1117, 2147483648
    %1121 = xla_tuple %v1120
    %s1122 = scalar_lea.vmem %s1, 1024
    %1123 = vst [vmem:[%s1122] sm:$0xff] %v1120
    %s1124 = scalar_lea.vmem [#allocation0], 1048
    %v1125 = vld [vmem:[%s1124] sm:$0xff]
    %1126 = xla_tuple %v1125
    %1127 = xla_tuple %1126
    %v1128 = vxor.u32 %v1125, 2147483648
    %1129 = xla_tuple %v1128
    %s1130 = scalar_lea.vmem %s1, 1048
    %1131 = vst [vmem:[%s1130] sm:$0xff] %v1128
    %s1132 = scalar_lea.vmem [#allocation0], 1072
    %v1133 = vld [vmem:[%s1132] sm:$0xff]
    %1134 = xla_tuple %v1133
    %1135 = xla_tuple %1134
    %v1136 = vxor.u32 %v1133, 2147483648
    %1137 = xla_tuple %v1136
    %s1138 = scalar_lea.vmem %s1, 1072
    %1139 = vst [vmem:[%s1138] sm:$0xff] %v1136
    %s1140 = scalar_lea.vmem [#allocation0], 1096
    %v1141 = vld [vmem:[%s1140] sm:$0xff]
    %1142 = xla_tuple %v1141
    %1143 = xla_tuple %1142
    %v1144 = vxor.u32 %v1141, 2147483648
    %1145 = xla_tuple %v1144
    %s1146 = scalar_lea.vmem %s1, 1096
    %1147 = vst [vmem:[%s1146] sm:$0xff] %v1144
    %s1148 = scalar_lea.vmem [#allocation0], 1120
    %v1149 = vld [vmem:[%s1148] sm:$0xff]
    %1150 = xla_tuple %v1149
    %1151 = xla_tuple %1150
    %v1152 = vxor.u32 %v1149, 2147483648
    %1153 = xla_tuple %v1152
    %s1154 = scalar_lea.vmem %s1, 1120
    %1155 = vst [vmem:[%s1154] sm:$0xff] %v1152
    %s1156 = scalar_lea.vmem [#allocation0], 1144
    %v1157 = vld [vmem:[%s1156] sm:$0xff]
    %1158 = xla_tuple %v1157
    %1159 = xla_tuple %1158
    %v1160 = vxor.u32 %v1157, 2147483648
    %1161 = xla_tuple %v1160
    %s1162 = scalar_lea.vmem %s1, 1144
    %1163 = vst [vmem:[%s1162] sm:$0xff] %v1160
    %1164 = vsyncpa [#allocation1], 1

// kernel: pysim_mpmcloth_forward.1
$region0: #{pysim_mpmcloth_forward.1}
  #allocation0 [shape = 'u32[]', space=smem, size = 0x4, offset = 0x4, fixed_abs, tag = 'smem constant byte address 0x4 - core index']
  #allocation1 [shape = 'u32[144,128]{1,0:T(1,128)}', space=vmem, size = 0x12000, scoped, tag = 'internal scratch']
  #allocation2 [shape = 'f32[1]{0:T(128)S(6)}', space=smem, size = 0x200, scoped, tag = 'scoped memory for pysim_mpmcloth_forward.1']
  %s0 = inlined_call_operand.<no memory space> [shape: f32[1], index: 0, kind: input, shape index: {}]
  %s1 = inlined_call_operand.vmem [shape: f32[8,384], index: 1, kind: input, shape index: {}]
  %s2 = inlined_call_operand.vmem [shape: f32[8,384], index: 2, kind: input, shape index: {}]
  %s3 = inlined_call_operand.vmem [shape: f32[8,128], index: 3, kind: input, shape index: {}]
  %s4 = inlined_call_operand.vmem [shape: f32[8,384], index: 4, kind: input, shape index: {}]
  %s5 = inlined_call_operand.vmem [shape: f32[384,384], index: 5, kind: input, shape index: {}]
  %s6 = inlined_call_operand.vmem [shape: f32[384,384], index: 6, kind: input, shape index: {}]
  %s7 = inlined_call_operand.vmem [shape: f32[128,384], index: 7, kind: input, shape index: {}]
  %s8 = inlined_call_operand.vmem [shape: f32[1,384], index: 8, kind: input, shape index: {}]
  %s9 = inlined_call_operand.hbm [shape: f32[8,384], index: 9, kind: output, shape index: {0}]
  %s10 = inlined_call_operand.hbm [shape: f32[8,384], index: 10, kind: output, shape index: {1}]
  %11 = xla_tuple %s9, %s10
  %s12 = sld [smem:[#allocation0]]
  $region54: #{pysim_mpmcloth_forward.1} parent=0
    _
  %s14 = ssub.s32 1, %s12
  %s15 = scalar_select 0, %s14, %s12
  %16 = sst [smem:[#allocation2]] %s0
  $region1: #{pysim_mpmcloth_forward.1} parent=0
    #allocation3 [shape = 'u8[12288]{0}', space=vmem, size = 0x3000, scoped, tag = 'output window, operand 0, single buffered']
    #allocation4 [shape = 's32[1]{0}', space=sflag, size = 0x4, scoped, tag = 'scoped memory for pysim_mpmcloth_forward.1']
    #allocation5 [shape = 'u8[12288]{0}', space=vmem, size = 0x3000, scoped, tag = 'output window, operand 1, single buffered']
    #allocation6 [shape = 's32[1]{0}', space=sflag, size = 0x4, scoped, tag = 'scoped memory for pysim_mpmcloth_forward.1']
    %17 = vsyncpa [#allocation4], 0
    %18 = vsyncpa [#allocation6], 0
    // Predicated region
    $region2: #{pysim_mpmcloth_forward.1} parent=1 // pred_check
      _
    $region3: #{pysim_mpmcloth_forward.1} parent=1 // pred_check_branch
      %20 = sbr.rel (0) target = $region5
    $region4: #{pysim_mpmcloth_forward.1} parent=1 // pred_region
      _
    $region5: #{pysim_mpmcloth_forward.1} parent=1 // pred_fallthru
      _
    // Predicated region
    $region6: #{pysim_mpmcloth_forward.1} parent=1 // pred_check
      _
    $region7: #{pysim_mpmcloth_forward.1} parent=1 // pred_check_branch
      %22 = sbr.rel (0) target = $region9
    $region8: #{pysim_mpmcloth_forward.1} parent=1 // pred_region
      _
    $region9: #{pysim_mpmcloth_forward.1} parent=1 // pred_fallthru
      _
    // Predicated region
    $region10: #{pysim_mpmcloth_forward.1} parent=1 // pred_check
      _
    $region11: #{pysim_mpmcloth_forward.1} parent=1 // pred_check_branch
      %24 = sbr.rel (0) target = $region13
    $region12: #{pysim_mpmcloth_forward.1} parent=1 // pred_region
      _
    $region13: #{pysim_mpmcloth_forward.1} parent=1 // pred_fallthru
      _
    // Predicated region
    $region14: #{pysim_mpmcloth_forward.1} parent=1 // pred_check
      _
    $region15: #{pysim_mpmcloth_forward.1} parent=1 // pred_check_branch
      %26 = sbr.rel (0) target = $region17
    $region16: #{pysim_mpmcloth_forward.1} parent=1 // pred_region
      _
    $region17: #{pysim_mpmcloth_forward.1} parent=1 // pred_fallthru
      _
    // Predicated region
    $region18: #{pysim_mpmcloth_forward.1} parent=1 // pred_check
      _
    $region19: #{pysim_mpmcloth_forward.1} parent=1 // pred_check_branch
      %28 = sbr.rel (0) target = $region21
    $region20: #{pysim_mpmcloth_forward.1} parent=1 // pred_region
      _
    $region21: #{pysim_mpmcloth_forward.1} parent=1 // pred_fallthru
      _
    // Predicated region
    $region22: #{pysim_mpmcloth_forward.1} parent=1 // pred_check
      _
    $region23: #{pysim_mpmcloth_forward.1} parent=1 // pred_check_branch
      %30 = sbr.rel (0) target = $region25
    $region24: #{pysim_mpmcloth_forward.1} parent=1 // pred_region
      _
    $region25: #{pysim_mpmcloth_forward.1} parent=1 // pred_fallthru
      _
    // Predicated region
    $region26: #{pysim_mpmcloth_forward.1} parent=1 // pred_check
      _
    $region27: #{pysim_mpmcloth_forward.1} parent=1 // pred_check_branch
      %32 = sbr.rel (0) target = $region29
    $region28: #{pysim_mpmcloth_forward.1} parent=1 // pred_region
      _
    $region29: #{pysim_mpmcloth_forward.1} parent=1 // pred_fallthru
      _
    // Predicated region
    $region30: #{pysim_mpmcloth_forward.1} parent=1 // pred_check
      _
    $region31: #{pysim_mpmcloth_forward.1} parent=1 // pred_check_branch
      %34 = sbr.rel (0) target = $region33
    $region32: #{pysim_mpmcloth_forward.1} parent=1 // pred_region
      _
    $region33: #{pysim_mpmcloth_forward.1} parent=1 // pred_fallthru
      _
    // Predicated region
    $region34: #{pysim_mpmcloth_forward.1} parent=1 // pred_check
      _
    $region35: #{pysim_mpmcloth_forward.1} parent=1 // pred_check_branch
      %36 = sbr.rel (0) target = $region37
    $region36: #{pysim_mpmcloth_forward.1} parent=1 // pred_region
      _
    $region37: #{pysim_mpmcloth_forward.1} parent=1 // pred_fallthru
      _
    %s37 = sld [smem:[#allocation2]]
    %v38 = vld [vmem:[%s5] sm:$0xff]
    %v39 = vld [vmem:[%s5 + $0x8] sm:$0xff]
    %v40 = vld [vmem:[%s5 + $0x10] sm:$0xff]
    %v41 = vld [vmem:[%s5 + $0x18] sm:$0xff]
    %v42 = vld [vmem:[%s5 + $0x20] sm:$0xff]
    %v43 = vld [vmem:[%s5 + $0x28] sm:$0xff]
    %v44 = vld [vmem:[%s5 + $0x30] sm:$0xff]
    %v45 = vld [vmem:[%s5 + $0x38] sm:$0xff]
    %v46 = vld [vmem:[%s5 + $0x40] sm:$0xff]
    %v47 = vld [vmem:[%s5 + $0x48] sm:$0xff]
    %v48 = vld [vmem:[%s5 + $0x50] sm:$0xff]
    %v49 = vld [vmem:[%s5 + $0x58] sm:$0xff]
    %v50 = vld [vmem:[%s5 + $0x60] sm:$0xff]
    %v51 = vld [vmem:[%s5 + $0x68] sm:$0xff]
    %v52 = vld [vmem:[%s5 + $0x70] sm:$0xff]
    %v53 = vld [vmem:[%s5 + $0x78] sm:$0xff]
    %v54 = vld [vmem:[%s5 + $0x80] sm:$0xff]
    %v55 = vld [vmem:[%s5 + $0x88] sm:$0xff]
    %v56 = vld [vmem:[%s5 + $0x90] sm:$0xff]
    %v57 = vld [vmem:[%s5 + $0x98] sm:$0xff]
    %v58 = vld [vmem:[%s5 + $0xa0] sm:$0xff]
    %v59 = vld [vmem:[%s5 + $0xa8] sm:$0xff]
    %v60 = vld [vmem:[%s5 + $0xb0] sm:$0xff]
    %v61 = vld [vmem:[%s5 + $0xb8] sm:$0xff]
    %v62 = vld [vmem:[%s5 + $0xc0] sm:$0xff]
    %v63 = vld [vmem:[%s5 + $0xc8] sm:$0xff]
    %v64 = vld [vmem:[%s5 + $0xd0] sm:$0xff]
    %v65 = vld [vmem:[%s5 + $0xd8] sm:$0xff]
    %v66 = vld [vmem:[%s5 + $0xe0] sm:$0xff]
    %v67 = vld [vmem:[%s5 + $0xe8] sm:$0xff]
    %v68 = vld [vmem:[%s5 + $0xf0] sm:$0xff]
    %v69 = vld [vmem:[%s5 + $0xf8] sm:$0xff]
    %v70 = vld [vmem:[%s5 + $0x100] sm:$0xff]
    %v71 = vld [vmem:[%s5 + $0x108] sm:$0xff]
    %v72 = vld [vmem:[%s5 + $0x110] sm:$0xff]
    %v73 = vld [vmem:[%s5 + $0x118] sm:$0xff]
    %v74 = vld [vmem:[%s5 + $0x120] sm:$0xff]
    %v75 = vld [vmem:[%s5 + $0x128] sm:$0xff]
    %v76 = vld [vmem:[%s5 + $0x130] sm:$0xff]
    %v77 = vld [vmem:[%s5 + $0x138] sm:$0xff]
    %v78 = vld [vmem:[%s5 + $0x140] sm:$0xff]
    %v79 = vld [vmem:[%s5 + $0x148] sm:$0xff]
    %v80 = vld [vmem:[%s5 + $0x150] sm:$0xff]
    %v81 = vld [vmem:[%s5 + $0x158] sm:$0xff]
    %v82 = vld [vmem:[%s5 + $0x160] sm:$0xff]
    %v83 = vld [vmem:[%s5 + $0x168] sm:$0xff]
    %v84 = vld [vmem:[%s5 + $0x170] sm:$0xff]
    %v85 = vld [vmem:[%s5 + $0x178] sm:$0xff]
    %v86 = vld [vmem:[%s5 + $0x180] sm:$0xff]
    %v87 = vld [vmem:[%s5 + $0x188] sm:$0xff]
    %v88 = vld [vmem:[%s5 + $0x190] sm:$0xff]
    %v89 = vld [vmem:[%s5 + $0x198] sm:$0xff]
    %v90 = vld [vmem:[%s5 + $0x1a0] sm:$0xff]
    %v91 = vld [vmem:[%s5 + $0x1a8] sm:$0xff]
    %v92 = vld [vmem:[%s5 + $0x1b0] sm:$0xff]
    %v93 = vld [vmem:[%s5 + $0x1b8] sm:$0xff]
    %v94 = vld [vmem:[%s5 + $0x1c0] sm:$0xff]
    %v95 = vld [vmem:[%s5 + $0x1c8] sm:$0xff]
    %v96 = vld [vmem:[%s5 + $0x1d0] sm:$0xff]
    %v97 = vld [vmem:[%s5 + $0x1d8] sm:$0xff]
    %v98 = vld [vmem:[%s5 + $0x1e0] sm:$0xff]
    %v99 = vld [vmem:[%s5 + $0x1e8] sm:$0xff]
    %v100 = vld [vmem:[%s5 + $0x1f0] sm:$0xff]
    %v101 = vld [vmem:[%s5 + $0x1f8] sm:$0xff]
    %v102 = vld [vmem:[%s5 + $0x200] sm:$0xff]
    %v103 = vld [vmem:[%s5 + $0x208] sm:$0xff]
    %v104 = vld [vmem:[%s5 + $0x210] sm:$0xff]
    %v105 = vld [vmem:[%s5 + $0x218] sm:$0xff]
    %v106 = vld [vmem:[%s5 + $0x220] sm:$0xff]
    %v107 = vld [vmem:[%s5 + $0x228] sm:$0xff]
    %v108 = vld [vmem:[%s5 + $0x230] sm:$0xff]
    %v109 = vld [vmem:[%s5 + $0x238] sm:$0xff]
    %v110 = vld [vmem:[%s5 + $0x240] sm:$0xff]
    %v111 = vld [vmem:[%s5 + $0x248] sm:$0xff]
    %v112 = vld [vmem:[%s5 + $0x250] sm:$0xff]
    %v113 = vld [vmem:[%s5 + $0x258] sm:$0xff]
    %v114 = vld [vmem:[%s5 + $0x260] sm:$0xff]
    %v115 = vld [vmem:[%s5 + $0x268] sm:$0xff]
    %v116 = vld [vmem:[%s5 + $0x270] sm:$0xff]
    %v117 = vld [vmem:[%s5 + $0x278] sm:$0xff]
    %v118 = vld [vmem:[%s5 + $0x280] sm:$0xff]
    %v119 = vld [vmem:[%s5 + $0x288] sm:$0xff]
    %v120 = vld [vmem:[%s5 + $0x290] sm:$0xff]
    %v121 = vld [vmem:[%s5 + $0x298] sm:$0xff]
    %v122 = vld [vmem:[%s5 + $0x2a0] sm:$0xff]
    %v123 = vld [vmem:[%s5 + $0x2a8] sm:$0xff]
    %v124 = vld [vmem:[%s5 + $0x2b0] sm:$0xff]
    %v125 = vld [vmem:[%s5 + $0x2b8] sm:$0xff]
    %v126 = vld [vmem:[%s5 + $0x2c0] sm:$0xff]
    %v127 = vld [vmem:[%s5 + $0x2c8] sm:$0xff]
    %v128 = vld [vmem:[%s5 + $0x2d0] sm:$0xff]
    %v129 = vld [vmem:[%s5 + $0x2d8] sm:$0xff]
    %v130 = vld [vmem:[%s5 + $0x2e0] sm:$0xff]
    %v131 = vld [vmem:[%s5 + $0x2e8] sm:$0xff]
    %v132 = vld [vmem:[%s5 + $0x2f0] sm:$0xff]
    %v133 = vld [vmem:[%s5 + $0x2f8] sm:$0xff]
    %v134 = vld [vmem:[%s5 + $0x300] sm:$0xff]
    %v135 = vld [vmem:[%s5 + $0x308] sm:$0xff]
    %v136 = vld [vmem:[%s5 + $0x310] sm:$0xff]
    %v137 = vld [vmem:[%s5 + $0x318] sm:$0xff]
    %v138 = vld [vmem:[%s5 + $0x320] sm:$0xff]
    %v139 = vld [vmem:[%s5 + $0x328] sm:$0xff]
    %v140 = vld [vmem:[%s5 + $0x330] sm:$0xff]
    %v141 = vld [vmem:[%s5 + $0x338] sm:$0xff]
    %v142 = vld [vmem:[%s5 + $0x340] sm:$0xff]
    %v143 = vld [vmem:[%s5 + $0x348] sm:$0xff]
    %v144 = vld [vmem:[%s5 + $0x350] sm:$0xff]
    %v145 = vld [vmem:[%s5 + $0x358] sm:$0xff]
    %v146 = vld [vmem:[%s5 + $0x360] sm:$0xff]
    %v147 = vld [vmem:[%s5 + $0x368] sm:$0xff]
    %v148 = vld [vmem:[%s5 + $0x370] sm:$0xff]
    %v149 = vld [vmem:[%s5 + $0x378] sm:$0xff]
    %v150 = vld [vmem:[%s5 + $0x380] sm:$0xff]
    %v151 = vld [vmem:[%s5 + $0x388] sm:$0xff]
    %v152 = vld [vmem:[%s5 + $0x390] sm:$0xff]
    %v153 = vld [vmem:[%s5 + $0x398] sm:$0xff]
    %v154 = vld [vmem:[%s5 + $0x3a0] sm:$0xff]
    %v155 = vld [vmem:[%s5 + $0x3a8] sm:$0xff]
    %v156 = vld [vmem:[%s5 + $0x3b0] sm:$0xff]
    %v157 = vld [vmem:[%s5 + $0x3b8] sm:$0xff]
    %v158 = vld [vmem:[%s5 + $0x3c0] sm:$0xff]
    %v159 = vld [vmem:[%s5 + $0x3c8] sm:$0xff]
    %v160 = vld [vmem:[%s5 + $0x3d0] sm:$0xff]
    %v161 = vld [vmem:[%s5 + $0x3d8] sm:$0xff]
    %v162 = vld [vmem:[%s5 + $0x3e0] sm:$0xff]
    %v163 = vld [vmem:[%s5 + $0x3e8] sm:$0xff]
    %v164 = vld [vmem:[%s5 + $0x3f0] sm:$0xff]
    %v165 = vld [vmem:[%s5 + $0x3f8] sm:$0xff]
    %v166 = vld [vmem:[%s5 + $0x400] sm:$0xff]
    %v167 = vld [vmem:[%s5 + $0x408] sm:$0xff]
    %v168 = vld [vmem:[%s5 + $0x410] sm:$0xff]
    %v169 = vld [vmem:[%s5 + $0x418] sm:$0xff]
    %v170 = vld [vmem:[%s5 + $0x420] sm:$0xff]
    %v171 = vld [vmem:[%s5 + $0x428] sm:$0xff]
    %v172 = vld [vmem:[%s5 + $0x430] sm:$0xff]
    %v173 = vld [vmem:[%s5 + $0x438] sm:$0xff]
    %v174 = vld [vmem:[%s5 + $0x440] sm:$0xff]
    %v175 = vld [vmem:[%s5 + $0x448] sm:$0xff]
    %v176 = vld [vmem:[%s5 + $0x450] sm:$0xff]
    %v177 = vld [vmem:[%s5 + $0x458] sm:$0xff]
    %v178 = vld [vmem:[%s5 + $0x460] sm:$0xff]
    %v179 = vld [vmem:[%s5 + $0x468] sm:$0xff]
    %v180 = vld [vmem:[%s5 + $0x470] sm:$0xff]
    %v181 = vld [vmem:[%s5 + $0x478] sm:$0xff]
    %v182 = vld [vmem:[%s6] sm:$0xff]
    %v183 = vld [vmem:[%s6 + $0x8] sm:$0xff]
    %v184 = vld [vmem:[%s6 + $0x10] sm:$0xff]
    %v185 = vld [vmem:[%s6 + $0x18] sm:$0xff]
    %v186 = vld [vmem:[%s6 + $0x20] sm:$0xff]
    %v187 = vld [vmem:[%s6 + $0x28] sm:$0xff]
    %v188 = vld [vmem:[%s6 + $0x30] sm:$0xff]
    %v189 = vld [vmem:[%s6 + $0x38] sm:$0xff]
    %v190 = vld [vmem:[%s6 + $0x40] sm:$0xff]
    %v191 = vld [vmem:[%s6 + $0x48] sm:$0xff]
    %v192 = vld [vmem:[%s6 + $0x50] sm:$0xff]
    %v193 = vld [vmem:[%s6 + $0x58] sm:$0xff]
    %v194 = vld [vmem:[%s6 + $0x60] sm:$0xff]
    %v195 = vld [vmem:[%s6 + $0x68] sm:$0xff]
    %v196 = vld [vmem:[%s6 + $0x70] sm:$0xff]
    %v197 = vld [vmem:[%s6 + $0x78] sm:$0xff]
    %v198 = vld [vmem:[%s6 + $0x80] sm:$0xff]
    %v199 = vld [vmem:[%s6 + $0x88] sm:$0xff]
    %v200 = vld [vmem:[%s6 + $0x90] sm:$0xff]
    %v201 = vld [vmem:[%s6 + $0x98] sm:$0xff]
    %v202 = vld [vmem:[%s6 + $0xa0] sm:$0xff]
    %v203 = vld [vmem:[%s6 + $0xa8] sm:$0xff]
    %v204 = vld [vmem:[%s6 + $0xb0] sm:$0xff]
    %v205 = vld [vmem:[%s6 + $0xb8] sm:$0xff]
    %v206 = vld [vmem:[%s6 + $0xc0] sm:$0xff]
    %v207 = vld [vmem:[%s6 + $0xc8] sm:$0xff]
    %v208 = vld [vmem:[%s6 + $0xd0] sm:$0xff]
    %v209 = vld [vmem:[%s6 + $0xd8] sm:$0xff]
    %v210 = vld [vmem:[%s6 + $0xe0] sm:$0xff]
    %v211 = vld [vmem:[%s6 + $0xe8] sm:$0xff]
    %v212 = vld [vmem:[%s6 + $0xf0] sm:$0xff]
    %v213 = vld [vmem:[%s6 + $0xf8] sm:$0xff]
    %v214 = vld [vmem:[%s6 + $0x100] sm:$0xff]
    %v215 = vld [vmem:[%s6 + $0x108] sm:$0xff]
    %v216 = vld [vmem:[%s6 + $0x110] sm:$0xff]
    %v217 = vld [vmem:[%s6 + $0x118] sm:$0xff]
    %v218 = vld [vmem:[%s6 + $0x120] sm:$0xff]
    %v219 = vld [vmem:[%s6 + $0x128] sm:$0xff]
    %v220 = vld [vmem:[%s6 + $0x130] sm:$0xff]
    %v221 = vld [vmem:[%s6 + $0x138] sm:$0xff]
    %v222 = vld [vmem:[%s6 + $0x140] sm:$0xff]
    %v223 = vld [vmem:[%s6 + $0x148] sm:$0xff]
    %v224 = vld [vmem:[%s6 + $0x150] sm:$0xff]
    %v225 = vld [vmem:[%s6 + $0x158] sm:$0xff]
    %v226 = vld [vmem:[%s6 + $0x160] sm:$0xff]
    %v227 = vld [vmem:[%s6 + $0x168] sm:$0xff]
    %v228 = vld [vmem:[%s6 + $0x170] sm:$0xff]
    %v229 = vld [vmem:[%s6 + $0x178] sm:$0xff]
    %v230 = vld [vmem:[%s6 + $0x180] sm:$0xff]
    %v231 = vld [vmem:[%s6 + $0x188] sm:$0xff]
    %v232 = vld [vmem:[%s6 + $0x190] sm:$0xff]
    %v233 = vld [vmem:[%s6 + $0x198] sm:$0xff]
    %v234 = vld [vmem:[%s6 + $0x1a0] sm:$0xff]
    %v235 = vld [vmem:[%s6 + $0x1a8] sm:$0xff]
    %v236 = vld [vmem:[%s6 + $0x1b0] sm:$0xff]
    %v237 = vld [vmem:[%s6 + $0x1b8] sm:$0xff]
    %v238 = vld [vmem:[%s6 + $0x1c0] sm:$0xff]
    %v239 = vld [vmem:[%s6 + $0x1c8] sm:$0xff]
    %v240 = vld [vmem:[%s6 + $0x1d0] sm:$0xff]
    %v241 = vld [vmem:[%s6 + $0x1d8] sm:$0xff]
    %v242 = vld [vmem:[%s6 + $0x1e0] sm:$0xff]
    %v243 = vld [vmem:[%s6 + $0x1e8] sm:$0xff]
    %v244 = vld [vmem:[%s6 + $0x1f0] sm:$0xff]
    %v245 = vld [vmem:[%s6 + $0x1f8] sm:$0xff]
    %v246 = vld [vmem:[%s6 + $0x200] sm:$0xff]
    %v247 = vld [vmem:[%s6 + $0x208] sm:$0xff]
    %v248 = vld [vmem:[%s6 + $0x210] sm:$0xff]
    %v249 = vld [vmem:[%s6 + $0x218] sm:$0xff]
    %v250 = vld [vmem:[%s6 + $0x220] sm:$0xff]
    %v251 = vld [vmem:[%s6 + $0x228] sm:$0xff]
    %v252 = vld [vmem:[%s6 + $0x230] sm:$0xff]
    %v253 = vld [vmem:[%s6 + $0x238] sm:$0xff]
    %v254 = vld [vmem:[%s6 + $0x240] sm:$0xff]
    %v255 = vld [vmem:[%s6 + $0x248] sm:$0xff]
    %v256 = vld [vmem:[%s6 + $0x250] sm:$0xff]
    %v257 = vld [vmem:[%s6 + $0x258] sm:$0xff]
    %v258 = vld [vmem:[%s6 + $0x260] sm:$0xff]
    %v259 = vld [vmem:[%s6 + $0x268] sm:$0xff]
    %v260 = vld [vmem:[%s6 + $0x270] sm:$0xff]
    %v261 = vld [vmem:[%s6 + $0x278] sm:$0xff]
    %v262 = vld [vmem:[%s6 + $0x280] sm:$0xff]
    %v263 = vld [vmem:[%s6 + $0x288] sm:$0xff]
    %v264 = vld [vmem:[%s6 + $0x290] sm:$0xff]
    %v265 = vld [vmem:[%s6 + $0x298] sm:$0xff]
    %v266 = vld [vmem:[%s6 + $0x2a0] sm:$0xff]
    %v267 = vld [vmem:[%s6 + $0x2a8] sm:$0xff]
    %v268 = vld [vmem:[%s6 + $0x2b0] sm:$0xff]
    %v269 = vld [vmem:[%s6 + $0x2b8] sm:$0xff]
    %v270 = vld [vmem:[%s6 + $0x2c0] sm:$0xff]
    %v271 = vld [vmem:[%s6 + $0x2c8] sm:$0xff]
    %v272 = vld [vmem:[%s6 + $0x2d0] sm:$0xff]
    %v273 = vld [vmem:[%s6 + $0x2d8] sm:$0xff]
    %v274 = vld [vmem:[%s6 + $0x2e0] sm:$0xff]
    %v275 = vld [vmem:[%s6 + $0x2e8] sm:$0xff]
    %v276 = vld [vmem:[%s6 + $0x2f0] sm:$0xff]
    %v277 = vld [vmem:[%s6 + $0x2f8] sm:$0xff]
    %v278 = vld [vmem:[%s6 + $0x300] sm:$0xff]
    %v279 = vld [vmem:[%s6 + $0x308] sm:$0xff]
    %v280 = vld [vmem:[%s6 + $0x310] sm:$0xff]
    %v281 = vld [vmem:[%s6 + $0x318] sm:$0xff]
    %v282 = vld [vmem:[%s6 + $0x320] sm:$0xff]
    %v283 = vld [vmem:[%s6 + $0x328] sm:$0xff]
    %v284 = vld [vmem:[%s6 + $0x330] sm:$0xff]
    %v285 = vld [vmem:[%s6 + $0x338] sm:$0xff]
    %v286 = vld [vmem:[%s6 + $0x340] sm:$0xff]
    %v287 = vld [vmem:[%s6 + $0x348] sm:$0xff]
    %v288 = vld [vmem:[%s6 + $0x350] sm:$0xff]
    %v289 = vld [vmem:[%s6 + $0x358] sm:$0xff]
    %v290 = vld [vmem:[%s6 + $0x360] sm:$0xff]
    %v291 = vld [vmem:[%s6 + $0x368] sm:$0xff]
    %v292 = vld [vmem:[%s6 + $0x370] sm:$0xff]
    %v293 = vld [vmem:[%s6 + $0x378] sm:$0xff]
    %v294 = vld [vmem:[%s6 + $0x380] sm:$0xff]
    %v295 = vld [vmem:[%s6 + $0x388] sm:$0xff]
    %v296 = vld [vmem:[%s6 + $0x390] sm:$0xff]
    %v297 = vld [vmem:[%s6 + $0x398] sm:$0xff]
    %v298 = vld [vmem:[%s6 + $0x3a0] sm:$0xff]
    %v299 = vld [vmem:[%s6 + $0x3a8] sm:$0xff]
    %v300 = vld [vmem:[%s6 + $0x3b0] sm:$0xff]
    %v301 = vld [vmem:[%s6 + $0x3b8] sm:$0xff]
    %v302 = vld [vmem:[%s6 + $0x3c0] sm:$0xff]
    %v303 = vld [vmem:[%s6 + $0x3c8] sm:$0xff]
    %v304 = vld [vmem:[%s6 + $0x3d0] sm:$0xff]
    %v305 = vld [vmem:[%s6 + $0x3d8] sm:$0xff]
    %v306 = vld [vmem:[%s6 + $0x3e0] sm:$0xff]
    %v307 = vld [vmem:[%s6 + $0x3e8] sm:$0xff]
    %v308 = vld [vmem:[%s6 + $0x3f0] sm:$0xff]
    %v309 = vld [vmem:[%s6 + $0x3f8] sm:$0xff]
    %v310 = vld [vmem:[%s6 + $0x400] sm:$0xff]
    %v311 = vld [vmem:[%s6 + $0x408] sm:$0xff]
    %v312 = vld [vmem:[%s6 + $0x410] sm:$0xff]
    %v313 = vld [vmem:[%s6 + $0x418] sm:$0xff]
    %v314 = vld [vmem:[%s6 + $0x420] sm:$0xff]
    %v315 = vld [vmem:[%s6 + $0x428] sm:$0xff]
    %v316 = vld [vmem:[%s6 + $0x430] sm:$0xff]
    %v317 = vld [vmem:[%s6 + $0x438] sm:$0xff]
    %v318 = vld [vmem:[%s6 + $0x440] sm:$0xff]
    %v319 = vld [vmem:[%s6 + $0x448] sm:$0xff]
    %v320 = vld [vmem:[%s6 + $0x450] sm:$0xff]
    %v321 = vld [vmem:[%s6 + $0x458] sm:$0xff]
    %v322 = vld [vmem:[%s6 + $0x460] sm:$0xff]
    %v323 = vld [vmem:[%s6 + $0x468] sm:$0xff]
    %v324 = vld [vmem:[%s6 + $0x470] sm:$0xff]
    %v325 = vld [vmem:[%s6 + $0x478] sm:$0xff]
    %v326 = vld [vmem:[%s8] sm:$0x7]
    %v327 = vstv %s37
    %v328 = vmul.f32 %v327, %v326
    %v330 = vlaneseq
    %v331 = vshrl.u32 %v330, 7
    %v332 = vsub.s32 0, %v331
    %v333 = vrot.slane %v328, %v332
    %v334 = vlaneseq
    %v335 = vshrl.u32 %v334, 7
    %v336 = vsub.s32 1, %v335
    %v337 = vrot.slane %v328, %v336
    %v338 = vlaneseq
    %v339 = vshrl.u32 %v338, 7
    %v340 = vsub.s32 2, %v339
    %v341 = vrot.slane %v328, %v340
    %v345 = vld [vmem:[%s3] sm:$0xff]
    %v346 = vld [vmem:[%s7] sm:$0xff]
    %v347 = vld [vmem:[%s7 + $0x8] sm:$0xff]
    %v348 = vld [vmem:[%s7 + $0x10] sm:$0xff]
    %v349 = vld [vmem:[%s7 + $0x18] sm:$0xff]
    %v350 = vld [vmem:[%s7 + $0x20] sm:$0xff]
    %v351 = vld [vmem:[%s7 + $0x28] sm:$0xff]
    %v352 = vld [vmem:[%s7 + $0x30] sm:$0xff]
    %v353 = vld [vmem:[%s7 + $0x38] sm:$0xff]
    %v354 = vld [vmem:[%s7 + $0x40] sm:$0xff]
    %v355 = vld [vmem:[%s7 + $0x48] sm:$0xff]
    %v356 = vld [vmem:[%s7 + $0x50] sm:$0xff]
    %v357 = vld [vmem:[%s7 + $0x58] sm:$0xff]
    %v358 = vld [vmem:[%s7 + $0x60] sm:$0xff]
    %v359 = vld [vmem:[%s7 + $0x68] sm:$0xff]
    %v360 = vld [vmem:[%s7 + $0x70] sm:$0xff]
    %v361 = vld [vmem:[%s7 + $0x78] sm:$0xff]
    %v362 = vld [vmem:[%s7 + $0x80] sm:$0xff]
    %v363 = vld [vmem:[%s7 + $0x88] sm:$0xff]
    %v364 = vld [vmem:[%s7 + $0x90] sm:$0xff]
    %v365 = vld [vmem:[%s7 + $0x98] sm:$0xff]
    %v366 = vld [vmem:[%s7 + $0xa0] sm:$0xff]
    %v367 = vld [vmem:[%s7 + $0xa8] sm:$0xff]
    %v368 = vld [vmem:[%s7 + $0xb0] sm:$0xff]
    %v369 = vld [vmem:[%s7 + $0xb8] sm:$0xff]
    %v370 = vld [vmem:[%s7 + $0xc0] sm:$0xff]
    %v371 = vld [vmem:[%s7 + $0xc8] sm:$0xff]
    %v372 = vld [vmem:[%s7 + $0xd0] sm:$0xff]
    %v373 = vld [vmem:[%s7 + $0xd8] sm:$0xff]
    %v374 = vld [vmem:[%s7 + $0xe0] sm:$0xff]
    %v375 = vld [vmem:[%s7 + $0xe8] sm:$0xff]
    %v376 = vld [vmem:[%s7 + $0xf0] sm:$0xff]
    %v377 = vld [vmem:[%s7 + $0xf8] sm:$0xff]
    %v378 = vld [vmem:[%s7 + $0x100] sm:$0xff]
    %v379 = vld [vmem:[%s7 + $0x108] sm:$0xff]
    %v380 = vld [vmem:[%s7 + $0x110] sm:$0xff]
    %v381 = vld [vmem:[%s7 + $0x118] sm:$0xff]
    %v382 = vld [vmem:[%s7 + $0x120] sm:$0xff]
    %v383 = vld [vmem:[%s7 + $0x128] sm:$0xff]
    %v384 = vld [vmem:[%s7 + $0x130] sm:$0xff]
    %v385 = vld [vmem:[%s7 + $0x138] sm:$0xff]
    %v386 = vld [vmem:[%s7 + $0x140] sm:$0xff]
    %v387 = vld [vmem:[%s7 + $0x148] sm:$0xff]
    %v388 = vld [vmem:[%s7 + $0x150] sm:$0xff]
    %v389 = vld [vmem:[%s7 + $0x158] sm:$0xff]
    %v390 = vld [vmem:[%s7 + $0x160] sm:$0xff]
    %v391 = vld [vmem:[%s7 + $0x168] sm:$0xff]
    %v392 = vld [vmem:[%s7 + $0x170] sm:$0xff]
    %v393 = vld [vmem:[%s7 + $0x178] sm:$0xff]
    %394 = vmatprep.subr.mxu0 %v347
    %395 = vmatpush1.msra.mxu0 %v346
    %396 = vmatprep.subr.mxu0 %v350
    %397 = vmatpush1.msra.mxu0 %v349
    %398 = vmatprep.subr.mxu0 %v353
    %399 = vmatpush1.msra.mxu0 %v352
    %400 = vmatprep.subr.mxu0 %v356
    %401 = vmatpush1.msra.mxu0 %v355
    %402 = vmatprep.subr.mxu0 %v359
    %403 = vmatpush1.msra.mxu0 %v358
    %404 = vmatprep.subr.mxu0 %v362
    %405 = vmatpush1.msra.mxu0 %v361
    %406 = vmatprep.subr.mxu0 %v365
    %407 = vmatpush1.msra.mxu0 %v364
    %408 = vmatprep.subr.mxu0 %v368
    %409 = vmatpush1.msra.mxu0 %v367
    %410 = vmatprep.subr.mxu0 %v371
    %411 = vmatpush1.msra.mxu0 %v370
    %412 = vmatprep.subr.mxu0 %v374
    %413 = vmatpush1.msra.mxu0 %v373
    %414 = vmatprep.subr.mxu0 %v377
    %415 = vmatpush1.msra.mxu0 %v376
    %416 = vmatprep.subr.mxu0 %v380
    %417 = vmatpush1.msra.mxu0 %v379
    %418 = vmatprep.subr.mxu0 %v383
    %419 = vmatpush1.msra.mxu0 %v382
    %420 = vmatprep.subr.mxu0 %v386
    %421 = vmatpush1.msra.mxu0 %v385
    %422 = vmatprep.subr.mxu0 %v389
    %423 = vmatpush1.msra.mxu0 %v388
    %424 = vmatprep.subr.mxu0 %v392
    %425 = vmatpush1.msra.mxu0 %v391
    %426 = vmatprep.subr.mxu0 0.0
    %427 = vmatpush1.msra.mxu0 0.0
    %428 = vmatprep.subr.mxu0 0.0
    %429 = vmatpush1.msra.mxu0 0.0
    %430 = vmatprep.subr.mxu0 0.0
    %431 = vmatpush1.msra.mxu0 0.0
    %432 = vmatprep.subr.mxu0 0.0
    %433 = vmatpush1.msra.mxu0 0.0
    %434 = vmatprep.subr.mxu0 0.0
    %435 = vmatpush1.msra.mxu0 0.0
    %436 = vmatprep.subr.mxu0 0.0
    %437 = vmatpush1.msra.mxu0 0.0
    %438 = vmatprep.subr.mxu0 0.0
    %439 = vmatpush1.msra.mxu0 0.0
    %440 = vmatprep.subr.mxu0 0.0
    %441 = vmatpush1.msra.mxu0 0.0
    %442 = vmatprep.subr.mxu0 0.0
    %443 = vmatpush1.msra.mxu0 0.0
    %444 = vmatprep.subr.mxu0 0.0
    %445 = vmatpush1.msra.mxu0 0.0
    %446 = vmatprep.subr.mxu0 0.0
    %447 = vmatpush1.msra.mxu0 0.0
    %448 = vmatprep.subr.mxu0 0.0
    %449 = vmatpush1.msra.mxu0 0.0
    %450 = vmatprep.subr.mxu0 0.0
    %451 = vmatpush1.msra.mxu0 0.0
    %452 = vmatprep.subr.mxu0 0.0
    %453 = vmatpush1.msra.mxu0 0.0
    %454 = vmatprep.subr.mxu0 0.0
    %455 = vmatpush1.msra.mxu0 0.0
    %456 = vmatprep.subr.mxu0 0.0
    %457 = vmatpush1.msra.mxu0 0.0
    %458 = vmatprep.mubr.f32.mxu0 0.0
    %459 = vmatmul.mubr.f32.gmra.mrb[0].mxu0 %v345
    %v460 = vpop.f32.mrb[0].mxu0
    %v461 = vadd.f32 0.0, %v460
    %v462 = vpop.f32.mrb[0].mxu0
    %v463 = vadd.f32 0.0, %v462
    %464 = vdwg.mxu0
    %465 = vmatprep.subr.mxu0 0.0
    %466 = vmatpush1.msra.mxu0 %v348
    %467 = vmatprep.subr.mxu0 0.0
    %468 = vmatpush1.msra.mxu0 %v351
    %469 = vmatprep.subr.mxu0 0.0
    %470 = vmatpush1.msra.mxu0 %v354
    %471 = vmatprep.subr.mxu0 0.0
    %472 = vmatpush1.msra.mxu0 %v357
    %473 = vmatprep.subr.mxu0 0.0
    %474 = vmatpush1.msra.mxu0 %v360
    %475 = vmatprep.subr.mxu0 0.0
    %476 = vmatpush1.msra.mxu0 %v363
    %477 = vmatprep.subr.mxu0 0.0
    %478 = vmatpush1.msra.mxu0 %v366
    %479 = vmatprep.subr.mxu0 0.0
    %480 = vmatpush1.msra.mxu0 %v369
    %481 = vmatprep.subr.mxu0 0.0
    %482 = vmatpush1.msra.mxu0 %v372
    %483 = vmatprep.subr.mxu0 0.0
    %484 = vmatpush1.msra.mxu0 %v375
    %485 = vmatprep.subr.mxu0 0.0
    %486 = vmatpush1.msra.mxu0 %v378
    %487 = vmatprep.subr.mxu0 0.0
    %488 = vmatpush1.msra.mxu0 %v381
    %489 = vmatprep.subr.mxu0 0.0
    %490 = vmatpush1.msra.mxu0 %v384
    %491 = vmatprep.subr.mxu0 0.0
    %492 = vmatpush1.msra.mxu0 %v387
    %493 = vmatprep.subr.mxu0 0.0
    %494 = vmatpush1.msra.mxu0 %v390
    %495 = vmatprep.subr.mxu0 0.0
    %496 = vmatpush1.msra.mxu0 %v393
    %497 = vmatprep.subr.mxu0 0.0
    %498 = vmatpush1.msra.mxu0 0.0
    %499 = vmatprep.subr.mxu0 0.0
    %500 = vmatpush1.msra.mxu0 0.0
    %501 = vmatprep.subr.mxu0 0.0
    %502 = vmatpush1.msra.mxu0 0.0
    %503 = vmatprep.subr.mxu0 0.0
    %504 = vmatpush1.msra.mxu0 0.0
    %505 = vmatprep.subr.mxu0 0.0
    %506 = vmatpush1.msra.mxu0 0.0
    %507 = vmatprep.subr.mxu0 0.0
    %508 = vmatpush1.msra.mxu0 0.0
    %509 = vmatprep.subr.mxu0 0.0
    %510 = vmatpush1.msra.mxu0 0.0
    %511 = vmatprep.subr.mxu0 0.0
    %512 = vmatpush1.msra.mxu0 0.0
    %513 = vmatprep.subr.mxu0 0.0
    %514 = vmatpush1.msra.mxu0 0.0
    %515 = vmatprep.subr.mxu0 0.0
    %516 = vmatpush1.msra.mxu0 0.0
    %517 = vmatprep.subr.mxu0 0.0
    %518 = vmatpush1.msra.mxu0 0.0
    %519 = vmatprep.subr.mxu0 0.0
    %520 = vmatpush1.msra.mxu0 0.0
    %521 = vmatprep.subr.mxu0 0.0
    %522 = vmatpush1.msra.mxu0 0.0
    %523 = vmatprep.subr.mxu0 0.0
    %524 = vmatpush1.msra.mxu0 0.0
    %525 = vmatprep.subr.mxu0 0.0
    %526 = vmatpush1.msra.mxu0 0.0
    %527 = vmatprep.subr.mxu0 0.0
    %528 = vmatpush1.msra.mxu0 0.0
    %529 = vmatprep.mubr.f32.mxu0 0.0
    %530 = vmatmul.mubr.f32.gmra.mrb[0].mxu0 %v345
    %v531 = vpop.f32.mrb[0].mxu0
    %v532 = vadd.f32 0.0, %v531
    %v533 = vpop.f32.mrb[0].mxu0
    %534 = vdwg.mxu0
    %v535 = vld [vmem:[%s4] sm:$0xff]
    %v536 = vld [vmem:[%s4 + $0x8] sm:$0xff]
    %v537 = vld [vmem:[%s4 + $0x10] sm:$0xff]
    %v538 = vadd.f32 %v535, %v461
    %v539 = vadd.f32 %v536, %v463
    %v540 = vadd.f32 %v537, %v532
    %v541 = vmul.f32 %v333, %v538
    %v542 = vmul.f32 %v337, %v539
    %v543 = vmul.f32 %v341, %v540
    %v544 = vld [vmem:[%s1] sm:$0xff]
    %v545 = vld [vmem:[%s1 + $0x8] sm:$0xff]
    %v546 = vld [vmem:[%s1 + $0x10] sm:$0xff]
    %v547 = vld [vmem:[%s2] sm:$0xff]
    %v548 = vld [vmem:[%s2 + $0x8] sm:$0xff]
    %v549 = vld [vmem:[%s2 + $0x10] sm:$0xff]
    %550 = vmatprep.subr.mxu0 %v183
    %551 = vmatpush1.msra.mxu0 %v182
    %552 = vmatprep.subr.mxu0 %v186
    %553 = vmatpush1.msra.mxu0 %v185
    %554 = vmatprep.subr.mxu0 %v189
    %555 = vmatpush1.msra.mxu0 %v188
    %556 = vmatprep.subr.mxu0 %v192
    %557 = vmatpush1.msra.mxu0 %v191
    %558 = vmatprep.subr.mxu0 %v195
    %559 = vmatpush1.msra.mxu0 %v194
    %560 = vmatprep.subr.mxu0 %v198
    %561 = vmatpush1.msra.mxu0 %v197
    %562 = vmatprep.subr.mxu0 %v201
    %563 = vmatpush1.msra.mxu0 %v200
    %564 = vmatprep.subr.mxu0 %v204
    %565 = vmatpush1.msra.mxu0 %v203
    %566 = vmatprep.subr.mxu0 %v207
    %567 = vmatpush1.msra.mxu0 %v206
    %568 = vmatprep.subr.mxu0 %v210
    %569 = vmatpush1.msra.mxu0 %v209
    %570 = vmatprep.subr.mxu0 %v213
    %571 = vmatpush1.msra.mxu0 %v212
    %572 = vmatprep.subr.mxu0 %v216
    %573 = vmatpush1.msra.mxu0 %v215
    %574 = vmatprep.subr.mxu0 %v219
    %575 = vmatpush1.msra.mxu0 %v218
    %576 = vmatprep.subr.mxu0 %v222
    %577 = vmatpush1.msra.mxu0 %v221
    %578 = vmatprep.subr.mxu0 %v225
    %579 = vmatpush1.msra.mxu0 %v224
    %580 = vmatprep.subr.mxu0 %v228
    %581 = vmatpush1.msra.mxu0 %v227
    %582 = vmatprep.subr.mxu0 %v231
    %583 = vmatpush1.msra.mxu0 %v230
    %584 = vmatprep.subr.mxu0 %v234
    %585 = vmatpush1.msra.mxu0 %v233
    %586 = vmatprep.subr.mxu0 %v237
    %587 = vmatpush1.msra.mxu0 %v236
    %588 = vmatprep.subr.mxu0 %v240
    %589 = vmatpush1.msra.mxu0 %v239
    %590 = vmatprep.subr.mxu0 %v243
    %591 = vmatpush1.msra.mxu0 %v242
    %592 = vmatprep.subr.mxu0 %v246
    %593 = vmatpush1.msra.mxu0 %v245
    %594 = vmatprep.subr.mxu0 %v249
    %595 = vmatpush1.msra.mxu0 %v248
    %596 = vmatprep.subr.mxu0 %v252
    %597 = vmatpush1.msra.mxu0 %v251
    %598 = vmatprep.subr.mxu0 %v255
    %599 = vmatpush1.msra.mxu0 %v254
    %600 = vmatprep.subr.mxu0 %v258
    %601 = vmatpush1.msra.mxu0 %v257
    %602 = vmatprep.subr.mxu0 %v261
    %603 = vmatpush1.msra.mxu0 %v260
    %604 = vmatprep.subr.mxu0 %v264
    %605 = vmatpush1.msra.mxu0 %v263
    %606 = vmatprep.subr.mxu0 %v267
    %607 = vmatpush1.msra.mxu0 %v266
    %608 = vmatprep.subr.mxu0 %v270
    %609 = vmatpush1.msra.mxu0 %v269
    %610 = vmatprep.subr.mxu0 %v273
    %611 = vmatpush1.msra.mxu0 %v272
    %612 = vmatprep.subr.mxu0 %v276
    %613 = vmatpush1.msra.mxu0 %v275
    %614 = vmatprep.mubr.f32.mxu0 %v548
    %615 = vmatmul.mubr.f32.gmra.mrb[0].mxu0 %v547
    %v616 = vpop.f32.mrb[0].mxu0
    %v617 = vadd.f32 0.0, %v616
    %v618 = vpop.f32.mrb[0].mxu0
    %v619 = vadd.f32 0.0, %v618
    %620 = vdwg.mxu0
    %621 = vmatprep.subr.mxu0 %v279
    %622 = vmatpush1.msra.mxu0 %v278
    %623 = vmatprep.subr.mxu0 %v282
    %624 = vmatpush1.msra.mxu0 %v281
    %625 = vmatprep.subr.mxu0 %v285
    %626 = vmatpush1.msra.mxu0 %v284
    %627 = vmatprep.subr.mxu0 %v288
    %628 = vmatpush1.msra.mxu0 %v287
    %629 = vmatprep.subr.mxu0 %v291
    %630 = vmatpush1.msra.mxu0 %v290
    %631 = vmatprep.subr.mxu0 %v294
    %632 = vmatpush1.msra.mxu0 %v293
    %633 = vmatprep.subr.mxu0 %v297
    %634 = vmatpush1.msra.mxu0 %v296
    %635 = vmatprep.subr.mxu0 %v300
    %636 = vmatpush1.msra.mxu0 %v299
    %637 = vmatprep.subr.mxu0 %v303
    %638 = vmatpush1.msra.mxu0 %v302
    %639 = vmatprep.subr.mxu0 %v306
    %640 = vmatpush1.msra.mxu0 %v305
    %641 = vmatprep.subr.mxu0 %v309
    %642 = vmatpush1.msra.mxu0 %v308
    %643 = vmatprep.subr.mxu0 %v312
    %644 = vmatpush1.msra.mxu0 %v311
    %645 = vmatprep.subr.mxu0 %v315
    %646 = vmatpush1.msra.mxu0 %v314
    %647 = vmatprep.subr.mxu0 %v318
    %648 = vmatpush1.msra.mxu0 %v317
    %649 = vmatprep.subr.mxu0 %v321
    %650 = vmatpush1.msra.mxu0 %v320
    %651 = vmatprep.subr.mxu0 %v324
    %652 = vmatpush1.msra.mxu0 %v323
    %653 = vmatprep.subr.mxu0 0.0
    %654 = vmatpush1.msra.mxu0 0.0
    %655 = vmatprep.subr.mxu0 0.0
    %656 = vmatpush1.msra.mxu0 0.0
    %657 = vmatprep.subr.mxu0 0.0
    %658 = vmatpush1.msra.mxu0 0.0
    %659 = vmatprep.subr.mxu0 0.0
    %660 = vmatpush1.msra.mxu0 0.0
    %661 = vmatprep.subr.mxu0 0.0
    %662 = vmatpush1.msra.mxu0 0.0
    %663 = vmatprep.subr.mxu0 0.0
    %664 = vmatpush1.msra.mxu0 0.0
    %665 = vmatprep.subr.mxu0 0.0
    %666 = vmatpush1.msra.mxu0 0.0
    %667 = vmatprep.subr.mxu0 0.0
    %668 = vmatpush1.msra.mxu0 0.0
    %669 = vmatprep.subr.mxu0 0.0
    %670 = vmatpush1.msra.mxu0 0.0
    %671 = vmatprep.subr.mxu0 0.0
    %672 = vmatpush1.msra.mxu0 0.0
    %673 = vmatprep.subr.mxu0 0.0
    %674 = vmatpush1.msra.mxu0 0.0
    %675 = vmatprep.subr.mxu0 0.0
    %676 = vmatpush1.msra.mxu0 0.0
    %677 = vmatprep.subr.mxu0 0.0
    %678 = vmatpush1.msra.mxu0 0.0
    %679 = vmatprep.subr.mxu0 0.0
    %680 = vmatpush1.msra.mxu0 0.0
    %681 = vmatprep.subr.mxu0 0.0
    %682 = vmatpush1.msra.mxu0 0.0
    %683 = vmatprep.subr.mxu0 0.0
    %684 = vmatpush1.msra.mxu0 0.0
    %685 = vmatprep.mubr.f32.mxu0 0.0
    %686 = vmatmul.mubr.f32.gmra.mrb[0].mxu0 %v549
    %v687 = vpop.f32.mrb[0].mxu0
    %v688 = vadd.f32 %v617, %v687
    %v689 = vpop.f32.mrb[0].mxu0
    %v690 = vadd.f32 %v619, %v689
    %691 = vdwg.mxu0
    %692 = vmatprep.subr.mxu0 0.0
    %693 = vmatpush1.msra.mxu0 %v184
    %694 = vmatprep.subr.mxu0 0.0
    %695 = vmatpush1.msra.mxu0 %v187
    %696 = vmatprep.subr.mxu0 0.0
    %697 = vmatpush1.msra.mxu0 %v190
    %698 = vmatprep.subr.mxu0 0.0
    %699 = vmatpush1.msra.mxu0 %v193
    %700 = vmatprep.subr.mxu0 0.0
    %701 = vmatpush1.msra.mxu0 %v196
    %702 = vmatprep.subr.mxu0 0.0
    %703 = vmatpush1.msra.mxu0 %v199
    %704 = vmatprep.subr.mxu0 0.0
    %705 = vmatpush1.msra.mxu0 %v202
    %706 = vmatprep.subr.mxu0 0.0
    %707 = vmatpush1.msra.mxu0 %v205
    %708 = vmatprep.subr.mxu0 0.0
    %709 = vmatpush1.msra.mxu0 %v208
    %710 = vmatprep.subr.mxu0 0.0
    %711 = vmatpush1.msra.mxu0 %v211
    %712 = vmatprep.subr.mxu0 0.0
    %713 = vmatpush1.msra.mxu0 %v214
    %714 = vmatprep.subr.mxu0 0.0
    %715 = vmatpush1.msra.mxu0 %v217
    %716 = vmatprep.subr.mxu0 0.0
    %717 = vmatpush1.msra.mxu0 %v220
    %718 = vmatprep.subr.mxu0 0.0
    %719 = vmatpush1.msra.mxu0 %v223
    %720 = vmatprep.subr.mxu0 0.0
    %721 = vmatpush1.msra.mxu0 %v226
    %722 = vmatprep.subr.mxu0 0.0
    %723 = vmatpush1.msra.mxu0 %v229
    %724 = vmatprep.subr.mxu0 0.0
    %725 = vmatpush1.msra.mxu0 %v232
    %726 = vmatprep.subr.mxu0 0.0
    %727 = vmatpush1.msra.mxu0 %v235
    %728 = vmatprep.subr.mxu0 0.0
    %729 = vmatpush1.msra.mxu0 %v238
    %730 = vmatprep.subr.mxu0 0.0
    %731 = vmatpush1.msra.mxu0 %v241
    %732 = vmatprep.subr.mxu0 0.0
    %733 = vmatpush1.msra.mxu0 %v244
    %734 = vmatprep.subr.mxu0 0.0
    %735 = vmatpush1.msra.mxu0 %v247
    %736 = vmatprep.subr.mxu0 0.0
    %737 = vmatpush1.msra.mxu0 %v250
    %738 = vmatprep.subr.mxu0 0.0
    %739 = vmatpush1.msra.mxu0 %v253
    %740 = vmatprep.subr.mxu0 0.0
    %741 = vmatpush1.msra.mxu0 %v256
    %742 = vmatprep.subr.mxu0 0.0
    %743 = vmatpush1.msra.mxu0 %v259
    %744 = vmatprep.subr.mxu0 0.0
    %745 = vmatpush1.msra.mxu0 %v262
    %746 = vmatprep.subr.mxu0 0.0
    %747 = vmatpush1.msra.mxu0 %v265
    %748 = vmatprep.subr.mxu0 0.0
    %749 = vmatpush1.msra.mxu0 %v268
    %750 = vmatprep.subr.mxu0 0.0
    %751 = vmatpush1.msra.mxu0 %v271
    %752 = vmatprep.subr.mxu0 0.0
    %753 = vmatpush1.msra.mxu0 %v274
    %754 = vmatprep.subr.mxu0 0.0
    %755 = vmatpush1.msra.mxu0 %v277
    %756 = vmatprep.mubr.f32.mxu0 %v548
    %757 = vmatmul.mubr.f32.gmra.mrb[0].mxu0 %v547
    %v758 = vpop.f32.mrb[0].mxu0
    %v759 = vadd.f32 0.0, %v758
    %v760 = vpop.f32.mrb[0].mxu0
    %761 = vdwg.mxu0
    %762 = vmatprep.subr.mxu0 0.0
    %763 = vmatpush1.msra.mxu0 %v280
    %764 = vmatprep.subr.mxu0 0.0
    %765 = vmatpush1.msra.mxu0 %v283
    %766 = vmatprep.subr.mxu0 0.0
    %767 = vmatpush1.msra.mxu0 %v286
    %768 = vmatprep.subr.mxu0 0.0
    %769 = vmatpush1.msra.mxu0 %v289
    %770 = vmatprep.subr.mxu0 0.0
    %771 = vmatpush1.msra.mxu0 %v292
    %772 = vmatprep.subr.mxu0 0.0
    %773 = vmatpush1.msra.mxu0 %v295
    %774 = vmatprep.subr.mxu0 0.0
    %775 = vmatpush1.msra.mxu0 %v298
    %776 = vmatprep.subr.mxu0 0.0
    %777 = vmatpush1.msra.mxu0 %v301
    %778 = vmatprep.subr.mxu0 0.0
    %779 = vmatpush1.msra.mxu0 %v304
    %780 = vmatprep.subr.mxu0 0.0
    %781 = vmatpush1.msra.mxu0 %v307
    %782 = vmatprep.subr.mxu0 0.0
    %783 = vmatpush1.msra.mxu0 %v310
    %784 = vmatprep.subr.mxu0 0.0
    %785 = vmatpush1.msra.mxu0 %v313
    %786 = vmatprep.subr.mxu0 0.0
    %787 = vmatpush1.msra.mxu0 %v316
    %788 = vmatprep.subr.mxu0 0.0
    %789 = vmatpush1.msra.mxu0 %v319
    %790 = vmatprep.subr.mxu0 0.0
    %791 = vmatpush1.msra.mxu0 %v322
    %792 = vmatprep.subr.mxu0 0.0
    %793 = vmatpush1.msra.mxu0 %v325
    %794 = vmatprep.subr.mxu0 0.0
    %795 = vmatpush1.msra.mxu0 0.0
    %796 = vmatprep.subr.mxu0 0.0
    %797 = vmatpush1.msra.mxu0 0.0
    %798 = vmatprep.subr.mxu0 0.0
    %799 = vmatpush1.msra.mxu0 0.0
    %800 = vmatprep.subr.mxu0 0.0
    %801 = vmatpush1.msra.mxu0 0.0
    %802 = vmatprep.subr.mxu0 0.0
    %803 = vmatpush1.msra.mxu0 0.0
    %804 = vmatprep.subr.mxu0 0.0
    %805 = vmatpush1.msra.mxu0 0.0
    %806 = vmatprep.subr.mxu0 0.0
    %807 = vmatpush1.msra.mxu0 0.0
    %808 = vmatprep.subr.mxu0 0.0
    %809 = vmatpush1.msra.mxu0 0.0
    %810 = vmatprep.subr.mxu0 0.0
    %811 = vmatpush1.msra.mxu0 0.0
    %812 = vmatprep.subr.mxu0 0.0
    %813 = vmatpush1.msra.mxu0 0.0
    %814 = vmatprep.subr.mxu0 0.0
    %815 = vmatpush1.msra.mxu0 0.0
    %816 = vmatprep.subr.mxu0 0.0
    %817 = vmatpush1.msra.mxu0 0.0
    %818 = vmatprep.subr.mxu0 0.0
    %819 = vmatpush1.msra.mxu0 0.0
    %820 = vmatprep.subr.mxu0 0.0
    %821 = vmatpush1.msra.mxu0 0.0
    %822 = vmatprep.subr.mxu0 0.0
    %823 = vmatpush1.msra.mxu0 0.0
    %824 = vmatprep.subr.mxu0 0.0
    %825 = vmatpush1.msra.mxu0 0.0
    %826 = vmatprep.mubr.f32.mxu0 0.0
    %827 = vmatmul.mubr.f32.gmra.mrb[0].mxu0 %v549
    %v828 = vpop.f32.mrb[0].mxu0
    %v829 = vadd.f32 %v759, %v828
    %v830 = vpop.f32.mrb[0].mxu0
    %831 = vdwg.mxu0
    %832 = vmatprep.subr.mxu0 %v39
    %833 = vmatpush1.msra.mxu0 %v38
    %834 = vmatprep.subr.mxu0 %v42
    %835 = vmatpush1.msra.mxu0 %v41
    %836 = vmatprep.subr.mxu0 %v45
    %837 = vmatpush1.msra.mxu0 %v44
    %838 = vmatprep.subr.mxu0 %v48
    %839 = vmatpush1.msra.mxu0 %v47
    %840 = vmatprep.subr.mxu0 %v51
    %841 = vmatpush1.msra.mxu0 %v50
    %842 = vmatprep.subr.mxu0 %v54
    %843 = vmatpush1.msra.mxu0 %v53
    %844 = vmatprep.subr.mxu0 %v57
    %845 = vmatpush1.msra.mxu0 %v56
    %846 = vmatprep.subr.mxu0 %v60
    %847 = vmatpush1.msra.mxu0 %v59
    %848 = vmatprep.subr.mxu0 %v63
    %849 = vmatpush1.msra.mxu0 %v62
    %850 = vmatprep.subr.mxu0 %v66
    %851 = vmatpush1.msra.mxu0 %v65
    %852 = vmatprep.subr.mxu0 %v69
    %853 = vmatpush1.msra.mxu0 %v68
    %854 = vmatprep.subr.mxu0 %v72
    %855 = vmatpush1.msra.mxu0 %v71
    %856 = vmatprep.subr.mxu0 %v75
    %857 = vmatpush1.msra.mxu0 %v74
    %858 = vmatprep.subr.mxu0 %v78
    %859 = vmatpush1.msra.mxu0 %v77
    %860 = vmatprep.subr.mxu0 %v81
    %861 = vmatpush1.msra.mxu0 %v80
    %862 = vmatprep.subr.mxu0 %v84
    %863 = vmatpush1.msra.mxu0 %v83
    %864 = vmatprep.subr.mxu0 %v87
    %865 = vmatpush1.msra.mxu0 %v86
    %866 = vmatprep.subr.mxu0 %v90
    %867 = vmatpush1.msra.mxu0 %v89
    %868 = vmatprep.subr.mxu0 %v93
    %869 = vmatpush1.msra.mxu0 %v92
    %870 = vmatprep.subr.mxu0 %v96
    %871 = vmatpush1.msra.mxu0 %v95
    %872 = vmatprep.subr.mxu0 %v99
    %873 = vmatpush1.msra.mxu0 %v98
    %874 = vmatprep.subr.mxu0 %v102
    %875 = vmatpush1.msra.mxu0 %v101
    %876 = vmatprep.subr.mxu0 %v105
    %877 = vmatpush1.msra.mxu0 %v104
    %878 = vmatprep.subr.mxu0 %v108
    %879 = vmatpush1.msra.mxu0 %v107
    %880 = vmatprep.subr.mxu0 %v111
    %881 = vmatpush1.msra.mxu0 %v110
    %882 = vmatprep.subr.mxu0 %v114
    %883 = vmatpush1.msra.mxu0 %v113
    %884 = vmatprep.subr.mxu0 %v117
    %885 = vmatpush1.msra.mxu0 %v116
    %886 = vmatprep.subr.mxu0 %v120
    %887 = vmatpush1.msra.mxu0 %v119
    %888 = vmatprep.subr.mxu0 %v123
    %889 = vmatpush1.msra.mxu0 %v122
    %890 = vmatprep.subr.mxu0 %v126
    %891 = vmatpush1.msra.mxu0 %v125
    %892 = vmatprep.subr.mxu0 %v129
    %893 = vmatpush1.msra.mxu0 %v128
    %894 = vmatprep.subr.mxu0 %v132
    %895 = vmatpush1.msra.mxu0 %v131
    %896 = vmatprep.mubr.f32.mxu0 %v545
    %897 = vmatmul.mubr.f32.gmra.mrb[0].mxu0 %v544
    %v898 = vpop.f32.mrb[0].mxu0
    %v899 = vadd.f32 %v688, %v898
    %v900 = vpop.f32.mrb[0].mxu0
    %v901 = vadd.f32 %v690, %v900
    %902 = vdwg.mxu0
    %903 = vmatprep.subr.mxu0 %v135
    %904 = vmatpush1.msra.mxu0 %v134
    %905 = vmatprep.subr.mxu0 %v138
    %906 = vmatpush1.msra.mxu0 %v137
    %907 = vmatprep.subr.mxu0 %v141
    %908 = vmatpush1.msra.mxu0 %v140
    %909 = vmatprep.subr.mxu0 %v144
    %910 = vmatpush1.msra.mxu0 %v143
    %911 = vmatprep.subr.mxu0 %v147
    %912 = vmatpush1.msra.mxu0 %v146
    %913 = vmatprep.subr.mxu0 %v150
    %914 = vmatpush1.msra.mxu0 %v149
    %915 = vmatprep.subr.mxu0 %v153
    %916 = vmatpush1.msra.mxu0 %v152
    %917 = vmatprep.subr.mxu0 %v156
    %918 = vmatpush1.msra.mxu0 %v155
    %919 = vmatprep.subr.mxu0 %v159
    %920 = vmatpush1.msra.mxu0 %v158
    %921 = vmatprep.subr.mxu0 %v162
    %922 = vmatpush1.msra.mxu0 %v161
    %923 = vmatprep.subr.mxu0 %v165
    %924 = vmatpush1.msra.mxu0 %v164
    %925 = vmatprep.subr.mxu0 %v168
    %926 = vmatpush1.msra.mxu0 %v167
    %927 = vmatprep.subr.mxu0 %v171
    %928 = vmatpush1.msra.mxu0 %v170
    %929 = vmatprep.subr.mxu0 %v174
    %930 = vmatpush1.msra.mxu0 %v173
    %931 = vmatprep.subr.mxu0 %v177
    %932 = vmatpush1.msra.mxu0 %v176
    %933 = vmatprep.subr.mxu0 %v180
    %934 = vmatpush1.msra.mxu0 %v179
    %935 = vmatprep.subr.mxu0 0.0
    %936 = vmatpush1.msra.mxu0 0.0
    %937 = vmatprep.subr.mxu0 0.0
    %938 = vmatpush1.msra.mxu0 0.0
    %939 = vmatprep.subr.mxu0 0.0
    %940 = vmatpush1.msra.mxu0 0.0
    %941 = vmatprep.subr.mxu0 0.0
    %942 = vmatpush1.msra.mxu0 0.0
    %943 = vmatprep.subr.mxu0 0.0
    %944 = vmatpush1.msra.mxu0 0.0
    %945 = vmatprep.subr.mxu0 0.0
    %946 = vmatpush1.msra.mxu0 0.0
    %947 = vmatprep.subr.mxu0 0.0
    %948 = vmatpush1.msra.mxu0 0.0
    %949 = vmatprep.subr.mxu0 0.0
    %950 = vmatpush1.msra.mxu0 0.0
    %951 = vmatprep.subr.mxu0 0.0
    %952 = vmatpush1.msra.mxu0 0.0
    %953 = vmatprep.subr.mxu0 0.0
    %954 = vmatpush1.msra.mxu0 0.0
    %955 = vmatprep.subr.mxu0 0.0
    %956 = vmatpush1.msra.mxu0 0.0
    %957 = vmatprep.subr.mxu0 0.0
    %958 = vmatpush1.msra.mxu0 0.0
    %959 = vmatprep.subr.mxu0 0.0
    %960 = vmatpush1.msra.mxu0 0.0
    %961 = vmatprep.subr.mxu0 0.0
    %962 = vmatpush1.msra.mxu0 0.0
    %963 = vmatprep.subr.mxu0 0.0
    %964 = vmatpush1.msra.mxu0 0.0
    %965 = vmatprep.subr.mxu0 0.0
    %966 = vmatpush1.msra.mxu0 0.0
    %967 = vmatprep.mubr.f32.mxu0 0.0
    %968 = vmatmul.mubr.f32.gmra.mrb[0].mxu0 %v546
    %v969 = vpop.f32.mrb[0].mxu0
    %v970 = vadd.f32 %v899, %v969
    %v971 = vpop.f32.mrb[0].mxu0
    %v972 = vadd.f32 %v901, %v971
    %973 = vdwg.mxu0
    %974 = vmatprep.subr.mxu0 0.0
    %975 = vmatpush1.msra.mxu0 %v40
    %976 = vmatprep.subr.mxu0 0.0
    %977 = vmatpush1.msra.mxu0 %v43
    %978 = vmatprep.subr.mxu0 0.0
    %979 = vmatpush1.msra.mxu0 %v46
    %980 = vmatprep.subr.mxu0 0.0
    %981 = vmatpush1.msra.mxu0 %v49
    %982 = vmatprep.subr.mxu0 0.0
    %983 = vmatpush1.msra.mxu0 %v52
    %984 = vmatprep.subr.mxu0 0.0
    %985 = vmatpush1.msra.mxu0 %v55
    %986 = vmatprep.subr.mxu0 0.0
    %987 = vmatpush1.msra.mxu0 %v58
    %988 = vmatprep.subr.mxu0 0.0
    %989 = vmatpush1.msra.mxu0 %v61
    %990 = vmatprep.subr.mxu0 0.0
    %991 = vmatpush1.msra.mxu0 %v64
    %992 = vmatprep.subr.mxu0 0.0
    %993 = vmatpush1.msra.mxu0 %v67
    %994 = vmatprep.subr.mxu0 0.0
    %995 = vmatpush1.msra.mxu0 %v70
    %996 = vmatprep.subr.mxu0 0.0
    %997 = vmatpush1.msra.mxu0 %v73
    %998 = vmatprep.subr.mxu0 0.0
    %999 = vmatpush1.msra.mxu0 %v76
    %1000 = vmatprep.subr.mxu0 0.0
    %1001 = vmatpush1.msra.mxu0 %v79
    %1002 = vmatprep.subr.mxu0 0.0
    %1003 = vmatpush1.msra.mxu0 %v82
    %1004 = vmatprep.subr.mxu0 0.0
    %1005 = vmatpush1.msra.mxu0 %v85
    %1006 = vmatprep.subr.mxu0 0.0
    %1007 = vmatpush1.msra.mxu0 %v88
    %1008 = vmatprep.subr.mxu0 0.0
    %1009 = vmatpush1.msra.mxu0 %v91
    %1010 = vmatprep.subr.mxu0 0.0
    %1011 = vmatpush1.msra.mxu0 %v94
    %1012 = vmatprep.subr.mxu0 0.0
    %1013 = vmatpush1.msra.mxu0 %v97
    %1014 = vmatprep.subr.mxu0 0.0
    %1015 = vmatpush1.msra.mxu0 %v100
    %1016 = vmatprep.subr.mxu0 0.0
    %1017 = vmatpush1.msra.mxu0 %v103
    %1018 = vmatprep.subr.mxu0 0.0
    %1019 = vmatpush1.msra.mxu0 %v106
    %1020 = vmatprep.subr.mxu0 0.0
    %1021 = vmatpush1.msra.mxu0 %v109
    %1022 = vmatprep.subr.mxu0 0.0
    %1023 = vmatpush1.msra.mxu0 %v112
    %1024 = vmatprep.subr.mxu0 0.0
    %1025 = vmatpush1.msra.mxu0 %v115
    %1026 = vmatprep.subr.mxu0 0.0
    %1027 = vmatpush1.msra.mxu0 %v118
    %1028 = vmatprep.subr.mxu0 0.0
    %1029 = vmatpush1.msra.mxu0 %v121
    %1030 = vmatprep.subr.mxu0 0.0
    %1031 = vmatpush1.msra.mxu0 %v124
    %1032 = vmatprep.subr.mxu0 0.0
    %1033 = vmatpush1.msra.mxu0 %v127
    %1034 = vmatprep.subr.mxu0 0.0
    %1035 = vmatpush1.msra.mxu0 %v130
    %1036 = vmatprep.subr.mxu0 0.0
    %1037 = vmatpush1.msra.mxu0 %v133
    %1038 = vmatprep.mubr.f32.mxu0 %v545
    %1039 = vmatmul.mubr.f32.gmra.mrb[0].mxu0 %v544
    %v1040 = vpop.f32.mrb[0].mxu0
    %v1041 = vadd.f32 %v829, %v1040
    %v1042 = vpop.f32.mrb[0].mxu0
    %1043 = vdwg.mxu0
    %1044 = vmatprep.subr.mxu0 0.0
    %1045 = vmatpush1.msra.mxu0 %v136
    %1046 = vmatprep.subr.mxu0 0.0
    %1047 = vmatpush1.msra.mxu0 %v139
    %1048 = vmatprep.subr.mxu0 0.0
    %1049 = vmatpush1.msra.mxu0 %v142
    %1050 = vmatprep.subr.mxu0 0.0
    %1051 = vmatpush1.msra.mxu0 %v145
    %1052 = vmatprep.subr.mxu0 0.0
    %1053 = vmatpush1.msra.mxu0 %v148
    %1054 = vmatprep.subr.mxu0 0.0
    %1055 = vmatpush1.msra.mxu0 %v151
    %1056 = vmatprep.subr.mxu0 0.0
    %1057 = vmatpush1.msra.mxu0 %v154
    %1058 = vmatprep.subr.mxu0 0.0
    %1059 = vmatpush1.msra.mxu0 %v157
    %1060 = vmatprep.subr.mxu0 0.0
    %1061 = vmatpush1.msra.mxu0 %v160
    %1062 = vmatprep.subr.mxu0 0.0
    %1063 = vmatpush1.msra.mxu0 %v163
    %1064 = vmatprep.subr.mxu0 0.0
    %1065 = vmatpush1.msra.mxu0 %v166
    %1066 = vmatprep.subr.mxu0 0.0
    %1067 = vmatpush1.msra.mxu0 %v169
    %1068 = vmatprep.subr.mxu0 0.0
    %1069 = vmatpush1.msra.mxu0 %v172
    %1070 = vmatprep.subr.mxu0 0.0
    %1071 = vmatpush1.msra.mxu0 %v175
    %1072 = vmatprep.subr.mxu0 0.0
    %1073 = vmatpush1.msra.mxu0 %v178
    %1074 = vmatprep.subr.mxu0 0.0
    %1075 = vmatpush1.msra.mxu0 %v181
    %1076 = vmatprep.subr.mxu0 0.0
    %1077 = vmatpush1.msra.mxu0 0.0
    %1078 = vmatprep.subr.mxu0 0.0
    %1079 = vmatpush1.msra.mxu0 0.0
    %1080 = vmatprep.subr.mxu0 0.0
    %1081 = vmatpush1.msra.mxu0 0.0
    %1082 = vmatprep.subr.mxu0 0.0
    %1083 = vmatpush1.msra.mxu0 0.0
    %1084 = vmatprep.subr.mxu0 0.0
    %1085 = vmatpush1.msra.mxu0 0.0
    %1086 = vmatprep.subr.mxu0 0.0
    %1087 = vmatpush1.msra.mxu0 0.0
    %1088 = vmatprep.subr.mxu0 0.0
    %1089 = vmatpush1.msra.mxu0 0.0
    %1090 = vmatprep.subr.mxu0 0.0
    %1091 = vmatpush1.msra.mxu0 0.0
    %1092 = vmatprep.subr.mxu0 0.0
    %1093 = vmatpush1.msra.mxu0 0.0
    %1094 = vmatprep.subr.mxu0 0.0
    %1095 = vmatpush1.msra.mxu0 0.0
    %1096 = vmatprep.subr.mxu0 0.0
    %1097 = vmatpush1.msra.mxu0 0.0
    %1098 = vmatprep.subr.mxu0 0.0
    %1099 = vmatpush1.msra.mxu0 0.0
    %1100 = vmatprep.subr.mxu0 0.0
    %1101 = vmatpush1.msra.mxu0 0.0
    %1102 = vmatprep.subr.mxu0 0.0
    %1103 = vmatpush1.msra.mxu0 0.0
    %1104 = vmatprep.subr.mxu0 0.0
    %1105 = vmatpush1.msra.mxu0 0.0
    %1106 = vmatprep.subr.mxu0 0.0
    %1107 = vmatpush1.msra.mxu0 0.0
    %1108 = vmatprep.mubr.f32.mxu0 0.0
    %1109 = vmatmul.mubr.f32.gmra.mrb[0].mxu0 %v546
    %v1110 = vpop.f32.mrb[0].mxu0
    %v1111 = vadd.f32 %v1041, %v1110
    %v1112 = vpop.f32.mrb[0].mxu0
    %1113 = vdwg.mxu0
    %v1114 = vmul.f32 %v333, %v970
    %v1115 = vmul.f32 %v337, %v972
    %v1116 = vmul.f32 %v341, %v1111
    %v1117 = vadd.f32 %v547, %v1114
    %v1118 = vadd.f32 %v548, %v1115
    %v1119 = vadd.f32 %v549, %v1116
    %v1120 = vadd.f32 %v1117, %v541
    %v1121 = vadd.f32 %v1118, %v542
    %v1122 = vadd.f32 %v1119, %v543
    %v1123 = vmul.f32 %v327, %v1120
    %v1124 = vmul.f32 %v327, %v1121
    %v1125 = vmul.f32 %v327, %v1122
    %v1126 = vadd.f32 %v544, %v1123
    %v1127 = vadd.f32 %v545, %v1124
    %v1128 = vadd.f32 %v546, %v1125
    %1129 = vst [vmem:[#allocation3] sm:$0xff] %v1126
    %1130 = vst [vmem:[#allocation3 + $0x8] sm:$0xff] %v1127
    %1131 = vst [vmem:[#allocation3 + $0x10] sm:$0xff] %v1128
    %1132 = vst [vmem:[#allocation5] sm:$0xff] %v1120
    %1133 = vst [vmem:[#allocation5 + $0x8] sm:$0xff] %v1121
    %1134 = vst [vmem:[#allocation5 + $0x10] sm:$0xff] %v1122
    // Predicated region
    $region38: #{pysim_mpmcloth_forward.1} parent=1 // pred_check
      _
    $region39: #{pysim_mpmcloth_forward.1} parent=1 // pred_check_branch
      %1136 = sbr.rel (0) target = $region41
    $region40: #{pysim_mpmcloth_forward.1} parent=1 // pred_region
      %s1138 = ssub.s32 384, 384
      %1139 = vsyncadd [#allocation4], %s1138
      %s1141 = sshll.u32 [#allocation3], 4
      %s1142 = int_to_ptr.vmem [resolvable:$true] %s1141
      %1144 = dma.vmem_to_hbm [thread:$0]  %s1142, 384, %s9, [#allocation4]
    $region41: #{pysim_mpmcloth_forward.1} parent=1 // pred_fallthru
      _
    // Predicated region
    $region42: #{pysim_mpmcloth_forward.1} parent=1 // pred_check
      _
    $region43: #{pysim_mpmcloth_forward.1} parent=1 // pred_check_branch
      %1146 = sbr.rel (0) target = $region45
    $region44: #{pysim_mpmcloth_forward.1} parent=1 // pred_region
      %s1148 = ssub.s32 384, 384
      %1149 = vsyncadd [#allocation6], %s1148
      %s1151 = sshll.u32 [#allocation5], 4
      %s1152 = int_to_ptr.vmem [resolvable:$true] %s1151
      %1154 = dma.vmem_to_hbm [thread:$0]  %s1152, 384, %s10, [#allocation6]
    $region45: #{pysim_mpmcloth_forward.1} parent=1 // pred_fallthru
      _
    // Predicated region
    $region46: #{pysim_mpmcloth_forward.1} parent=1 // pred_check
      _
    $region47: #{pysim_mpmcloth_forward.1} parent=1 // pred_check_branch
      %1156 = sbr.rel (0) target = $region49
    $region48: #{pysim_mpmcloth_forward.1} parent=1 // pred_region
      %1157 = dma.done [#allocation4], 384
    $region49: #{pysim_mpmcloth_forward.1} parent=1 // pred_fallthru
      _
    // Predicated region
    $region50: #{pysim_mpmcloth_forward.1} parent=1 // pred_check
      _
    $region51: #{pysim_mpmcloth_forward.1} parent=1 // pred_check_branch
      %1159 = sbr.rel (0) target = $region53
    $region52: #{pysim_mpmcloth_forward.1} parent=1 // pred_region
      %1160 = dma.done [#allocation6], 384
    $region53: #{pysim_mpmcloth_forward.1} parent=1 // pred_fallthru
      _
    %1161 = vsyncpa [#allocation4], 1
    %1162 = vsyncpa [#allocation6], 1

</llo_original>
